<compile_context>
chip_gen: v5e
topology: v5e:2x2
jax: 0.10.0
libtpu: 0.0.40
codegen_flags: <defaults>
</compile_context>

<pallas_src>
import jax
import jax.numpy as jnp
from jax.experimental import pallas as pl
from jax.experimental.pallas import tpu as pltpu

# ----------------------------- model config (small, synthetic) ----------------
VOCAB = 100
MAX_POS = 32
DIM = 32            # bert.config.dim
N_HEADS = 4
HEAD_DIM = DIM // N_HEADS
FFN_DIM = 64
N_LAYERS = 2
LN_EPS = 1e-12
N_BIN = 1
N_CAT = 3
OUT_PAD = 128       # lane-dense output width; lane 0 = binary, lanes 1..3 = category
BATCH = 2
SEQ = 8


# ----------------------------- in-kernel helpers -------------------------------
def _layernorm(x, g, b):
    mu = jnp.mean(x, axis=-1, keepdims=True)
    var = jnp.mean((x - mu) ** 2, axis=-1, keepdims=True)
    return (x - mu) * jax.lax.rsqrt(var + LN_EPS) * g + b


def _gelu(x):
    # TODO(synk): HF DistilBERT uses exact (erf) GELU; tanh approximation kept here
    # because erf lowering is not guaranteed in Mosaic at this JAX version.
    return 0.5 * x * (1.0 + jnp.tanh(0.7978845608028654 * (x + 0.044715 * x ** 3)))


# ----------------------------- fused Pallas kernel ------------------------------
def fused_bert_kernel(emb_ref, bias_ref,
                      emb_ln_g_ref, emb_ln_b_ref,
                      wq_ref, bq_ref, wk_ref, bk_ref, wv_ref, bv_ref,
                      wo_ref, bo_ref,
                      ln1_g_ref, ln1_b_ref,
                      w1_ref, b1_ref, w2_ref, b2_ref,
                      ln2_g_ref, ln2_b_ref,
                      wh_ref, bh_ref,
                      out_ref):
    """Single grid step: full encoder + both heads for the whole batch, all in VMEM."""
    n_layers, n_heads, _, head_dim = wq_ref.shape
    n_tok = emb_ref.shape[0]                 # B * S token rows (batch folded in)
    b_sz, out_pad = out_ref.shape
    seq = n_tok // b_sz
    scale = 1.0 / (head_dim ** 0.5)

    x = _layernorm(emb_ref[...], emb_ln_g_ref[...], emb_ln_b_ref[...])   # (B*S, D)
    attn_bias = bias_ref[...]     # (B*S, B*S): 0 where attendable, -1e30 otherwise

    for l in range(n_layers):
        attn = None
        for h in range(n_heads):
            # Per-head weights are separate leading-dim blocks -> free ref indexing,
            # and every matmul spans all B*S token rows.
            q = jnp.dot(x, wq_ref[l, h], preferred_element_type=jnp.float32) + bq_ref[l, h]
            k = jnp.dot(x, wk_ref[l, h], preferred_element_type=jnp.float32) + bk_ref[l, h]
            v = jnp.dot(x, wv_ref[l, h], preferred_element_type=jnp.float32) + bv_ref[l, h]
            s = jax.lax.dot_general(q, k, (((1,), (1,)), ((), ())),
                                    preferred_element_type=jnp.float32) * scale
            s = s + attn_bias                       # hoisted mask bias, one add per head
            s = s - jnp.max(s, axis=-1, keepdims=True)
            p = jnp.exp(s)
            p = p * pl.reciprocal(jnp.sum(p, axis=-1, keepdims=True), approx=True)
            ctx = jnp.dot(p, v, preferred_element_type=jnp.float32)              # (B*S, Dh)
            # fold output projection per head: sum_h ctx_h @ Wo[h_rows] == concat @ Wo
            part = jnp.dot(ctx, wo_ref[l, h], preferred_element_type=jnp.float32)  # (B*S, D)
            attn = part if attn is None else attn + part
        attn = attn + bo_ref[l]
        x = _layernorm(x + attn, ln1_g_ref[l], ln1_b_ref[l])      # post-LN (DistilBERT)

        ff = jnp.dot(x, w1_ref[l], preferred_element_type=jnp.float32) + b1_ref[l]
        ff = _gelu(ff)
        ff = jnp.dot(ff, w2_ref[l], preferred_element_type=jnp.float32) + b2_ref[l]
        x = _layernorm(x + ff, ln2_g_ref[l], ln2_b_ref[l])

    # Heads: binary head on token 0, category head on token 1 (matches reference).
    # One lane-dense (2B, D) @ (D, 128) matmul covers both heads and all batch rows.
    sel = jnp.concatenate([x[b * seq:b * seq + 2, :] for b in range(b_sz)], axis=0)
    logits = jnp.dot(sel, wh_ref[...], preferred_element_type=jnp.float32) + bh_ref[...]
    lane = jax.lax.broadcasted_iota(jnp.int32, (1, out_pad), 1)
    rows = []
    for b in range(b_sz):
        bin_sig = pl.reciprocal(1.0 + jnp.exp(-logits[2 * b:2 * b + 1, :]), approx=True)
        cat_row = logits[2 * b + 1:2 * b + 2, :]
        # lane 0: sigmoid(binary logit of token 0); lanes 1..3: category logits of token 1
        rows.append(jnp.where(lane == 0, bin_sig, cat_row))
    out_ref[...] = jnp.concatenate(rows, axis=0)     # single unmasked (B, 128) store


# ----------------------------- parameters --------------------------------------
def init_params(key):
    keys = iter(jax.random.split(key, 12))

    def nrm(shape, scale=0.02):
        return scale * jax.random.normal(next(keys), shape, dtype=jnp.float32)

    L, H, D, Dh, F = N_LAYERS, N_HEADS, DIM, HEAD_DIM, FFN_DIM
    # classification heads packed lane-dense: column 0 = binary, columns 1..3 = category
    w_heads = jnp.zeros((D, OUT_PAD), jnp.float32).at[:, :N_BIN + N_CAT].set(
        nrm((D, N_BIN + N_CAT)))
    b_heads = jnp.zeros((1, OUT_PAD), jnp.float32)
    return {
        'word_emb': nrm((VOCAB, D)),
        'pos_emb': nrm((MAX_POS, D)),
        'emb_ln_g': jnp.ones((1, D), jnp.float32),
        'emb_ln_b': jnp.zeros((1, D), jnp.float32),
        # attention weights pre-split per head (kernel-friendly layout):
        #   wq/wk/wv: (L, H, D, Dh), biases (L, H, 1, Dh)
        #   wo holds the rows of the output projection owned by each head: (L, H, Dh, D)
        'wq': nrm((L, H, D, Dh)), 'bq': jnp.zeros((L, H, 1, Dh), jnp.float32),
        'wk': nrm((L, H, D, Dh)), 'bk': jnp.zeros((L, H, 1, Dh), jnp.float32),
        'wv': nrm((L, H, D, Dh)), 'bv': jnp.zeros((L, H, 1, Dh), jnp.float32),
        'wo': nrm((L, H, Dh, D)), 'bo': jnp.zeros((L, 1, D), jnp.float32),
        'ln1_g': jnp.ones((L, 1, D), jnp.float32),
        'ln1_b': jnp.zeros((L, 1, D), jnp.float32),
        'w1': nrm((L, D, F)), 'b1': jnp.zeros((L, 1, F), jnp.float32),
        'w2': nrm((L, F, D)), 'b2': jnp.zeros((L, 1, D), jnp.float32),
        'ln2_g': jnp.ones((L, 1, D), jnp.float32),
        'ln2_b': jnp.zeros((L, 1, D), jnp.float32),
        'w_heads': w_heads, 'b_heads': b_heads,
    }


# ----------------------------- wrapper ------------------------------------------
def _full_spec(arr):
    nd = arr.ndim
    return pl.BlockSpec(arr.shape, lambda i, _nd=nd: (0,) * _nd)   # whole array, one DMA


def forward(params, input_ids, attention_mask):
    B, S = input_ids.shape
    N = B * S

    # host-side glue: embedding gather + one-time attention-bias construction
    emb = (params['word_emb'][input_ids]
           + params['pos_emb'][:S][None, :, :]).reshape(N, DIM)          # (B*S, D)
    key_ok = attention_mask.reshape(1, N) > 0                            # (1, B*S)
    bid = jnp.repeat(jnp.arange(B, dtype=jnp.int32), S)                  # (B*S,)
    same_batch = bid[:, None] == bid[None, :]                            # (B*S, B*S)
    attn_bias = jnp.where(same_batch & key_ok, 0.0, -1e30).astype(jnp.float32)

    weight_names = ('emb_ln_g', 'emb_ln_b',
                    'wq', 'bq', 'wk', 'bk', 'wv', 'bv', 'wo', 'bo',
                    'ln1_g', 'ln1_b', 'w1', 'b1', 'w2', 'b2',
                    'ln2_g', 'ln2_b', 'w_heads', 'b_heads')
    weights = tuple(params[n] for n in weight_names)

    in_specs = ([_full_spec(emb), _full_spec(attn_bias)]
                + [_full_spec(w) for w in weights])

    # Batch folded into the block: grid=(1,) -> one step, no per-step pipeline overhead.
    # (On v7x one could instead split the batch over a size-2 "parallel" leading axis.)
    out = pl.pallas_call(
        fused_bert_kernel,
        grid=(1,),
        in_specs=in_specs,
        out_specs=pl.BlockSpec((B, OUT_PAD), lambda i: (0, 0)),
        out_shape=jax.ShapeDtypeStruct((B, OUT_PAD), jnp.float32),
        compiler_params=pltpu.CompilerParams(
            dimension_semantics=("arbitrary",)),
    )(emb, attn_bias, *weights)

    binary_out = out[:, 0]               # already sigmoid'ed in-kernel (.view(-1) equivalent)
    category_out = out[:, 1:1 + N_CAT]   # raw category logits
    return binary_out, category_out


# ----------------------------- main ----------------------------------------------
if __name__ == "__main__":
    key = jax.random.PRNGKey(0)
    pkey, ikey = jax.random.split(key)
    params = init_params(pkey)

    input_ids = jax.random.randint(ikey, (BATCH, SEQ), 0, VOCAB, dtype=jnp.int32)
    attention_mask = jnp.ones((BATCH, SEQ), jnp.int32)

    fwd = jax.jit(forward)
    bin_out, cat_out = fwd(params, input_ids, attention_mask)
    jax.block_until_ready((bin_out, cat_out))

    assert bin_out.shape == (BATCH,)
    assert cat_out.shape == (BATCH, N_CAT)
    assert bool(jnp.all(jnp.isfinite(bin_out))) and bool(jnp.all(jnp.isfinite(cat_out)))
    assert bool(jnp.all((bin_out >= 0.0) & (bin_out <= 1.0)))
    print("KERNEL_OK")
</pallas_src>

<mosaic_0001>
module attributes {stable_mosaic.version = 11 : i64} {
  func.func @fused_bert_kernel(%arg0: i32, %arg1: memref<16x32xf32, #tpu.memory_space<vmem>>, %arg2: memref<16x16xf32, #tpu.memory_space<vmem>>, %arg3: memref<1x32xf32, #tpu.memory_space<vmem>>, %arg4: memref<1x32xf32, #tpu.memory_space<vmem>>, %arg5: memref<2x4x32x8xf32, #tpu.memory_space<vmem>>, %arg6: memref<2x4x1x8xf32, #tpu.memory_space<vmem>>, %arg7: memref<2x4x32x8xf32, #tpu.memory_space<vmem>>, %arg8: memref<2x4x1x8xf32, #tpu.memory_space<vmem>>, %arg9: memref<2x4x32x8xf32, #tpu.memory_space<vmem>>, %arg10: memref<2x4x1x8xf32, #tpu.memory_space<vmem>>, %arg11: memref<2x4x8x32xf32, #tpu.memory_space<vmem>>, %arg12: memref<2x1x32xf32, #tpu.memory_space<vmem>>, %arg13: memref<2x1x32xf32, #tpu.memory_space<vmem>>, %arg14: memref<2x1x32xf32, #tpu.memory_space<vmem>>, %arg15: memref<2x32x64xf32, #tpu.memory_space<vmem>>, %arg16: memref<2x1x64xf32, #tpu.memory_space<vmem>>, %arg17: memref<2x64x32xf32, #tpu.memory_space<vmem>>, %arg18: memref<2x1x32xf32, #tpu.memory_space<vmem>>, %arg19: memref<2x1x32xf32, #tpu.memory_space<vmem>>, %arg20: memref<2x1x32xf32, #tpu.memory_space<vmem>>, %arg21: memref<32x128xf32, #tpu.memory_space<vmem>>, %arg22: memref<1x128xf32, #tpu.memory_space<vmem>>, %arg23: memref<2x128xf32, #tpu.memory_space<vmem>>) attributes {dimension_semantics = [#tpu.dimension_semantics<arbitrary>], iteration_bounds = array<i64: 1>, scalar_prefetch = 0 : i64, scratch_operands = 0 : i64, tpu.core_type = #tpu.core_type<tc>, window_params = [{pipeline_mode = #tpu.pipeline_mode<synchronous>, transform_indices = @transform_0, window_bounds = array<i64: 16, 32>}, {pipeline_mode = #tpu.pipeline_mode<synchronous>, transform_indices = @transform_1, window_bounds = array<i64: 16, 16>}, {pipeline_mode = #tpu.pipeline_mode<synchronous>, transform_indices = @transform_2, window_bounds = array<i64: 1, 32>}, {pipeline_mode = #tpu.pipeline_mode<synchronous>, transform_indices = @transform_3, window_bounds = array<i64: 1, 32>}, {pipeline_mode = #tpu.pipeline_mode<synchronous>, transform_indices = @transform_4, window_bounds = array<i64: 2, 4, 32, 8>}, {pipeline_mode = #tpu.pipeline_mode<synchronous>, transform_indices = @transform_5, window_bounds = array<i64: 2, 4, 1, 8>}, {pipeline_mode = #tpu.pipeline_mode<synchronous>, transform_indices = @transform_6, window_bounds = array<i64: 2, 4, 32, 8>}, {pipeline_mode = #tpu.pipeline_mode<synchronous>, transform_indices = @transform_7, window_bounds = array<i64: 2, 4, 1, 8>}, {pipeline_mode = #tpu.pipeline_mode<synchronous>, transform_indices = @transform_8, window_bounds = array<i64: 2, 4, 32, 8>}, {pipeline_mode = #tpu.pipeline_mode<synchronous>, transform_indices = @transform_9, window_bounds = array<i64: 2, 4, 1, 8>}, {pipeline_mode = #tpu.pipeline_mode<synchronous>, transform_indices = @transform_10, window_bounds = array<i64: 2, 4, 8, 32>}, {pipeline_mode = #tpu.pipeline_mode<synchronous>, transform_indices = @transform_11, window_bounds = array<i64: 2, 1, 32>}, {pipeline_mode = #tpu.pipeline_mode<synchronous>, transform_indices = @transform_12, window_bounds = array<i64: 2, 1, 32>}, {pipeline_mode = #tpu.pipeline_mode<synchronous>, transform_indices = @transform_13, window_bounds = array<i64: 2, 1, 32>}, {pipeline_mode = #tpu.pipeline_mode<synchronous>, transform_indices = @transform_14, window_bounds = array<i64: 2, 32, 64>}, {pipeline_mode = #tpu.pipeline_mode<synchronous>, transform_indices = @transform_15, window_bounds = array<i64: 2, 1, 64>}, {pipeline_mode = #tpu.pipeline_mode<synchronous>, transform_indices = @transform_16, window_bounds = array<i64: 2, 64, 32>}, {pipeline_mode = #tpu.pipeline_mode<synchronous>, transform_indices = @transform_17, window_bounds = array<i64: 2, 1, 32>}, {pipeline_mode = #tpu.pipeline_mode<synchronous>, transform_indices = @transform_18, window_bounds = array<i64: 2, 1, 32>}, {pipeline_mode = #tpu.pipeline_mode<synchronous>, transform_indices = @transform_19, window_bounds = array<i64: 2, 1, 32>}, {pipeline_mode = #tpu.pipeline_mode<synchronous>, transform_indices = @transform_20, window_bounds = array<i64: 32, 128>}, {pipeline_mode = #tpu.pipeline_mode<synchronous>, transform_indices = @transform_21, window_bounds = array<i64: 1, 128>}, {pipeline_mode = #tpu.pipeline_mode<synchronous>, transform_indices = @transform_22, window_bounds = array<i64: 2, 128>}]} {
    %c0 = arith.constant 0 : index
    %c0_0 = arith.constant 0 : index
    %0 = vector.load %arg1[%c0, %c0_0] : memref<16x32xf32, #tpu.memory_space<vmem>>, vector<16x32xf32>
    %c0_1 = arith.constant 0 : index
    %c0_2 = arith.constant 0 : index
    %1 = vector.load %arg3[%c0_1, %c0_2] : memref<1x32xf32, #tpu.memory_space<vmem>>, vector<1x32xf32>
    %c0_3 = arith.constant 0 : index
    %c0_4 = arith.constant 0 : index
    %2 = vector.load %arg4[%c0_3, %c0_4] : memref<1x32xf32, #tpu.memory_space<vmem>>, vector<1x32xf32>
    %cst = arith.constant dense<0.000000e+00> : vector<16xf32>
    %3 = vector.multi_reduction <add>, %0, %cst [1] : vector<16x32xf32> to vector<16xf32>
    %4 = vector.shape_cast %3 : vector<16xf32> to vector<16x1xf32>
    %cst_5 = arith.constant 3.200000e+01 : f32
    %5 = vector.broadcast %cst_5 : f32 to vector<16x1xf32>
    %6 = arith.divf %4, %5 : vector<16x1xf32>
    %7 = vector.broadcast %6 : vector<16x1xf32> to vector<16x32xf32>
    %8 = arith.subf %0, %7 : vector<16x32xf32>
    %9 = arith.mulf %8, %8 : vector<16x32xf32>
    %cst_6 = arith.constant dense<0.000000e+00> : vector<16xf32>
    %10 = vector.multi_reduction <add>, %9, %cst_6 [1] : vector<16x32xf32> to vector<16xf32>
    %11 = vector.shape_cast %10 : vector<16xf32> to vector<16x1xf32>
    %cst_7 = arith.constant 3.200000e+01 : f32
    %12 = vector.broadcast %cst_7 : f32 to vector<16x1xf32>
    %13 = arith.divf %11, %12 : vector<16x1xf32>
    %14 = vector.broadcast %6 : vector<16x1xf32> to vector<16x32xf32>
    %15 = arith.subf %0, %14 : vector<16x32xf32>
    %cst_8 = arith.constant 9.99999996E-13 : f32
    %16 = vector.broadcast %cst_8 : f32 to vector<16x1xf32>
    %17 = arith.addf %13, %16 : vector<16x1xf32>
    %18 = math.rsqrt %17 : vector<16x1xf32>
    %19 = vector.broadcast %18 : vector<16x1xf32> to vector<16x32xf32>
    %20 = arith.mulf %15, %19 : vector<16x32xf32>
    %21 = vector.broadcast %1 : vector<1x32xf32> to vector<16x32xf32>
    %22 = arith.mulf %20, %21 : vector<16x32xf32>
    %23 = vector.broadcast %2 : vector<1x32xf32> to vector<16x32xf32>
    %24 = arith.addf %22, %23 : vector<16x32xf32>
    %c0_9 = arith.constant 0 : index
    %c0_10 = arith.constant 0 : index
    %25 = vector.load %arg2[%c0_9, %c0_10] : memref<16x16xf32, #tpu.memory_space<vmem>>, vector<16x16xf32>
    %c0_11 = arith.constant 0 : index
    %c0_12 = arith.constant 0 : index
    %c0_13 = arith.constant 0 : index
    %c0_14 = arith.constant 0 : index
    %26 = vector.load %arg5[%c0_11, %c0_12, %c0_13, %c0_14] : memref<2x4x32x8xf32, #tpu.memory_space<vmem>>, vector<1x1x32x8xf32>
    %27 = vector.shape_cast %26 : vector<1x1x32x8xf32> to vector<32x8xf32>
    %cst_15 = arith.constant dense<0.000000e+00> : vector<16x8xf32>
    %28 = tpu.matmul %24, %27, %cst_15 {dimension_numbers = #tpu.dot_dimension_numbers<[1], [0], [0], [1], [0, 0, 1, 1], [], []>} : vector<16x32xf32>, vector<32x8xf32>, vector<16x8xf32> -> vector<16x8xf32>
    %c0_16 = arith.constant 0 : index
    %c0_17 = arith.constant 0 : index
    %c0_18 = arith.constant 0 : index
    %c0_19 = arith.constant 0 : index
    %29 = vector.load %arg6[%c0_16, %c0_17, %c0_18, %c0_19] : memref<2x4x1x8xf32, #tpu.memory_space<vmem>>, vector<1x1x1x8xf32>
    %30 = vector.shape_cast %29 : vector<1x1x1x8xf32> to vector<1x8xf32>
    %31 = vector.broadcast %30 : vector<1x8xf32> to vector<16x8xf32>
    %32 = arith.addf %28, %31 : vector<16x8xf32>
    %c0_20 = arith.constant 0 : index
    %c0_21 = arith.constant 0 : index
    %c0_22 = arith.constant 0 : index
    %c0_23 = arith.constant 0 : index
    %33 = vector.load %arg7[%c0_20, %c0_21, %c0_22, %c0_23] : memref<2x4x32x8xf32, #tpu.memory_space<vmem>>, vector<1x1x32x8xf32>
    %34 = vector.shape_cast %33 : vector<1x1x32x8xf32> to vector<32x8xf32>
    %cst_24 = arith.constant dense<0.000000e+00> : vector<16x8xf32>
    %35 = tpu.matmul %24, %34, %cst_24 {dimension_numbers = #tpu.dot_dimension_numbers<[1], [0], [0], [1], [0, 0, 1, 1], [], []>} : vector<16x32xf32>, vector<32x8xf32>, vector<16x8xf32> -> vector<16x8xf32>
    %c0_25 = arith.constant 0 : index
    %c0_26 = arith.constant 0 : index
    %c0_27 = arith.constant 0 : index
    %c0_28 = arith.constant 0 : index
    %36 = vector.load %arg8[%c0_25, %c0_26, %c0_27, %c0_28] : memref<2x4x1x8xf32, #tpu.memory_space<vmem>>, vector<1x1x1x8xf32>
    %37 = vector.shape_cast %36 : vector<1x1x1x8xf32> to vector<1x8xf32>
    %38 = vector.broadcast %37 : vector<1x8xf32> to vector<16x8xf32>
    %39 = arith.addf %35, %38 : vector<16x8xf32>
    %c0_29 = arith.constant 0 : index
    %c0_30 = arith.constant 0 : index
    %c0_31 = arith.constant 0 : index
    %c0_32 = arith.constant 0 : index
    %40 = vector.load %arg9[%c0_29, %c0_30, %c0_31, %c0_32] : memref<2x4x32x8xf32, #tpu.memory_space<vmem>>, vector<1x1x32x8xf32>
    %41 = vector.shape_cast %40 : vector<1x1x32x8xf32> to vector<32x8xf32>
    %cst_33 = arith.constant dense<0.000000e+00> : vector<16x8xf32>
    %42 = tpu.matmul %24, %41, %cst_33 {dimension_numbers = #tpu.dot_dimension_numbers<[1], [0], [0], [1], [0, 0, 1, 1], [], []>} : vector<16x32xf32>, vector<32x8xf32>, vector<16x8xf32> -> vector<16x8xf32>
    %c0_34 = arith.constant 0 : index
    %c0_35 = arith.constant 0 : index
    %c0_36 = arith.constant 0 : index
    %c0_37 = arith.constant 0 : index
    %43 = vector.load %arg10[%c0_34, %c0_35, %c0_36, %c0_37] : memref<2x4x1x8xf32, #tpu.memory_space<vmem>>, vector<1x1x1x8xf32>
    %44 = vector.shape_cast %43 : vector<1x1x1x8xf32> to vector<1x8xf32>
    %45 = vector.broadcast %44 : vector<1x8xf32> to vector<16x8xf32>
    %46 = arith.addf %42, %45 : vector<16x8xf32>
    %cst_38 = arith.constant dense<0.000000e+00> : vector<16x16xf32>
    %47 = tpu.matmul %32, %39, %cst_38 {dimension_numbers = #tpu.dot_dimension_numbers<[1], [1], [0], [0], [0, 0, 1, 0], [], []>} : vector<16x8xf32>, vector<16x8xf32>, vector<16x16xf32> -> vector<16x16xf32>
    %cst_39 = arith.constant 0.353553385 : f32
    %48 = vector.broadcast %cst_39 : f32 to vector<16x16xf32>
    %49 = arith.mulf %47, %48 : vector<16x16xf32>
    %50 = arith.addf %49, %25 : vector<16x16xf32>
    %cst_40 = arith.constant dense<0xFF800000> : vector<16xf32>
    %51 = vector.multi_reduction <maximumf>, %50, %cst_40 [1] : vector<16x16xf32> to vector<16xf32>
    %52 = vector.shape_cast %51 : vector<16xf32> to vector<16x1xf32>
    %53 = vector.broadcast %52 : vector<16x1xf32> to vector<16x16xf32>
    %54 = arith.subf %50, %53 : vector<16x16xf32>
    %55 = math.exp %54 : vector<16x16xf32>
    %cst_41 = arith.constant dense<0.000000e+00> : vector<16xf32>
    %56 = vector.multi_reduction <add>, %55, %cst_41 [1] : vector<16x16xf32> to vector<16xf32>
    %57 = vector.shape_cast %56 : vector<16xf32> to vector<16x1xf32>
    %58 = tpu.reciprocal %57 {approx = true} : vector<16x1xf32> -> vector<16x1xf32>
    %59 = vector.broadcast %58 : vector<16x1xf32> to vector<16x16xf32>
    %60 = arith.mulf %55, %59 : vector<16x16xf32>
    %cst_42 = arith.constant dense<0.000000e+00> : vector<16x8xf32>
    %61 = tpu.matmul %60, %46, %cst_42 {dimension_numbers = #tpu.dot_dimension_numbers<[1], [0], [0], [1], [0, 0, 1, 1], [], []>} : vector<16x16xf32>, vector<16x8xf32>, vector<16x8xf32> -> vector<16x8xf32>
    %c0_43 = arith.constant 0 : index
    %c0_44 = arith.constant 0 : index
    %c0_45 = arith.constant 0 : index
    %c0_46 = arith.constant 0 : index
    %62 = vector.load %arg11[%c0_43, %c0_44, %c0_45, %c0_46] : memref<2x4x8x32xf32, #tpu.memory_space<vmem>>, vector<1x1x8x32xf32>
    %63 = vector.shape_cast %62 : vector<1x1x8x32xf32> to vector<8x32xf32>
    %cst_47 = arith.constant dense<0.000000e+00> : vector<16x32xf32>
    %64 = tpu.matmul %61, %63, %cst_47 {dimension_numbers = #tpu.dot_dimension_numbers<[1], [0], [0], [1], [0, 0, 1, 1], [], []>} : vector<16x8xf32>, vector<8x32xf32>, vector<16x32xf32> -> vector<16x32xf32>
    %c0_48 = arith.constant 0 : index
    %c1 = arith.constant 1 : index
    %c0_49 = arith.constant 0 : index
    %c0_50 = arith.constant 0 : index
    %65 = vector.load %arg5[%c0_48, %c1, %c0_49, %c0_50] : memref<2x4x32x8xf32, #tpu.memory_space<vmem>>, vector<1x1x32x8xf32>
    %66 = vector.shape_cast %65 : vector<1x1x32x8xf32> to vector<32x8xf32>
    %cst_51 = arith.constant dense<0.000000e+00> : vector<16x8xf32>
    %67 = tpu.matmul %24, %66, %cst_51 {dimension_numbers = #tpu.dot_dimension_numbers<[1], [0], [0], [1], [0, 0, 1, 1], [], []>} : vector<16x32xf32>, vector<32x8xf32>, vector<16x8xf32> -> vector<16x8xf32>
    %c0_52 = arith.constant 0 : index
    %c1_53 = arith.constant 1 : index
    %c0_54 = arith.constant 0 : index
    %c0_55 = arith.constant 0 : index
    %68 = vector.load %arg6[%c0_52, %c1_53, %c0_54, %c0_55] : memref<2x4x1x8xf32, #tpu.memory_space<vmem>>, vector<1x1x1x8xf32>
    %69 = vector.shape_cast %68 : vector<1x1x1x8xf32> to vector<1x8xf32>
    %70 = vector.broadcast %69 : vector<1x8xf32> to vector<16x8xf32>
    %71 = arith.addf %67, %70 : vector<16x8xf32>
    %c0_56 = arith.constant 0 : index
    %c1_57 = arith.constant 1 : index
    %c0_58 = arith.constant 0 : index
    %c0_59 = arith.constant 0 : index
    %72 = vector.load %arg7[%c0_56, %c1_57, %c0_58, %c0_59] : memref<2x4x32x8xf32, #tpu.memory_space<vmem>>, vector<1x1x32x8xf32>
    %73 = vector.shape_cast %72 : vector<1x1x32x8xf32> to vector<32x8xf32>
    %cst_60 = arith.constant dense<0.000000e+00> : vector<16x8xf32>
    %74 = tpu.matmul %24, %73, %cst_60 {dimension_numbers = #tpu.dot_dimension_numbers<[1], [0], [0], [1], [0, 0, 1, 1], [], []>} : vector<16x32xf32>, vector<32x8xf32>, vector<16x8xf32> -> vector<16x8xf32>
    %c0_61 = arith.constant 0 : index
    %c1_62 = arith.constant 1 : index
    %c0_63 = arith.constant 0 : index
    %c0_64 = arith.constant 0 : index
    %75 = vector.load %arg8[%c0_61, %c1_62, %c0_63, %c0_64] : memref<2x4x1x8xf32, #tpu.memory_space<vmem>>, vector<1x1x1x8xf32>
    %76 = vector.shape_cast %75 : vector<1x1x1x8xf32> to vector<1x8xf32>
    %77 = vector.broadcast %76 : vector<1x8xf32> to vector<16x8xf32>
    %78 = arith.addf %74, %77 : vector<16x8xf32>
    %c0_65 = arith.constant 0 : index
    %c1_66 = arith.constant 1 : index
    %c0_67 = arith.constant 0 : index
    %c0_68 = arith.constant 0 : index
    %79 = vector.load %arg9[%c0_65, %c1_66, %c0_67, %c0_68] : memref<2x4x32x8xf32, #tpu.memory_space<vmem>>, vector<1x1x32x8xf32>
    %80 = vector.shape_cast %79 : vector<1x1x32x8xf32> to vector<32x8xf32>
    %cst_69 = arith.constant dense<0.000000e+00> : vector<16x8xf32>
    %81 = tpu.matmul %24, %80, %cst_69 {dimension_numbers = #tpu.dot_dimension_numbers<[1], [0], [0], [1], [0, 0, 1, 1], [], []>} : vector<16x32xf32>, vector<32x8xf32>, vector<16x8xf32> -> vector<16x8xf32>
    %c0_70 = arith.constant 0 : index
    %c1_71 = arith.constant 1 : index
    %c0_72 = arith.constant 0 : index
    %c0_73 = arith.constant 0 : index
    %82 = vector.load %arg10[%c0_70, %c1_71, %c0_72, %c0_73] : memref<2x4x1x8xf32, #tpu.memory_space<vmem>>, vector<1x1x1x8xf32>
    %83 = vector.shape_cast %82 : vector<1x1x1x8xf32> to vector<1x8xf32>
    %84 = vector.broadcast %83 : vector<1x8xf32> to vector<16x8xf32>
    %85 = arith.addf %81, %84 : vector<16x8xf32>
    %cst_74 = arith.constant dense<0.000000e+00> : vector<16x16xf32>
    %86 = tpu.matmul %71, %78, %cst_74 {dimension_numbers = #tpu.dot_dimension_numbers<[1], [1], [0], [0], [0, 0, 1, 0], [], []>} : vector<16x8xf32>, vector<16x8xf32>, vector<16x16xf32> -> vector<16x16xf32>
    %cst_75 = arith.constant 0.353553385 : f32
    %87 = vector.broadcast %cst_75 : f32 to vector<16x16xf32>
    %88 = arith.mulf %86, %87 : vector<16x16xf32>
    %89 = arith.addf %88, %25 : vector<16x16xf32>
    %cst_76 = arith.constant dense<0xFF800000> : vector<16xf32>
    %90 = vector.multi_reduction <maximumf>, %89, %cst_76 [1] : vector<16x16xf32> to vector<16xf32>
    %91 = vector.shape_cast %90 : vector<16xf32> to vector<16x1xf32>
    %92 = vector.broadcast %91 : vector<16x1xf32> to vector<16x16xf32>
    %93 = arith.subf %89, %92 : vector<16x16xf32>
    %94 = math.exp %93 : vector<16x16xf32>
    %cst_77 = arith.constant dense<0.000000e+00> : vector<16xf32>
    %95 = vector.multi_reduction <add>, %94, %cst_77 [1] : vector<16x16xf32> to vector<16xf32>
    %96 = vector.shape_cast %95 : vector<16xf32> to vector<16x1xf32>
    %97 = tpu.reciprocal %96 {approx = true} : vector<16x1xf32> -> vector<16x1xf32>
    %98 = vector.broadcast %97 : vector<16x1xf32> to vector<16x16xf32>
    %99 = arith.mulf %94, %98 : vector<16x16xf32>
    %cst_78 = arith.constant dense<0.000000e+00> : vector<16x8xf32>
    %100 = tpu.matmul %99, %85, %cst_78 {dimension_numbers = #tpu.dot_dimension_numbers<[1], [0], [0], [1], [0, 0, 1, 1], [], []>} : vector<16x16xf32>, vector<16x8xf32>, vector<16x8xf32> -> vector<16x8xf32>
    %c0_79 = arith.constant 0 : index
    %c1_80 = arith.constant 1 : index
    %c0_81 = arith.constant 0 : index
    %c0_82 = arith.constant 0 : index
    %101 = vector.load %arg11[%c0_79, %c1_80, %c0_81, %c0_82] : memref<2x4x8x32xf32, #tpu.memory_space<vmem>>, vector<1x1x8x32xf32>
    %102 = vector.shape_cast %101 : vector<1x1x8x32xf32> to vector<8x32xf32>
    %cst_83 = arith.constant dense<0.000000e+00> : vector<16x32xf32>
    %103 = tpu.matmul %100, %102, %cst_83 {dimension_numbers = #tpu.dot_dimension_numbers<[1], [0], [0], [1], [0, 0, 1, 1], [], []>} : vector<16x8xf32>, vector<8x32xf32>, vector<16x32xf32> -> vector<16x32xf32>
    %104 = arith.addf %64, %103 : vector<16x32xf32>
    %c0_84 = arith.constant 0 : index
    %c2 = arith.constant 2 : index
    %c0_85 = arith.constant 0 : index
    %c0_86 = arith.constant 0 : index
    %105 = vector.load %arg5[%c0_84, %c2, %c0_85, %c0_86] : memref<2x4x32x8xf32, #tpu.memory_space<vmem>>, vector<1x1x32x8xf32>
    %106 = vector.shape_cast %105 : vector<1x1x32x8xf32> to vector<32x8xf32>
    %cst_87 = arith.constant dense<0.000000e+00> : vector<16x8xf32>
    %107 = tpu.matmul %24, %106, %cst_87 {dimension_numbers = #tpu.dot_dimension_numbers<[1], [0], [0], [1], [0, 0, 1, 1], [], []>} : vector<16x32xf32>, vector<32x8xf32>, vector<16x8xf32> -> vector<16x8xf32>
    %c0_88 = arith.constant 0 : index
    %c2_89 = arith.constant 2 : index
    %c0_90 = arith.constant 0 : index
    %c0_91 = arith.constant 0 : index
    %108 = vector.load %arg6[%c0_88, %c2_89, %c0_90, %c0_91] : memref<2x4x1x8xf32, #tpu.memory_space<vmem>>, vector<1x1x1x8xf32>
    %109 = vector.shape_cast %108 : vector<1x1x1x8xf32> to vector<1x8xf32>
    %110 = vector.broadcast %109 : vector<1x8xf32> to vector<16x8xf32>
    %111 = arith.addf %107, %110 : vector<16x8xf32>
    %c0_92 = arith.constant 0 : index
    %c2_93 = arith.constant 2 : index
    %c0_94 = arith.constant 0 : index
    %c0_95 = arith.constant 0 : index
    %112 = vector.load %arg7[%c0_92, %c2_93, %c0_94, %c0_95] : memref<2x4x32x8xf32, #tpu.memory_space<vmem>>, vector<1x1x32x8xf32>
    %113 = vector.shape_cast %112 : vector<1x1x32x8xf32> to vector<32x8xf32>
    %cst_96 = arith.constant dense<0.000000e+00> : vector<16x8xf32>
    %114 = tpu.matmul %24, %113, %cst_96 {dimension_numbers = #tpu.dot_dimension_numbers<[1], [0], [0], [1], [0, 0, 1, 1], [], []>} : vector<16x32xf32>, vector<32x8xf32>, vector<16x8xf32> -> vector<16x8xf32>
    %c0_97 = arith.constant 0 : index
    %c2_98 = arith.constant 2 : index
    %c0_99 = arith.constant 0 : index
    %c0_100 = arith.constant 0 : index
    %115 = vector.load %arg8[%c0_97, %c2_98, %c0_99, %c0_100] : memref<2x4x1x8xf32, #tpu.memory_space<vmem>>, vector<1x1x1x8xf32>
    %116 = vector.shape_cast %115 : vector<1x1x1x8xf32> to vector<1x8xf32>
    %117 = vector.broadcast %116 : vector<1x8xf32> to vector<16x8xf32>
    %118 = arith.addf %114, %117 : vector<16x8xf32>
    %c0_101 = arith.constant 0 : index
    %c2_102 = arith.constant 2 : index
    %c0_103 = arith.constant 0 : index
    %c0_104 = arith.constant 0 : index
    %119 = vector.load %arg9[%c0_101, %c2_102, %c0_103, %c0_104] : memref<2x4x32x8xf32, #tpu.memory_space<vmem>>, vector<1x1x32x8xf32>
    %120 = vector.shape_cast %119 : vector<1x1x32x8xf32> to vector<32x8xf32>
    %cst_105 = arith.constant dense<0.000000e+00> : vector<16x8xf32>
    %121 = tpu.matmul %24, %120, %cst_105 {dimension_numbers = #tpu.dot_dimension_numbers<[1], [0], [0], [1], [0, 0, 1, 1], [], []>} : vector<16x32xf32>, vector<32x8xf32>, vector<16x8xf32> -> vector<16x8xf32>
    %c0_106 = arith.constant 0 : index
    %c2_107 = arith.constant 2 : index
    %c0_108 = arith.constant 0 : index
    %c0_109 = arith.constant 0 : index
    %122 = vector.load %arg10[%c0_106, %c2_107, %c0_108, %c0_109] : memref<2x4x1x8xf32, #tpu.memory_space<vmem>>, vector<1x1x1x8xf32>
    %123 = vector.shape_cast %122 : vector<1x1x1x8xf32> to vector<1x8xf32>
    %124 = vector.broadcast %123 : vector<1x8xf32> to vector<16x8xf32>
    %125 = arith.addf %121, %124 : vector<16x8xf32>
    %cst_110 = arith.constant dense<0.000000e+00> : vector<16x16xf32>
    %126 = tpu.matmul %111, %118, %cst_110 {dimension_numbers = #tpu.dot_dimension_numbers<[1], [1], [0], [0], [0, 0, 1, 0], [], []>} : vector<16x8xf32>, vector<16x8xf32>, vector<16x16xf32> -> vector<16x16xf32>
    %cst_111 = arith.constant 0.353553385 : f32
    %127 = vector.broadcast %cst_111 : f32 to vector<16x16xf32>
    %128 = arith.mulf %126, %127 : vector<16x16xf32>
    %129 = arith.addf %128, %25 : vector<16x16xf32>
    %cst_112 = arith.constant dense<0xFF800000> : vector<16xf32>
    %130 = vector.multi_reduction <maximumf>, %129, %cst_112 [1] : vector<16x16xf32> to vector<16xf32>
    %131 = vector.shape_cast %130 : vector<16xf32> to vector<16x1xf32>
    %132 = vector.broadcast %131 : vector<16x1xf32> to vector<16x16xf32>
    %133 = arith.subf %129, %132 : vector<16x16xf32>
    %134 = math.exp %133 : vector<16x16xf32>
    %cst_113 = arith.constant dense<0.000000e+00> : vector<16xf32>
    %135 = vector.multi_reduction <add>, %134, %cst_113 [1] : vector<16x16xf32> to vector<16xf32>
    %136 = vector.shape_cast %135 : vector<16xf32> to vector<16x1xf32>
    %137 = tpu.reciprocal %136 {approx = true} : vector<16x1xf32> -> vector<16x1xf32>
    %138 = vector.broadcast %137 : vector<16x1xf32> to vector<16x16xf32>
    %139 = arith.mulf %134, %138 : vector<16x16xf32>
    %cst_114 = arith.constant dense<0.000000e+00> : vector<16x8xf32>
    %140 = tpu.matmul %139, %125, %cst_114 {dimension_numbers = #tpu.dot_dimension_numbers<[1], [0], [0], [1], [0, 0, 1, 1], [], []>} : vector<16x16xf32>, vector<16x8xf32>, vector<16x8xf32> -> vector<16x8xf32>
    %c0_115 = arith.constant 0 : index
    %c2_116 = arith.constant 2 : index
    %c0_117 = arith.constant 0 : index
    %c0_118 = arith.constant 0 : index
    %141 = vector.load %arg11[%c0_115, %c2_116, %c0_117, %c0_118] : memref<2x4x8x32xf32, #tpu.memory_space<vmem>>, vector<1x1x8x32xf32>
    %142 = vector.shape_cast %141 : vector<1x1x8x32xf32> to vector<8x32xf32>
    %cst_119 = arith.constant dense<0.000000e+00> : vector<16x32xf32>
    %143 = tpu.matmul %140, %142, %cst_119 {dimension_numbers = #tpu.dot_dimension_numbers<[1], [0], [0], [1], [0, 0, 1, 1], [], []>} : vector<16x8xf32>, vector<8x32xf32>, vector<16x32xf32> -> vector<16x32xf32>
    %144 = arith.addf %104, %143 : vector<16x32xf32>
    %c0_120 = arith.constant 0 : index
    %c3 = arith.constant 3 : index
    %c0_121 = arith.constant 0 : index
    %c0_122 = arith.constant 0 : index
    %145 = vector.load %arg5[%c0_120, %c3, %c0_121, %c0_122] : memref<2x4x32x8xf32, #tpu.memory_space<vmem>>, vector<1x1x32x8xf32>
    %146 = vector.shape_cast %145 : vector<1x1x32x8xf32> to vector<32x8xf32>
    %cst_123 = arith.constant dense<0.000000e+00> : vector<16x8xf32>
    %147 = tpu.matmul %24, %146, %cst_123 {dimension_numbers = #tpu.dot_dimension_numbers<[1], [0], [0], [1], [0, 0, 1, 1], [], []>} : vector<16x32xf32>, vector<32x8xf32>, vector<16x8xf32> -> vector<16x8xf32>
    %c0_124 = arith.constant 0 : index
    %c3_125 = arith.constant 3 : index
    %c0_126 = arith.constant 0 : index
    %c0_127 = arith.constant 0 : index
    %148 = vector.load %arg6[%c0_124, %c3_125, %c0_126, %c0_127] : memref<2x4x1x8xf32, #tpu.memory_space<vmem>>, vector<1x1x1x8xf32>
    %149 = vector.shape_cast %148 : vector<1x1x1x8xf32> to vector<1x8xf32>
    %150 = vector.broadcast %149 : vector<1x8xf32> to vector<16x8xf32>
    %151 = arith.addf %147, %150 : vector<16x8xf32>
    %c0_128 = arith.constant 0 : index
    %c3_129 = arith.constant 3 : index
    %c0_130 = arith.constant 0 : index
    %c0_131 = arith.constant 0 : index
    %152 = vector.load %arg7[%c0_128, %c3_129, %c0_130, %c0_131] : memref<2x4x32x8xf32, #tpu.memory_space<vmem>>, vector<1x1x32x8xf32>
    %153 = vector.shape_cast %152 : vector<1x1x32x8xf32> to vector<32x8xf32>
    %cst_132 = arith.constant dense<0.000000e+00> : vector<16x8xf32>
    %154 = tpu.matmul %24, %153, %cst_132 {dimension_numbers = #tpu.dot_dimension_numbers<[1], [0], [0], [1], [0, 0, 1, 1], [], []>} : vector<16x32xf32>, vector<32x8xf32>, vector<16x8xf32> -> vector<16x8xf32>
    %c0_133 = arith.constant 0 : index
    %c3_134 = arith.constant 3 : index
    %c0_135 = arith.constant 0 : index
    %c0_136 = arith.constant 0 : index
    %155 = vector.load %arg8[%c0_133, %c3_134, %c0_135, %c0_136] : memref<2x4x1x8xf32, #tpu.memory_space<vmem>>, vector<1x1x1x8xf32>
    %156 = vector.shape_cast %155 : vector<1x1x1x8xf32> to vector<1x8xf32>
    %157 = vector.broadcast %156 : vector<1x8xf32> to vector<16x8xf32>
    %158 = arith.addf %154, %157 : vector<16x8xf32>
    %c0_137 = arith.constant 0 : index
    %c3_138 = arith.constant 3 : index
    %c0_139 = arith.constant 0 : index
    %c0_140 = arith.constant 0 : index
    %159 = vector.load %arg9[%c0_137, %c3_138, %c0_139, %c0_140] : memref<2x4x32x8xf32, #tpu.memory_space<vmem>>, vector<1x1x32x8xf32>
    %160 = vector.shape_cast %159 : vector<1x1x32x8xf32> to vector<32x8xf32>
    %cst_141 = arith.constant dense<0.000000e+00> : vector<16x8xf32>
    %161 = tpu.matmul %24, %160, %cst_141 {dimension_numbers = #tpu.dot_dimension_numbers<[1], [0], [0], [1], [0, 0, 1, 1], [], []>} : vector<16x32xf32>, vector<32x8xf32>, vector<16x8xf32> -> vector<16x8xf32>
    %c0_142 = arith.constant 0 : index
    %c3_143 = arith.constant 3 : index
    %c0_144 = arith.constant 0 : index
    %c0_145 = arith.constant 0 : index
    %162 = vector.load %arg10[%c0_142, %c3_143, %c0_144, %c0_145] : memref<2x4x1x8xf32, #tpu.memory_space<vmem>>, vector<1x1x1x8xf32>
    %163 = vector.shape_cast %162 : vector<1x1x1x8xf32> to vector<1x8xf32>
    %164 = vector.broadcast %163 : vector<1x8xf32> to vector<16x8xf32>
    %165 = arith.addf %161, %164 : vector<16x8xf32>
    %cst_146 = arith.constant dense<0.000000e+00> : vector<16x16xf32>
    %166 = tpu.matmul %151, %158, %cst_146 {dimension_numbers = #tpu.dot_dimension_numbers<[1], [1], [0], [0], [0, 0, 1, 0], [], []>} : vector<16x8xf32>, vector<16x8xf32>, vector<16x16xf32> -> vector<16x16xf32>
    %cst_147 = arith.constant 0.353553385 : f32
    %167 = vector.broadcast %cst_147 : f32 to vector<16x16xf32>
    %168 = arith.mulf %166, %167 : vector<16x16xf32>
    %169 = arith.addf %168, %25 : vector<16x16xf32>
    %cst_148 = arith.constant dense<0xFF800000> : vector<16xf32>
    %170 = vector.multi_reduction <maximumf>, %169, %cst_148 [1] : vector<16x16xf32> to vector<16xf32>
    %171 = vector.shape_cast %170 : vector<16xf32> to vector<16x1xf32>
    %172 = vector.broadcast %171 : vector<16x1xf32> to vector<16x16xf32>
    %173 = arith.subf %169, %172 : vector<16x16xf32>
    %174 = math.exp %173 : vector<16x16xf32>
    %cst_149 = arith.constant dense<0.000000e+00> : vector<16xf32>
    %175 = vector.multi_reduction <add>, %174, %cst_149 [1] : vector<16x16xf32> to vector<16xf32>
    %176 = vector.shape_cast %175 : vector<16xf32> to vector<16x1xf32>
    %177 = tpu.reciprocal %176 {approx = true} : vector<16x1xf32> -> vector<16x1xf32>
    %178 = vector.broadcast %177 : vector<16x1xf32> to vector<16x16xf32>
    %179 = arith.mulf %174, %178 : vector<16x16xf32>
    %cst_150 = arith.constant dense<0.000000e+00> : vector<16x8xf32>
    %180 = tpu.matmul %179, %165, %cst_150 {dimension_numbers = #tpu.dot_dimension_numbers<[1], [0], [0], [1], [0, 0, 1, 1], [], []>} : vector<16x16xf32>, vector<16x8xf32>, vector<16x8xf32> -> vector<16x8xf32>
    %c0_151 = arith.constant 0 : index
    %c3_152 = arith.constant 3 : index
    %c0_153 = arith.constant 0 : index
    %c0_154 = arith.constant 0 : index
    %181 = vector.load %arg11[%c0_151, %c3_152, %c0_153, %c0_154] : memref<2x4x8x32xf32, #tpu.memory_space<vmem>>, vector<1x1x8x32xf32>
    %182 = vector.shape_cast %181 : vector<1x1x8x32xf32> to vector<8x32xf32>
    %cst_155 = arith.constant dense<0.000000e+00> : vector<16x32xf32>
    %183 = tpu.matmul %180, %182, %cst_155 {dimension_numbers = #tpu.dot_dimension_numbers<[1], [0], [0], [1], [0, 0, 1, 1], [], []>} : vector<16x8xf32>, vector<8x32xf32>, vector<16x32xf32> -> vector<16x32xf32>
    %184 = arith.addf %144, %183 : vector<16x32xf32>
    %c0_156 = arith.constant 0 : index
    %c0_157 = arith.constant 0 : index
    %c0_158 = arith.constant 0 : index
    %185 = vector.load %arg12[%c0_156, %c0_157, %c0_158] : memref<2x1x32xf32, #tpu.memory_space<vmem>>, vector<1x1x32xf32>
    %186 = vector.shape_cast %185 : vector<1x1x32xf32> to vector<1x32xf32>
    %187 = vector.broadcast %186 : vector<1x32xf32> to vector<16x32xf32>
    %188 = arith.addf %184, %187 : vector<16x32xf32>
    %189 = arith.addf %24, %188 : vector<16x32xf32>
    %c0_159 = arith.constant 0 : index
    %c0_160 = arith.constant 0 : index
    %c0_161 = arith.constant 0 : index
    %190 = vector.load %arg13[%c0_159, %c0_160, %c0_161] : memref<2x1x32xf32, #tpu.memory_space<vmem>>, vector<1x1x32xf32>
    %191 = vector.shape_cast %190 : vector<1x1x32xf32> to vector<1x32xf32>
    %c0_162 = arith.constant 0 : index
    %c0_163 = arith.constant 0 : index
    %c0_164 = arith.constant 0 : index
    %192 = vector.load %arg14[%c0_162, %c0_163, %c0_164] : memref<2x1x32xf32, #tpu.memory_space<vmem>>, vector<1x1x32xf32>
    %193 = vector.shape_cast %192 : vector<1x1x32xf32> to vector<1x32xf32>
    %cst_165 = arith.constant dense<0.000000e+00> : vector<16xf32>
    %194 = vector.multi_reduction <add>, %189, %cst_165 [1] : vector<16x32xf32> to vector<16xf32>
    %195 = vector.shape_cast %194 : vector<16xf32> to vector<16x1xf32>
    %cst_166 = arith.constant 3.200000e+01 : f32
    %196 = vector.broadcast %cst_166 : f32 to vector<16x1xf32>
    %197 = arith.divf %195, %196 : vector<16x1xf32>
    %198 = vector.broadcast %197 : vector<16x1xf32> to vector<16x32xf32>
    %199 = arith.subf %189, %198 : vector<16x32xf32>
    %200 = arith.mulf %199, %199 : vector<16x32xf32>
    %cst_167 = arith.constant dense<0.000000e+00> : vector<16xf32>
    %201 = vector.multi_reduction <add>, %200, %cst_167 [1] : vector<16x32xf32> to vector<16xf32>
    %202 = vector.shape_cast %201 : vector<16xf32> to vector<16x1xf32>
    %cst_168 = arith.constant 3.200000e+01 : f32
    %203 = vector.broadcast %cst_168 : f32 to vector<16x1xf32>
    %204 = arith.divf %202, %203 : vector<16x1xf32>
    %205 = vector.broadcast %197 : vector<16x1xf32> to vector<16x32xf32>
    %206 = arith.subf %189, %205 : vector<16x32xf32>
    %cst_169 = arith.constant 9.99999996E-13 : f32
    %207 = vector.broadcast %cst_169 : f32 to vector<16x1xf32>
    %208 = arith.addf %204, %207 : vector<16x1xf32>
    %209 = math.rsqrt %208 : vector<16x1xf32>
    %210 = vector.broadcast %209 : vector<16x1xf32> to vector<16x32xf32>
    %211 = arith.mulf %206, %210 : vector<16x32xf32>
    %212 = vector.broadcast %191 : vector<1x32xf32> to vector<16x32xf32>
    %213 = arith.mulf %211, %212 : vector<16x32xf32>
    %214 = vector.broadcast %193 : vector<1x32xf32> to vector<16x32xf32>
    %215 = arith.addf %213, %214 : vector<16x32xf32>
    %c0_170 = arith.constant 0 : index
    %c0_171 = arith.constant 0 : index
    %c0_172 = arith.constant 0 : index
    %216 = vector.load %arg15[%c0_170, %c0_171, %c0_172] : memref<2x32x64xf32, #tpu.memory_space<vmem>>, vector<1x32x64xf32>
    %217 = vector.shape_cast %216 : vector<1x32x64xf32> to vector<32x64xf32>
    %cst_173 = arith.constant dense<0.000000e+00> : vector<16x64xf32>
    %218 = tpu.matmul %215, %217, %cst_173 {dimension_numbers = #tpu.dot_dimension_numbers<[1], [0], [0], [1], [0, 0, 1, 1], [], []>} : vector<16x32xf32>, vector<32x64xf32>, vector<16x64xf32> -> vector<16x64xf32>
    %c0_174 = arith.constant 0 : index
    %c0_175 = arith.constant 0 : index
    %c0_176 = arith.constant 0 : index
    %219 = vector.load %arg16[%c0_174, %c0_175, %c0_176] : memref<2x1x64xf32, #tpu.memory_space<vmem>>, vector<1x1x64xf32>
    %220 = vector.shape_cast %219 : vector<1x1x64xf32> to vector<1x64xf32>
    %221 = vector.broadcast %220 : vector<1x64xf32> to vector<16x64xf32>
    %222 = arith.addf %218, %221 : vector<16x64xf32>
    %cst_177 = arith.constant 5.000000e-01 : f32
    %223 = vector.broadcast %cst_177 : f32 to vector<16x64xf32>
    %224 = arith.mulf %223, %222 : vector<16x64xf32>
    %225 = arith.mulf %222, %222 : vector<16x64xf32>
    %226 = arith.mulf %222, %225 : vector<16x64xf32>
    %cst_178 = arith.constant 4.471500e-02 : f32
    %227 = vector.broadcast %cst_178 : f32 to vector<16x64xf32>
    %228 = arith.mulf %227, %226 : vector<16x64xf32>
    %229 = arith.addf %222, %228 : vector<16x64xf32>
    %cst_179 = arith.constant 0.797884583 : f32
    %230 = vector.broadcast %cst_179 : f32 to vector<16x64xf32>
    %231 = arith.mulf %230, %229 : vector<16x64xf32>
    %232 = math.tanh %231 : vector<16x64xf32>
    %cst_180 = arith.constant 1.000000e+00 : f32
    %233 = vector.broadcast %cst_180 : f32 to vector<16x64xf32>
    %234 = arith.addf %233, %232 : vector<16x64xf32>
    %235 = arith.mulf %224, %234 : vector<16x64xf32>
    %c0_181 = arith.constant 0 : index
    %c0_182 = arith.constant 0 : index
    %c0_183 = arith.constant 0 : index
    %236 = vector.load %arg17[%c0_181, %c0_182, %c0_183] : memref<2x64x32xf32, #tpu.memory_space<vmem>>, vector<1x64x32xf32>
    %237 = vector.shape_cast %236 : vector<1x64x32xf32> to vector<64x32xf32>
    %cst_184 = arith.constant dense<0.000000e+00> : vector<16x32xf32>
    %238 = tpu.matmul %235, %237, %cst_184 {dimension_numbers = #tpu.dot_dimension_numbers<[1], [0], [0], [1], [0, 0, 1, 1], [], []>} : vector<16x64xf32>, vector<64x32xf32>, vector<16x32xf32> -> vector<16x32xf32>
    %c0_185 = arith.constant 0 : index
    %c0_186 = arith.constant 0 : index
    %c0_187 = arith.constant 0 : index
    %239 = vector.load %arg18[%c0_185, %c0_186, %c0_187] : memref<2x1x32xf32, #tpu.memory_space<vmem>>, vector<1x1x32xf32>
    %240 = vector.shape_cast %239 : vector<1x1x32xf32> to vector<1x32xf32>
    %241 = vector.broadcast %240 : vector<1x32xf32> to vector<16x32xf32>
    %242 = arith.addf %238, %241 : vector<16x32xf32>
    %243 = arith.addf %215, %242 : vector<16x32xf32>
    %c0_188 = arith.constant 0 : index
    %c0_189 = arith.constant 0 : index
    %c0_190 = arith.constant 0 : index
    %244 = vector.load %arg19[%c0_188, %c0_189, %c0_190] : memref<2x1x32xf32, #tpu.memory_space<vmem>>, vector<1x1x32xf32>
    %245 = vector.shape_cast %244 : vector<1x1x32xf32> to vector<1x32xf32>
    %c0_191 = arith.constant 0 : index
    %c0_192 = arith.constant 0 : index
    %c0_193 = arith.constant 0 : index
    %246 = vector.load %arg20[%c0_191, %c0_192, %c0_193] : memref<2x1x32xf32, #tpu.memory_space<vmem>>, vector<1x1x32xf32>
    %247 = vector.shape_cast %246 : vector<1x1x32xf32> to vector<1x32xf32>
    %cst_194 = arith.constant dense<0.000000e+00> : vector<16xf32>
    %248 = vector.multi_reduction <add>, %243, %cst_194 [1] : vector<16x32xf32> to vector<16xf32>
    %249 = vector.shape_cast %248 : vector<16xf32> to vector<16x1xf32>
    %cst_195 = arith.constant 3.200000e+01 : f32
    %250 = vector.broadcast %cst_195 : f32 to vector<16x1xf32>
    %251 = arith.divf %249, %250 : vector<16x1xf32>
    %252 = vector.broadcast %251 : vector<16x1xf32> to vector<16x32xf32>
    %253 = arith.subf %243, %252 : vector<16x32xf32>
    %254 = arith.mulf %253, %253 : vector<16x32xf32>
    %cst_196 = arith.constant dense<0.000000e+00> : vector<16xf32>
    %255 = vector.multi_reduction <add>, %254, %cst_196 [1] : vector<16x32xf32> to vector<16xf32>
    %256 = vector.shape_cast %255 : vector<16xf32> to vector<16x1xf32>
    %cst_197 = arith.constant 3.200000e+01 : f32
    %257 = vector.broadcast %cst_197 : f32 to vector<16x1xf32>
    %258 = arith.divf %256, %257 : vector<16x1xf32>
    %259 = vector.broadcast %251 : vector<16x1xf32> to vector<16x32xf32>
    %260 = arith.subf %243, %259 : vector<16x32xf32>
    %cst_198 = arith.constant 9.99999996E-13 : f32
    %261 = vector.broadcast %cst_198 : f32 to vector<16x1xf32>
    %262 = arith.addf %258, %261 : vector<16x1xf32>
    %263 = math.rsqrt %262 : vector<16x1xf32>
    %264 = vector.broadcast %263 : vector<16x1xf32> to vector<16x32xf32>
    %265 = arith.mulf %260, %264 : vector<16x32xf32>
    %266 = vector.broadcast %245 : vector<1x32xf32> to vector<16x32xf32>
    %267 = arith.mulf %265, %266 : vector<16x32xf32>
    %268 = vector.broadcast %247 : vector<1x32xf32> to vector<16x32xf32>
    %269 = arith.addf %267, %268 : vector<16x32xf32>
    %c1_199 = arith.constant 1 : index
    %c0_200 = arith.constant 0 : index
    %c0_201 = arith.constant 0 : index
    %c0_202 = arith.constant 0 : index
    %270 = vector.load %arg5[%c1_199, %c0_200, %c0_201, %c0_202] : memref<2x4x32x8xf32, #tpu.memory_space<vmem>>, vector<1x1x32x8xf32>
    %271 = vector.shape_cast %270 : vector<1x1x32x8xf32> to vector<32x8xf32>
    %cst_203 = arith.constant dense<0.000000e+00> : vector<16x8xf32>
    %272 = tpu.matmul %269, %271, %cst_203 {dimension_numbers = #tpu.dot_dimension_numbers<[1], [0], [0], [1], [0, 0, 1, 1], [], []>} : vector<16x32xf32>, vector<32x8xf32>, vector<16x8xf32> -> vector<16x8xf32>
    %c1_204 = arith.constant 1 : index
    %c0_205 = arith.constant 0 : index
    %c0_206 = arith.constant 0 : index
    %c0_207 = arith.constant 0 : index
    %273 = vector.load %arg6[%c1_204, %c0_205, %c0_206, %c0_207] : memref<2x4x1x8xf32, #tpu.memory_space<vmem>>, vector<1x1x1x8xf32>
    %274 = vector.shape_cast %273 : vector<1x1x1x8xf32> to vector<1x8xf32>
    %275 = vector.broadcast %274 : vector<1x8xf32> to vector<16x8xf32>
    %276 = arith.addf %272, %275 : vector<16x8xf32>
    %c1_208 = arith.constant 1 : index
    %c0_209 = arith.constant 0 : index
    %c0_210 = arith.constant 0 : index
    %c0_211 = arith.constant 0 : index
    %277 = vector.load %arg7[%c1_208, %c0_209, %c0_210, %c0_211] : memref<2x4x32x8xf32, #tpu.memory_space<vmem>>, vector<1x1x32x8xf32>
    %278 = vector.shape_cast %277 : vector<1x1x32x8xf32> to vector<32x8xf32>
    %cst_212 = arith.constant dense<0.000000e+00> : vector<16x8xf32>
    %279 = tpu.matmul %269, %278, %cst_212 {dimension_numbers = #tpu.dot_dimension_numbers<[1], [0], [0], [1], [0, 0, 1, 1], [], []>} : vector<16x32xf32>, vector<32x8xf32>, vector<16x8xf32> -> vector<16x8xf32>
    %c1_213 = arith.constant 1 : index
    %c0_214 = arith.constant 0 : index
    %c0_215 = arith.constant 0 : index
    %c0_216 = arith.constant 0 : index
    %280 = vector.load %arg8[%c1_213, %c0_214, %c0_215, %c0_216] : memref<2x4x1x8xf32, #tpu.memory_space<vmem>>, vector<1x1x1x8xf32>
    %281 = vector.shape_cast %280 : vector<1x1x1x8xf32> to vector<1x8xf32>
    %282 = vector.broadcast %281 : vector<1x8xf32> to vector<16x8xf32>
    %283 = arith.addf %279, %282 : vector<16x8xf32>
    %c1_217 = arith.constant 1 : index
    %c0_218 = arith.constant 0 : index
    %c0_219 = arith.constant 0 : index
    %c0_220 = arith.constant 0 : index
    %284 = vector.load %arg9[%c1_217, %c0_218, %c0_219, %c0_220] : memref<2x4x32x8xf32, #tpu.memory_space<vmem>>, vector<1x1x32x8xf32>
    %285 = vector.shape_cast %284 : vector<1x1x32x8xf32> to vector<32x8xf32>
    %cst_221 = arith.constant dense<0.000000e+00> : vector<16x8xf32>
    %286 = tpu.matmul %269, %285, %cst_221 {dimension_numbers = #tpu.dot_dimension_numbers<[1], [0], [0], [1], [0, 0, 1, 1], [], []>} : vector<16x32xf32>, vector<32x8xf32>, vector<16x8xf32> -> vector<16x8xf32>
    %c1_222 = arith.constant 1 : index
    %c0_223 = arith.constant 0 : index
    %c0_224 = arith.constant 0 : index
    %c0_225 = arith.constant 0 : index
    %287 = vector.load %arg10[%c1_222, %c0_223, %c0_224, %c0_225] : memref<2x4x1x8xf32, #tpu.memory_space<vmem>>, vector<1x1x1x8xf32>
    %288 = vector.shape_cast %287 : vector<1x1x1x8xf32> to vector<1x8xf32>
    %289 = vector.broadcast %288 : vector<1x8xf32> to vector<16x8xf32>
    %290 = arith.addf %286, %289 : vector<16x8xf32>
    %cst_226 = arith.constant dense<0.000000e+00> : vector<16x16xf32>
    %291 = tpu.matmul %276, %283, %cst_226 {dimension_numbers = #tpu.dot_dimension_numbers<[1], [1], [0], [0], [0, 0, 1, 0], [], []>} : vector<16x8xf32>, vector<16x8xf32>, vector<16x16xf32> -> vector<16x16xf32>
    %cst_227 = arith.constant 0.353553385 : f32
    %292 = vector.broadcast %cst_227 : f32 to vector<16x16xf32>
    %293 = arith.mulf %291, %292 : vector<16x16xf32>
    %294 = arith.addf %293, %25 : vector<16x16xf32>
    %cst_228 = arith.constant dense<0xFF800000> : vector<16xf32>
    %295 = vector.multi_reduction <maximumf>, %294, %cst_228 [1] : vector<16x16xf32> to vector<16xf32>
    %296 = vector.shape_cast %295 : vector<16xf32> to vector<16x1xf32>
    %297 = vector.broadcast %296 : vector<16x1xf32> to vector<16x16xf32>
    %298 = arith.subf %294, %297 : vector<16x16xf32>
    %299 = math.exp %298 : vector<16x16xf32>
    %cst_229 = arith.constant dense<0.000000e+00> : vector<16xf32>
    %300 = vector.multi_reduction <add>, %299, %cst_229 [1] : vector<16x16xf32> to vector<16xf32>
    %301 = vector.shape_cast %300 : vector<16xf32> to vector<16x1xf32>
    %302 = tpu.reciprocal %301 {approx = true} : vector<16x1xf32> -> vector<16x1xf32>
    %303 = vector.broadcast %302 : vector<16x1xf32> to vector<16x16xf32>
    %304 = arith.mulf %299, %303 : vector<16x16xf32>
    %cst_230 = arith.constant dense<0.000000e+00> : vector<16x8xf32>
    %305 = tpu.matmul %304, %290, %cst_230 {dimension_numbers = #tpu.dot_dimension_numbers<[1], [0], [0], [1], [0, 0, 1, 1], [], []>} : vector<16x16xf32>, vector<16x8xf32>, vector<16x8xf32> -> vector<16x8xf32>
    %c1_231 = arith.constant 1 : index
    %c0_232 = arith.constant 0 : index
    %c0_233 = arith.constant 0 : index
    %c0_234 = arith.constant 0 : index
    %306 = vector.load %arg11[%c1_231, %c0_232, %c0_233, %c0_234] : memref<2x4x8x32xf32, #tpu.memory_space<vmem>>, vector<1x1x8x32xf32>
    %307 = vector.shape_cast %306 : vector<1x1x8x32xf32> to vector<8x32xf32>
    %cst_235 = arith.constant dense<0.000000e+00> : vector<16x32xf32>
    %308 = tpu.matmul %305, %307, %cst_235 {dimension_numbers = #tpu.dot_dimension_numbers<[1], [0], [0], [1], [0, 0, 1, 1], [], []>} : vector<16x8xf32>, vector<8x32xf32>, vector<16x32xf32> -> vector<16x32xf32>
    %c1_236 = arith.constant 1 : index
    %c1_237 = arith.constant 1 : index
    %c0_238 = arith.constant 0 : index
    %c0_239 = arith.constant 0 : index
    %309 = vector.load %arg5[%c1_236, %c1_237, %c0_238, %c0_239] : memref<2x4x32x8xf32, #tpu.memory_space<vmem>>, vector<1x1x32x8xf32>
    %310 = vector.shape_cast %309 : vector<1x1x32x8xf32> to vector<32x8xf32>
    %cst_240 = arith.constant dense<0.000000e+00> : vector<16x8xf32>
    %311 = tpu.matmul %269, %310, %cst_240 {dimension_numbers = #tpu.dot_dimension_numbers<[1], [0], [0], [1], [0, 0, 1, 1], [], []>} : vector<16x32xf32>, vector<32x8xf32>, vector<16x8xf32> -> vector<16x8xf32>
    %c1_241 = arith.constant 1 : index
    %c1_242 = arith.constant 1 : index
    %c0_243 = arith.constant 0 : index
    %c0_244 = arith.constant 0 : index
    %312 = vector.load %arg6[%c1_241, %c1_242, %c0_243, %c0_244] : memref<2x4x1x8xf32, #tpu.memory_space<vmem>>, vector<1x1x1x8xf32>
    %313 = vector.shape_cast %312 : vector<1x1x1x8xf32> to vector<1x8xf32>
    %314 = vector.broadcast %313 : vector<1x8xf32> to vector<16x8xf32>
    %315 = arith.addf %311, %314 : vector<16x8xf32>
    %c1_245 = arith.constant 1 : index
    %c1_246 = arith.constant 1 : index
    %c0_247 = arith.constant 0 : index
    %c0_248 = arith.constant 0 : index
    %316 = vector.load %arg7[%c1_245, %c1_246, %c0_247, %c0_248] : memref<2x4x32x8xf32, #tpu.memory_space<vmem>>, vector<1x1x32x8xf32>
    %317 = vector.shape_cast %316 : vector<1x1x32x8xf32> to vector<32x8xf32>
    %cst_249 = arith.constant dense<0.000000e+00> : vector<16x8xf32>
    %318 = tpu.matmul %269, %317, %cst_249 {dimension_numbers = #tpu.dot_dimension_numbers<[1], [0], [0], [1], [0, 0, 1, 1], [], []>} : vector<16x32xf32>, vector<32x8xf32>, vector<16x8xf32> -> vector<16x8xf32>
    %c1_250 = arith.constant 1 : index
    %c1_251 = arith.constant 1 : index
    %c0_252 = arith.constant 0 : index
    %c0_253 = arith.constant 0 : index
    %319 = vector.load %arg8[%c1_250, %c1_251, %c0_252, %c0_253] : memref<2x4x1x8xf32, #tpu.memory_space<vmem>>, vector<1x1x1x8xf32>
    %320 = vector.shape_cast %319 : vector<1x1x1x8xf32> to vector<1x8xf32>
    %321 = vector.broadcast %320 : vector<1x8xf32> to vector<16x8xf32>
    %322 = arith.addf %318, %321 : vector<16x8xf32>
    %c1_254 = arith.constant 1 : index
    %c1_255 = arith.constant 1 : index
    %c0_256 = arith.constant 0 : index
    %c0_257 = arith.constant 0 : index
    %323 = vector.load %arg9[%c1_254, %c1_255, %c0_256, %c0_257] : memref<2x4x32x8xf32, #tpu.memory_space<vmem>>, vector<1x1x32x8xf32>
    %324 = vector.shape_cast %323 : vector<1x1x32x8xf32> to vector<32x8xf32>
    %cst_258 = arith.constant dense<0.000000e+00> : vector<16x8xf32>
    %325 = tpu.matmul %269, %324, %cst_258 {dimension_numbers = #tpu.dot_dimension_numbers<[1], [0], [0], [1], [0, 0, 1, 1], [], []>} : vector<16x32xf32>, vector<32x8xf32>, vector<16x8xf32> -> vector<16x8xf32>
    %c1_259 = arith.constant 1 : index
    %c1_260 = arith.constant 1 : index
    %c0_261 = arith.constant 0 : index
    %c0_262 = arith.constant 0 : index
    %326 = vector.load %arg10[%c1_259, %c1_260, %c0_261, %c0_262] : memref<2x4x1x8xf32, #tpu.memory_space<vmem>>, vector<1x1x1x8xf32>
    %327 = vector.shape_cast %326 : vector<1x1x1x8xf32> to vector<1x8xf32>
    %328 = vector.broadcast %327 : vector<1x8xf32> to vector<16x8xf32>
    %329 = arith.addf %325, %328 : vector<16x8xf32>
    %cst_263 = arith.constant dense<0.000000e+00> : vector<16x16xf32>
    %330 = tpu.matmul %315, %322, %cst_263 {dimension_numbers = #tpu.dot_dimension_numbers<[1], [1], [0], [0], [0, 0, 1, 0], [], []>} : vector<16x8xf32>, vector<16x8xf32>, vector<16x16xf32> -> vector<16x16xf32>
    %cst_264 = arith.constant 0.353553385 : f32
    %331 = vector.broadcast %cst_264 : f32 to vector<16x16xf32>
    %332 = arith.mulf %330, %331 : vector<16x16xf32>
    %333 = arith.addf %332, %25 : vector<16x16xf32>
    %cst_265 = arith.constant dense<0xFF800000> : vector<16xf32>
    %334 = vector.multi_reduction <maximumf>, %333, %cst_265 [1] : vector<16x16xf32> to vector<16xf32>
    %335 = vector.shape_cast %334 : vector<16xf32> to vector<16x1xf32>
    %336 = vector.broadcast %335 : vector<16x1xf32> to vector<16x16xf32>
    %337 = arith.subf %333, %336 : vector<16x16xf32>
    %338 = math.exp %337 : vector<16x16xf32>
    %cst_266 = arith.constant dense<0.000000e+00> : vector<16xf32>
    %339 = vector.multi_reduction <add>, %338, %cst_266 [1] : vector<16x16xf32> to vector<16xf32>
    %340 = vector.shape_cast %339 : vector<16xf32> to vector<16x1xf32>
    %341 = tpu.reciprocal %340 {approx = true} : vector<16x1xf32> -> vector<16x1xf32>
    %342 = vector.broadcast %341 : vector<16x1xf32> to vector<16x16xf32>
    %343 = arith.mulf %338, %342 : vector<16x16xf32>
    %cst_267 = arith.constant dense<0.000000e+00> : vector<16x8xf32>
    %344 = tpu.matmul %343, %329, %cst_267 {dimension_numbers = #tpu.dot_dimension_numbers<[1], [0], [0], [1], [0, 0, 1, 1], [], []>} : vector<16x16xf32>, vector<16x8xf32>, vector<16x8xf32> -> vector<16x8xf32>
    %c1_268 = arith.constant 1 : index
    %c1_269 = arith.constant 1 : index
    %c0_270 = arith.constant 0 : index
    %c0_271 = arith.constant 0 : index
    %345 = vector.load %arg11[%c1_268, %c1_269, %c0_270, %c0_271] : memref<2x4x8x32xf32, #tpu.memory_space<vmem>>, vector<1x1x8x32xf32>
    %346 = vector.shape_cast %345 : vector<1x1x8x32xf32> to vector<8x32xf32>
    %cst_272 = arith.constant dense<0.000000e+00> : vector<16x32xf32>
    %347 = tpu.matmul %344, %346, %cst_272 {dimension_numbers = #tpu.dot_dimension_numbers<[1], [0], [0], [1], [0, 0, 1, 1], [], []>} : vector<16x8xf32>, vector<8x32xf32>, vector<16x32xf32> -> vector<16x32xf32>
    %348 = arith.addf %308, %347 : vector<16x32xf32>
    %c1_273 = arith.constant 1 : index
    %c2_274 = arith.constant 2 : index
    %c0_275 = arith.constant 0 : index
    %c0_276 = arith.constant 0 : index
    %349 = vector.load %arg5[%c1_273, %c2_274, %c0_275, %c0_276] : memref<2x4x32x8xf32, #tpu.memory_space<vmem>>, vector<1x1x32x8xf32>
    %350 = vector.shape_cast %349 : vector<1x1x32x8xf32> to vector<32x8xf32>
    %cst_277 = arith.constant dense<0.000000e+00> : vector<16x8xf32>
    %351 = tpu.matmul %269, %350, %cst_277 {dimension_numbers = #tpu.dot_dimension_numbers<[1], [0], [0], [1], [0, 0, 1, 1], [], []>} : vector<16x32xf32>, vector<32x8xf32>, vector<16x8xf32> -> vector<16x8xf32>
    %c1_278 = arith.constant 1 : index
    %c2_279 = arith.constant 2 : index
    %c0_280 = arith.constant 0 : index
    %c0_281 = arith.constant 0 : index
    %352 = vector.load %arg6[%c1_278, %c2_279, %c0_280, %c0_281] : memref<2x4x1x8xf32, #tpu.memory_space<vmem>>, vector<1x1x1x8xf32>
    %353 = vector.shape_cast %352 : vector<1x1x1x8xf32> to vector<1x8xf32>
    %354 = vector.broadcast %353 : vector<1x8xf32> to vector<16x8xf32>
    %355 = arith.addf %351, %354 : vector<16x8xf32>
    %c1_282 = arith.constant 1 : index
    %c2_283 = arith.constant 2 : index
    %c0_284 = arith.constant 0 : index
    %c0_285 = arith.constant 0 : index
    %356 = vector.load %arg7[%c1_282, %c2_283, %c0_284, %c0_285] : memref<2x4x32x8xf32, #tpu.memory_space<vmem>>, vector<1x1x32x8xf32>
    %357 = vector.shape_cast %356 : vector<1x1x32x8xf32> to vector<32x8xf32>
    %cst_286 = arith.constant dense<0.000000e+00> : vector<16x8xf32>
    %358 = tpu.matmul %269, %357, %cst_286 {dimension_numbers = #tpu.dot_dimension_numbers<[1], [0], [0], [1], [0, 0, 1, 1], [], []>} : vector<16x32xf32>, vector<32x8xf32>, vector<16x8xf32> -> vector<16x8xf32>
    %c1_287 = arith.constant 1 : index
    %c2_288 = arith.constant 2 : index
    %c0_289 = arith.constant 0 : index
    %c0_290 = arith.constant 0 : index
    %359 = vector.load %arg8[%c1_287, %c2_288, %c0_289, %c0_290] : memref<2x4x1x8xf32, #tpu.memory_space<vmem>>, vector<1x1x1x8xf32>
    %360 = vector.shape_cast %359 : vector<1x1x1x8xf32> to vector<1x8xf32>
    %361 = vector.broadcast %360 : vector<1x8xf32> to vector<16x8xf32>
    %362 = arith.addf %358, %361 : vector<16x8xf32>
    %c1_291 = arith.constant 1 : index
    %c2_292 = arith.constant 2 : index
    %c0_293 = arith.constant 0 : index
    %c0_294 = arith.constant 0 : index
    %363 = vector.load %arg9[%c1_291, %c2_292, %c0_293, %c0_294] : memref<2x4x32x8xf32, #tpu.memory_space<vmem>>, vector<1x1x32x8xf32>
    %364 = vector.shape_cast %363 : vector<1x1x32x8xf32> to vector<32x8xf32>
    %cst_295 = arith.constant dense<0.000000e+00> : vector<16x8xf32>
    %365 = tpu.matmul %269, %364, %cst_295 {dimension_numbers = #tpu.dot_dimension_numbers<[1], [0], [0], [1], [0, 0, 1, 1], [], []>} : vector<16x32xf32>, vector<32x8xf32>, vector<16x8xf32> -> vector<16x8xf32>
    %c1_296 = arith.constant 1 : index
    %c2_297 = arith.constant 2 : index
    %c0_298 = arith.constant 0 : index
    %c0_299 = arith.constant 0 : index
    %366 = vector.load %arg10[%c1_296, %c2_297, %c0_298, %c0_299] : memref<2x4x1x8xf32, #tpu.memory_space<vmem>>, vector<1x1x1x8xf32>
    %367 = vector.shape_cast %366 : vector<1x1x1x8xf32> to vector<1x8xf32>
    %368 = vector.broadcast %367 : vector<1x8xf32> to vector<16x8xf32>
    %369 = arith.addf %365, %368 : vector<16x8xf32>
    %cst_300 = arith.constant dense<0.000000e+00> : vector<16x16xf32>
    %370 = tpu.matmul %355, %362, %cst_300 {dimension_numbers = #tpu.dot_dimension_numbers<[1], [1], [0], [0], [0, 0, 1, 0], [], []>} : vector<16x8xf32>, vector<16x8xf32>, vector<16x16xf32> -> vector<16x16xf32>
    %cst_301 = arith.constant 0.353553385 : f32
    %371 = vector.broadcast %cst_301 : f32 to vector<16x16xf32>
    %372 = arith.mulf %370, %371 : vector<16x16xf32>
    %373 = arith.addf %372, %25 : vector<16x16xf32>
    %cst_302 = arith.constant dense<0xFF800000> : vector<16xf32>
    %374 = vector.multi_reduction <maximumf>, %373, %cst_302 [1] : vector<16x16xf32> to vector<16xf32>
    %375 = vector.shape_cast %374 : vector<16xf32> to vector<16x1xf32>
    %376 = vector.broadcast %375 : vector<16x1xf32> to vector<16x16xf32>
    %377 = arith.subf %373, %376 : vector<16x16xf32>
    %378 = math.exp %377 : vector<16x16xf32>
    %cst_303 = arith.constant dense<0.000000e+00> : vector<16xf32>
    %379 = vector.multi_reduction <add>, %378, %cst_303 [1] : vector<16x16xf32> to vector<16xf32>
    %380 = vector.shape_cast %379 : vector<16xf32> to vector<16x1xf32>
    %381 = tpu.reciprocal %380 {approx = true} : vector<16x1xf32> -> vector<16x1xf32>
    %382 = vector.broadcast %381 : vector<16x1xf32> to vector<16x16xf32>
    %383 = arith.mulf %378, %382 : vector<16x16xf32>
    %cst_304 = arith.constant dense<0.000000e+00> : vector<16x8xf32>
    %384 = tpu.matmul %383, %369, %cst_304 {dimension_numbers = #tpu.dot_dimension_numbers<[1], [0], [0], [1], [0, 0, 1, 1], [], []>} : vector<16x16xf32>, vector<16x8xf32>, vector<16x8xf32> -> vector<16x8xf32>
    %c1_305 = arith.constant 1 : index
    %c2_306 = arith.constant 2 : index
    %c0_307 = arith.constant 0 : index
    %c0_308 = arith.constant 0 : index
    %385 = vector.load %arg11[%c1_305, %c2_306, %c0_307, %c0_308] : memref<2x4x8x32xf32, #tpu.memory_space<vmem>>, vector<1x1x8x32xf32>
    %386 = vector.shape_cast %385 : vector<1x1x8x32xf32> to vector<8x32xf32>
    %cst_309 = arith.constant dense<0.000000e+00> : vector<16x32xf32>
    %387 = tpu.matmul %384, %386, %cst_309 {dimension_numbers = #tpu.dot_dimension_numbers<[1], [0], [0], [1], [0, 0, 1, 1], [], []>} : vector<16x8xf32>, vector<8x32xf32>, vector<16x32xf32> -> vector<16x32xf32>
    %388 = arith.addf %348, %387 : vector<16x32xf32>
    %c1_310 = arith.constant 1 : index
    %c3_311 = arith.constant 3 : index
    %c0_312 = arith.constant 0 : index
    %c0_313 = arith.constant 0 : index
    %389 = vector.load %arg5[%c1_310, %c3_311, %c0_312, %c0_313] : memref<2x4x32x8xf32, #tpu.memory_space<vmem>>, vector<1x1x32x8xf32>
    %390 = vector.shape_cast %389 : vector<1x1x32x8xf32> to vector<32x8xf32>
    %cst_314 = arith.constant dense<0.000000e+00> : vector<16x8xf32>
    %391 = tpu.matmul %269, %390, %cst_314 {dimension_numbers = #tpu.dot_dimension_numbers<[1], [0], [0], [1], [0, 0, 1, 1], [], []>} : vector<16x32xf32>, vector<32x8xf32>, vector<16x8xf32> -> vector<16x8xf32>
    %c1_315 = arith.constant 1 : index
    %c3_316 = arith.constant 3 : index
    %c0_317 = arith.constant 0 : index
    %c0_318 = arith.constant 0 : index
    %392 = vector.load %arg6[%c1_315, %c3_316, %c0_317, %c0_318] : memref<2x4x1x8xf32, #tpu.memory_space<vmem>>, vector<1x1x1x8xf32>
    %393 = vector.shape_cast %392 : vector<1x1x1x8xf32> to vector<1x8xf32>
    %394 = vector.broadcast %393 : vector<1x8xf32> to vector<16x8xf32>
    %395 = arith.addf %391, %394 : vector<16x8xf32>
    %c1_319 = arith.constant 1 : index
    %c3_320 = arith.constant 3 : index
    %c0_321 = arith.constant 0 : index
    %c0_322 = arith.constant 0 : index
    %396 = vector.load %arg7[%c1_319, %c3_320, %c0_321, %c0_322] : memref<2x4x32x8xf32, #tpu.memory_space<vmem>>, vector<1x1x32x8xf32>
    %397 = vector.shape_cast %396 : vector<1x1x32x8xf32> to vector<32x8xf32>
    %cst_323 = arith.constant dense<0.000000e+00> : vector<16x8xf32>
    %398 = tpu.matmul %269, %397, %cst_323 {dimension_numbers = #tpu.dot_dimension_numbers<[1], [0], [0], [1], [0, 0, 1, 1], [], []>} : vector<16x32xf32>, vector<32x8xf32>, vector<16x8xf32> -> vector<16x8xf32>
    %c1_324 = arith.constant 1 : index
    %c3_325 = arith.constant 3 : index
    %c0_326 = arith.constant 0 : index
    %c0_327 = arith.constant 0 : index
    %399 = vector.load %arg8[%c1_324, %c3_325, %c0_326, %c0_327] : memref<2x4x1x8xf32, #tpu.memory_space<vmem>>, vector<1x1x1x8xf32>
    %400 = vector.shape_cast %399 : vector<1x1x1x8xf32> to vector<1x8xf32>
    %401 = vector.broadcast %400 : vector<1x8xf32> to vector<16x8xf32>
    %402 = arith.addf %398, %401 : vector<16x8xf32>
    %c1_328 = arith.constant 1 : index
    %c3_329 = arith.constant 3 : index
    %c0_330 = arith.constant 0 : index
    %c0_331 = arith.constant 0 : index
    %403 = vector.load %arg9[%c1_328, %c3_329, %c0_330, %c0_331] : memref<2x4x32x8xf32, #tpu.memory_space<vmem>>, vector<1x1x32x8xf32>
    %404 = vector.shape_cast %403 : vector<1x1x32x8xf32> to vector<32x8xf32>
    %cst_332 = arith.constant dense<0.000000e+00> : vector<16x8xf32>
    %405 = tpu.matmul %269, %404, %cst_332 {dimension_numbers = #tpu.dot_dimension_numbers<[1], [0], [0], [1], [0, 0, 1, 1], [], []>} : vector<16x32xf32>, vector<32x8xf32>, vector<16x8xf32> -> vector<16x8xf32>
    %c1_333 = arith.constant 1 : index
    %c3_334 = arith.constant 3 : index
    %c0_335 = arith.constant 0 : index
    %c0_336 = arith.constant 0 : index
    %406 = vector.load %arg10[%c1_333, %c3_334, %c0_335, %c0_336] : memref<2x4x1x8xf32, #tpu.memory_space<vmem>>, vector<1x1x1x8xf32>
    %407 = vector.shape_cast %406 : vector<1x1x1x8xf32> to vector<1x8xf32>
    %408 = vector.broadcast %407 : vector<1x8xf32> to vector<16x8xf32>
    %409 = arith.addf %405, %408 : vector<16x8xf32>
    %cst_337 = arith.constant dense<0.000000e+00> : vector<16x16xf32>
    %410 = tpu.matmul %395, %402, %cst_337 {dimension_numbers = #tpu.dot_dimension_numbers<[1], [1], [0], [0], [0, 0, 1, 0], [], []>} : vector<16x8xf32>, vector<16x8xf32>, vector<16x16xf32> -> vector<16x16xf32>
    %cst_338 = arith.constant 0.353553385 : f32
    %411 = vector.broadcast %cst_338 : f32 to vector<16x16xf32>
    %412 = arith.mulf %410, %411 : vector<16x16xf32>
    %413 = arith.addf %412, %25 : vector<16x16xf32>
    %cst_339 = arith.constant dense<0xFF800000> : vector<16xf32>
    %414 = vector.multi_reduction <maximumf>, %413, %cst_339 [1] : vector<16x16xf32> to vector<16xf32>
    %415 = vector.shape_cast %414 : vector<16xf32> to vector<16x1xf32>
    %416 = vector.broadcast %415 : vector<16x1xf32> to vector<16x16xf32>
    %417 = arith.subf %413, %416 : vector<16x16xf32>
    %418 = math.exp %417 : vector<16x16xf32>
    %cst_340 = arith.constant dense<0.000000e+00> : vector<16xf32>
    %419 = vector.multi_reduction <add>, %418, %cst_340 [1] : vector<16x16xf32> to vector<16xf32>
    %420 = vector.shape_cast %419 : vector<16xf32> to vector<16x1xf32>
    %421 = tpu.reciprocal %420 {approx = true} : vector<16x1xf32> -> vector<16x1xf32>
    %422 = vector.broadcast %421 : vector<16x1xf32> to vector<16x16xf32>
    %423 = arith.mulf %418, %422 : vector<16x16xf32>
    %cst_341 = arith.constant dense<0.000000e+00> : vector<16x8xf32>
    %424 = tpu.matmul %423, %409, %cst_341 {dimension_numbers = #tpu.dot_dimension_numbers<[1], [0], [0], [1], [0, 0, 1, 1], [], []>} : vector<16x16xf32>, vector<16x8xf32>, vector<16x8xf32> -> vector<16x8xf32>
    %c1_342 = arith.constant 1 : index
    %c3_343 = arith.constant 3 : index
    %c0_344 = arith.constant 0 : index
    %c0_345 = arith.constant 0 : index
    %425 = vector.load %arg11[%c1_342, %c3_343, %c0_344, %c0_345] : memref<2x4x8x32xf32, #tpu.memory_space<vmem>>, vector<1x1x8x32xf32>
    %426 = vector.shape_cast %425 : vector<1x1x8x32xf32> to vector<8x32xf32>
    %cst_346 = arith.constant dense<0.000000e+00> : vector<16x32xf32>
    %427 = tpu.matmul %424, %426, %cst_346 {dimension_numbers = #tpu.dot_dimension_numbers<[1], [0], [0], [1], [0, 0, 1, 1], [], []>} : vector<16x8xf32>, vector<8x32xf32>, vector<16x32xf32> -> vector<16x32xf32>
    %428 = arith.addf %388, %427 : vector<16x32xf32>
    %c1_347 = arith.constant 1 : index
    %c0_348 = arith.constant 0 : index
    %c0_349 = arith.constant 0 : index
    %429 = vector.load %arg12[%c1_347, %c0_348, %c0_349] : memref<2x1x32xf32, #tpu.memory_space<vmem>>, vector<1x1x32xf32>
    %430 = vector.shape_cast %429 : vector<1x1x32xf32> to vector<1x32xf32>
    %431 = vector.broadcast %430 : vector<1x32xf32> to vector<16x32xf32>
    %432 = arith.addf %428, %431 : vector<16x32xf32>
    %433 = arith.addf %269, %432 : vector<16x32xf32>
    %c1_350 = arith.constant 1 : index
    %c0_351 = arith.constant 0 : index
    %c0_352 = arith.constant 0 : index
    %434 = vector.load %arg13[%c1_350, %c0_351, %c0_352] : memref<2x1x32xf32, #tpu.memory_space<vmem>>, vector<1x1x32xf32>
    %435 = vector.shape_cast %434 : vector<1x1x32xf32> to vector<1x32xf32>
    %c1_353 = arith.constant 1 : index
    %c0_354 = arith.constant 0 : index
    %c0_355 = arith.constant 0 : index
    %436 = vector.load %arg14[%c1_353, %c0_354, %c0_355] : memref<2x1x32xf32, #tpu.memory_space<vmem>>, vector<1x1x32xf32>
    %437 = vector.shape_cast %436 : vector<1x1x32xf32> to vector<1x32xf32>
    %cst_356 = arith.constant dense<0.000000e+00> : vector<16xf32>
    %438 = vector.multi_reduction <add>, %433, %cst_356 [1] : vector<16x32xf32> to vector<16xf32>
    %439 = vector.shape_cast %438 : vector<16xf32> to vector<16x1xf32>
    %cst_357 = arith.constant 3.200000e+01 : f32
    %440 = vector.broadcast %cst_357 : f32 to vector<16x1xf32>
    %441 = arith.divf %439, %440 : vector<16x1xf32>
    %442 = vector.broadcast %441 : vector<16x1xf32> to vector<16x32xf32>
    %443 = arith.subf %433, %442 : vector<16x32xf32>
    %444 = arith.mulf %443, %443 : vector<16x32xf32>
    %cst_358 = arith.constant dense<0.000000e+00> : vector<16xf32>
    %445 = vector.multi_reduction <add>, %444, %cst_358 [1] : vector<16x32xf32> to vector<16xf32>
    %446 = vector.shape_cast %445 : vector<16xf32> to vector<16x1xf32>
    %cst_359 = arith.constant 3.200000e+01 : f32
    %447 = vector.broadcast %cst_359 : f32 to vector<16x1xf32>
    %448 = arith.divf %446, %447 : vector<16x1xf32>
    %449 = vector.broadcast %441 : vector<16x1xf32> to vector<16x32xf32>
    %450 = arith.subf %433, %449 : vector<16x32xf32>
    %cst_360 = arith.constant 9.99999996E-13 : f32
    %451 = vector.broadcast %cst_360 : f32 to vector<16x1xf32>
    %452 = arith.addf %448, %451 : vector<16x1xf32>
    %453 = math.rsqrt %452 : vector<16x1xf32>
    %454 = vector.broadcast %453 : vector<16x1xf32> to vector<16x32xf32>
    %455 = arith.mulf %450, %454 : vector<16x32xf32>
    %456 = vector.broadcast %435 : vector<1x32xf32> to vector<16x32xf32>
    %457 = arith.mulf %455, %456 : vector<16x32xf32>
    %458 = vector.broadcast %437 : vector<1x32xf32> to vector<16x32xf32>
    %459 = arith.addf %457, %458 : vector<16x32xf32>
    %c1_361 = arith.constant 1 : index
    %c0_362 = arith.constant 0 : index
    %c0_363 = arith.constant 0 : index
    %460 = vector.load %arg15[%c1_361, %c0_362, %c0_363] : memref<2x32x64xf32, #tpu.memory_space<vmem>>, vector<1x32x64xf32>
    %461 = vector.shape_cast %460 : vector<1x32x64xf32> to vector<32x64xf32>
    %cst_364 = arith.constant dense<0.000000e+00> : vector<16x64xf32>
    %462 = tpu.matmul %459, %461, %cst_364 {dimension_numbers = #tpu.dot_dimension_numbers<[1], [0], [0], [1], [0, 0, 1, 1], [], []>} : vector<16x32xf32>, vector<32x64xf32>, vector<16x64xf32> -> vector<16x64xf32>
    %c1_365 = arith.constant 1 : index
    %c0_366 = arith.constant 0 : index
    %c0_367 = arith.constant 0 : index
    %463 = vector.load %arg16[%c1_365, %c0_366, %c0_367] : memref<2x1x64xf32, #tpu.memory_space<vmem>>, vector<1x1x64xf32>
    %464 = vector.shape_cast %463 : vector<1x1x64xf32> to vector<1x64xf32>
    %465 = vector.broadcast %464 : vector<1x64xf32> to vector<16x64xf32>
    %466 = arith.addf %462, %465 : vector<16x64xf32>
    %cst_368 = arith.constant 5.000000e-01 : f32
    %467 = vector.broadcast %cst_368 : f32 to vector<16x64xf32>
    %468 = arith.mulf %467, %466 : vector<16x64xf32>
    %469 = arith.mulf %466, %466 : vector<16x64xf32>
    %470 = arith.mulf %466, %469 : vector<16x64xf32>
    %cst_369 = arith.constant 4.471500e-02 : f32
    %471 = vector.broadcast %cst_369 : f32 to vector<16x64xf32>
    %472 = arith.mulf %471, %470 : vector<16x64xf32>
    %473 = arith.addf %466, %472 : vector<16x64xf32>
    %cst_370 = arith.constant 0.797884583 : f32
    %474 = vector.broadcast %cst_370 : f32 to vector<16x64xf32>
    %475 = arith.mulf %474, %473 : vector<16x64xf32>
    %476 = math.tanh %475 : vector<16x64xf32>
    %cst_371 = arith.constant 1.000000e+00 : f32
    %477 = vector.broadcast %cst_371 : f32 to vector<16x64xf32>
    %478 = arith.addf %477, %476 : vector<16x64xf32>
    %479 = arith.mulf %468, %478 : vector<16x64xf32>
    %c1_372 = arith.constant 1 : index
    %c0_373 = arith.constant 0 : index
    %c0_374 = arith.constant 0 : index
    %480 = vector.load %arg17[%c1_372, %c0_373, %c0_374] : memref<2x64x32xf32, #tpu.memory_space<vmem>>, vector<1x64x32xf32>
    %481 = vector.shape_cast %480 : vector<1x64x32xf32> to vector<64x32xf32>
    %cst_375 = arith.constant dense<0.000000e+00> : vector<16x32xf32>
    %482 = tpu.matmul %479, %481, %cst_375 {dimension_numbers = #tpu.dot_dimension_numbers<[1], [0], [0], [1], [0, 0, 1, 1], [], []>} : vector<16x64xf32>, vector<64x32xf32>, vector<16x32xf32> -> vector<16x32xf32>
    %c1_376 = arith.constant 1 : index
    %c0_377 = arith.constant 0 : index
    %c0_378 = arith.constant 0 : index
    %483 = vector.load %arg18[%c1_376, %c0_377, %c0_378] : memref<2x1x32xf32, #tpu.memory_space<vmem>>, vector<1x1x32xf32>
    %484 = vector.shape_cast %483 : vector<1x1x32xf32> to vector<1x32xf32>
    %485 = vector.broadcast %484 : vector<1x32xf32> to vector<16x32xf32>
    %486 = arith.addf %482, %485 : vector<16x32xf32>
    %487 = arith.addf %459, %486 : vector<16x32xf32>
    %c1_379 = arith.constant 1 : index
    %c0_380 = arith.constant 0 : index
    %c0_381 = arith.constant 0 : index
    %488 = vector.load %arg19[%c1_379, %c0_380, %c0_381] : memref<2x1x32xf32, #tpu.memory_space<vmem>>, vector<1x1x32xf32>
    %489 = vector.shape_cast %488 : vector<1x1x32xf32> to vector<1x32xf32>
    %c1_382 = arith.constant 1 : index
    %c0_383 = arith.constant 0 : index
    %c0_384 = arith.constant 0 : index
    %490 = vector.load %arg20[%c1_382, %c0_383, %c0_384] : memref<2x1x32xf32, #tpu.memory_space<vmem>>, vector<1x1x32xf32>
    %491 = vector.shape_cast %490 : vector<1x1x32xf32> to vector<1x32xf32>
    %cst_385 = arith.constant dense<0.000000e+00> : vector<16xf32>
    %492 = vector.multi_reduction <add>, %487, %cst_385 [1] : vector<16x32xf32> to vector<16xf32>
    %493 = vector.shape_cast %492 : vector<16xf32> to vector<16x1xf32>
    %cst_386 = arith.constant 3.200000e+01 : f32
    %494 = vector.broadcast %cst_386 : f32 to vector<16x1xf32>
    %495 = arith.divf %493, %494 : vector<16x1xf32>
    %496 = vector.broadcast %495 : vector<16x1xf32> to vector<16x32xf32>
    %497 = arith.subf %487, %496 : vector<16x32xf32>
    %498 = arith.mulf %497, %497 : vector<16x32xf32>
    %cst_387 = arith.constant dense<0.000000e+00> : vector<16xf32>
    %499 = vector.multi_reduction <add>, %498, %cst_387 [1] : vector<16x32xf32> to vector<16xf32>
    %500 = vector.shape_cast %499 : vector<16xf32> to vector<16x1xf32>
    %cst_388 = arith.constant 3.200000e+01 : f32
    %501 = vector.broadcast %cst_388 : f32 to vector<16x1xf32>
    %502 = arith.divf %500, %501 : vector<16x1xf32>
    %503 = vector.broadcast %495 : vector<16x1xf32> to vector<16x32xf32>
    %504 = arith.subf %487, %503 : vector<16x32xf32>
    %cst_389 = arith.constant 9.99999996E-13 : f32
    %505 = vector.broadcast %cst_389 : f32 to vector<16x1xf32>
    %506 = arith.addf %502, %505 : vector<16x1xf32>
    %507 = math.rsqrt %506 : vector<16x1xf32>
    %508 = vector.broadcast %507 : vector<16x1xf32> to vector<16x32xf32>
    %509 = arith.mulf %504, %508 : vector<16x32xf32>
    %510 = vector.broadcast %489 : vector<1x32xf32> to vector<16x32xf32>
    %511 = arith.mulf %509, %510 : vector<16x32xf32>
    %512 = vector.broadcast %491 : vector<1x32xf32> to vector<16x32xf32>
    %513 = arith.addf %511, %512 : vector<16x32xf32>
    %514 = vector.extract_strided_slice %513 {offsets = [0, 0], sizes = [2, 32], strides = [1, 1]} : vector<16x32xf32> to vector<2x32xf32>
    %515 = vector.extract_strided_slice %513 {offsets = [8, 0], sizes = [2, 32], strides = [1, 1]} : vector<16x32xf32> to vector<2x32xf32>
    %516 = tpu.concatenate %514, %515 in 0 : vector<2x32xf32>, vector<2x32xf32> -> vector<4x32xf32>
    %c0_390 = arith.constant 0 : index
    %c0_391 = arith.constant 0 : index
    %517 = vector.load %arg21[%c0_390, %c0_391] : memref<32x128xf32, #tpu.memory_space<vmem>>, vector<32x128xf32>
    %cst_392 = arith.constant dense<0.000000e+00> : vector<4x128xf32>
    %518 = tpu.matmul %516, %517, %cst_392 {dimension_numbers = #tpu.dot_dimension_numbers<[1], [0], [0], [1], [0, 0, 1, 1], [], []>} : vector<4x32xf32>, vector<32x128xf32>, vector<4x128xf32> -> vector<4x128xf32>
    %c0_393 = arith.constant 0 : index
    %c0_394 = arith.constant 0 : index
    %519 = vector.load %arg22[%c0_393, %c0_394] : memref<1x128xf32, #tpu.memory_space<vmem>>, vector<1x128xf32>
    %520 = vector.broadcast %519 : vector<1x128xf32> to vector<4x128xf32>
    %521 = arith.addf %518, %520 : vector<4x128xf32>
    %522 = tpu.iota {dimensions = array<i32: 1>} : vector<1x128xi32>
    %523 = vector.extract_strided_slice %521 {offsets = [0, 0], sizes = [1, 128], strides = [1, 1]} : vector<4x128xf32> to vector<1x128xf32>
    %cst_395 = arith.constant 0.000000e+00 : f32
    %524 = vector.broadcast %cst_395 : f32 to vector<1x128xf32>
    %525 = arith.subf %524, %523 : vector<1x128xf32>
    %526 = math.exp %525 : vector<1x128xf32>
    %cst_396 = arith.constant 1.000000e+00 : f32
    %527 = vector.broadcast %cst_396 : f32 to vector<1x128xf32>
    %528 = arith.addf %527, %526 : vector<1x128xf32>
    %529 = tpu.reciprocal %528 {approx = true} : vector<1x128xf32> -> vector<1x128xf32>
    %530 = vector.extract_strided_slice %521 {offsets = [1, 0], sizes = [1, 128], strides = [1, 1]} : vector<4x128xf32> to vector<1x128xf32>
    %c0_i32 = arith.constant 0 : i32
    %531 = vector.broadcast %c0_i32 : i32 to vector<1x128xi32>
    %532 = arith.cmpi eq, %522, %531 : vector<1x128xi32>
    %533 = arith.select %532, %529, %530 : vector<1x128xi1>, vector<1x128xf32>
    %534 = vector.extract_strided_slice %521 {offsets = [2, 0], sizes = [1, 128], strides = [1, 1]} : vector<4x128xf32> to vector<1x128xf32>
    %cst_397 = arith.constant 0.000000e+00 : f32
    %535 = vector.broadcast %cst_397 : f32 to vector<1x128xf32>
    %536 = arith.subf %535, %534 : vector<1x128xf32>
    %537 = math.exp %536 : vector<1x128xf32>
    %cst_398 = arith.constant 1.000000e+00 : f32
    %538 = vector.broadcast %cst_398 : f32 to vector<1x128xf32>
    %539 = arith.addf %538, %537 : vector<1x128xf32>
    %540 = tpu.reciprocal %539 {approx = true} : vector<1x128xf32> -> vector<1x128xf32>
    %541 = vector.extract_strided_slice %521 {offsets = [3, 0], sizes = [1, 128], strides = [1, 1]} : vector<4x128xf32> to vector<1x128xf32>
    %c0_i32_399 = arith.constant 0 : i32
    %542 = vector.broadcast %c0_i32_399 : i32 to vector<1x128xi32>
    %543 = arith.cmpi eq, %522, %542 : vector<1x128xi32>
    %544 = arith.select %543, %540, %541 : vector<1x128xi1>, vector<1x128xf32>
    %545 = tpu.concatenate %533, %544 in 0 : vector<1x128xf32>, vector<1x128xf32> -> vector<2x128xf32>
    %c0_400 = arith.constant 0 : index
    %c0_401 = arith.constant 0 : index
    %546 = vector.load %arg23[%c0_400, %c0_401] : memref<2x128xf32, #tpu.memory_space<vmem>>, vector<2x128xf32>
    tpu.vector_store %arg23[%c0_400, %c0_401], %545 {strides = array<i32>} : memref<2x128xf32, #tpu.memory_space<vmem>>, vector<2x128xf32>,
    return
  }
  func.func @transform_0(%arg0: i32) -> (i32, i32) {
    %c0_i32 = arith.constant 0 : i32
    %c0_i32_0 = arith.constant 0 : i32
    %c0_i32_1 = arith.constant 0 : i32
    return %c0_i32, %c0_i32_0 : i32, i32
  }
  func.func @transform_1(%arg0: i32) -> (i32, i32) {
    %c0_i32 = arith.constant 0 : i32
    %c0_i32_0 = arith.constant 0 : i32
    %c0_i32_1 = arith.constant 0 : i32
    return %c0_i32, %c0_i32_0 : i32, i32
  }
  func.func @transform_2(%arg0: i32) -> (i32, i32) {
    %c0_i32 = arith.constant 0 : i32
    %c0_i32_0 = arith.constant 0 : i32
    %c0_i32_1 = arith.constant 0 : i32
    return %c0_i32, %c0_i32_0 : i32, i32
  }
  func.func @transform_3(%arg0: i32) -> (i32, i32) {
    %c0_i32 = arith.constant 0 : i32
    %c0_i32_0 = arith.constant 0 : i32
    %c0_i32_1 = arith.constant 0 : i32
    return %c0_i32, %c0_i32_0 : i32, i32
  }
  func.func @transform_4(%arg0: i32) -> (i32, i32, i32, i32) {
    %c0_i32 = arith.constant 0 : i32
    %c0_i32_0 = arith.constant 0 : i32
    %c0_i32_1 = arith.constant 0 : i32
    %c0_i32_2 = arith.constant 0 : i32
    %c0_i32_3 = arith.constant 0 : i32
    return %c0_i32, %c0_i32_0, %c0_i32_1, %c0_i32_2 : i32, i32, i32, i32
  }
  func.func @transform_5(%arg0: i32) -> (i32, i32, i32, i32) {
    %c0_i32 = arith.constant 0 : i32
    %c0_i32_0 = arith.constant 0 : i32
    %c0_i32_1 = arith.constant 0 : i32
    %c0_i32_2 = arith.constant 0 : i32
    %c0_i32_3 = arith.constant 0 : i32
    return %c0_i32, %c0_i32_0, %c0_i32_1, %c0_i32_2 : i32, i32, i32, i32
  }
  func.func @transform_6(%arg0: i32) -> (i32, i32, i32, i32) {
    %c0_i32 = arith.constant 0 : i32
    %c0_i32_0 = arith.constant 0 : i32
    %c0_i32_1 = arith.constant 0 : i32
    %c0_i32_2 = arith.constant 0 : i32
    %c0_i32_3 = arith.constant 0 : i32
    return %c0_i32, %c0_i32_0, %c0_i32_1, %c0_i32_2 : i32, i32, i32, i32
  }
  func.func @transform_7(%arg0: i32) -> (i32, i32, i32, i32) {
    %c0_i32 = arith.constant 0 : i32
    %c0_i32_0 = arith.constant 0 : i32
    %c0_i32_1 = arith.constant 0 : i32
    %c0_i32_2 = arith.constant 0 : i32
    %c0_i32_3 = arith.constant 0 : i32
    return %c0_i32, %c0_i32_0, %c0_i32_1, %c0_i32_2 : i32, i32, i32, i32
  }
  func.func @transform_8(%arg0: i32) -> (i32, i32, i32, i32) {
    %c0_i32 = arith.constant 0 : i32
    %c0_i32_0 = arith.constant 0 : i32
    %c0_i32_1 = arith.constant 0 : i32
    %c0_i32_2 = arith.constant 0 : i32
    %c0_i32_3 = arith.constant 0 : i32
    return %c0_i32, %c0_i32_0, %c0_i32_1, %c0_i32_2 : i32, i32, i32, i32
  }
  func.func @transform_9(%arg0: i32) -> (i32, i32, i32, i32) {
    %c0_i32 = arith.constant 0 : i32
    %c0_i32_0 = arith.constant 0 : i32
    %c0_i32_1 = arith.constant 0 : i32
    %c0_i32_2 = arith.constant 0 : i32
    %c0_i32_3 = arith.constant 0 : i32
    return %c0_i32, %c0_i32_0, %c0_i32_1, %c0_i32_2 : i32, i32, i32, i32
  }
  func.func @transform_10(%arg0: i32) -> (i32, i32, i32, i32) {
    %c0_i32 = arith.constant 0 : i32
    %c0_i32_0 = arith.constant 0 : i32
    %c0_i32_1 = arith.constant 0 : i32
    %c0_i32_2 = arith.constant 0 : i32
    %c0_i32_3 = arith.constant 0 : i32
    return %c0_i32, %c0_i32_0, %c0_i32_1, %c0_i32_2 : i32, i32, i32, i32
  }
  func.func @transform_11(%arg0: i32) -> (i32, i32, i32) {
    %c0_i32 = arith.constant 0 : i32
    %c0_i32_0 = arith.constant 0 : i32
    %c0_i32_1 = arith.constant 0 : i32
    %c0_i32_2 = arith.constant 0 : i32
    return %c0_i32, %c0_i32_0, %c0_i32_1 : i32, i32, i32
  }
  func.func @transform_12(%arg0: i32) -> (i32, i32, i32) {
    %c0_i32 = arith.constant 0 : i32
    %c0_i32_0 = arith.constant 0 : i32
    %c0_i32_1 = arith.constant 0 : i32
    %c0_i32_2 = arith.constant 0 : i32
    return %c0_i32, %c0_i32_0, %c0_i32_1 : i32, i32, i32
  }
  func.func @transform_13(%arg0: i32) -> (i32, i32, i32) {
    %c0_i32 = arith.constant 0 : i32
    %c0_i32_0 = arith.constant 0 : i32
    %c0_i32_1 = arith.constant 0 : i32
    %c0_i32_2 = arith.constant 0 : i32
    return %c0_i32, %c0_i32_0, %c0_i32_1 : i32, i32, i32
  }
  func.func @transform_14(%arg0: i32) -> (i32, i32, i32) {
    %c0_i32 = arith.constant 0 : i32
    %c0_i32_0 = arith.constant 0 : i32
    %c0_i32_1 = arith.constant 0 : i32
    %c0_i32_2 = arith.constant 0 : i32
    return %c0_i32, %c0_i32_0, %c0_i32_1 : i32, i32, i32
  }
  func.func @transform_15(%arg0: i32) -> (i32, i32, i32) {
    %c0_i32 = arith.constant 0 : i32
    %c0_i32_0 = arith.constant 0 : i32
    %c0_i32_1 = arith.constant 0 : i32
    %c0_i32_2 = arith.constant 0 : i32
    return %c0_i32, %c0_i32_0, %c0_i32_1 : i32, i32, i32
  }
  func.func @transform_16(%arg0: i32) -> (i32, i32, i32) {
    %c0_i32 = arith.constant 0 : i32
    %c0_i32_0 = arith.constant 0 : i32
    %c0_i32_1 = arith.constant 0 : i32
    %c0_i32_2 = arith.constant 0 : i32
    return %c0_i32, %c0_i32_0, %c0_i32_1 : i32, i32, i32
  }
  func.func @transform_17(%arg0: i32) -> (i32, i32, i32) {
    %c0_i32 = arith.constant 0 : i32
    %c0_i32_0 = arith.constant 0 : i32
    %c0_i32_1 = arith.constant 0 : i32
    %c0_i32_2 = arith.constant 0 : i32
    return %c0_i32, %c0_i32_0, %c0_i32_1 : i32, i32, i32
  }
  func.func @transform_18(%arg0: i32) -> (i32, i32, i32) {
    %c0_i32 = arith.constant 0 : i32
    %c0_i32_0 = arith.constant 0 : i32
    %c0_i32_1 = arith.constant 0 : i32
    %c0_i32_2 = arith.constant 0 : i32
    return %c0_i32, %c0_i32_0, %c0_i32_1 : i32, i32, i32
  }
  func.func @transform_19(%arg0: i32) -> (i32, i32, i32) {
    %c0_i32 = arith.constant 0 : i32
    %c0_i32_0 = arith.constant 0 : i32
    %c0_i32_1 = arith.constant 0 : i32
    %c0_i32_2 = arith.constant 0 : i32
    return %c0_i32, %c0_i32_0, %c0_i32_1 : i32, i32, i32
  }
  func.func @transform_20(%arg0: i32) -> (i32, i32) {
    %c0_i32 = arith.constant 0 : i32
    %c0_i32_0 = arith.constant 0 : i32
    %c0_i32_1 = arith.constant 0 : i32
    return %c0_i32, %c0_i32_0 : i32, i32
  }
  func.func @transform_21(%arg0: i32) -> (i32, i32) {
    %c0_i32 = arith.constant 0 : i32
    %c0_i32_0 = arith.constant 0 : i32
    %c0_i32_1 = arith.constant 0 : i32
    return %c0_i32, %c0_i32_0 : i32, i32
  }
  func.func @transform_22(%arg0: i32) -> (i32, i32) {
    %c0_i32 = arith.constant 0 : i32
    %c0_i32_0 = arith.constant 0 : i32
    %c0_i32_1 = arith.constant 0 : i32
    return %c0_i32, %c0_i32_0 : i32, i32
  }
}

</mosaic_0001>

<llo_original>
// kernel: forward.1
$region0: #{forward.1}
  #allocation0 [shape = 'u32[]', space=smem, size = 0x4, offset = 0x4, fixed_abs, tag = 'smem constant byte address 0x4 - core index']
  #allocation1 [shape = 'u32[72,128]{1,0:T(1,128)}', space=vmem, size = 0x9000, scoped, tag = 'internal scratch']
  %s0 = inlined_call_operand.vmem [shape: f32[16,32], index: 0, kind: input, shape index: {}]
  %s1 = inlined_call_operand.vmem [shape: f32[16,16], index: 1, kind: input, shape index: {}]
  %s2 = inlined_call_operand.vmem [shape: f32[1,32], index: 2, kind: input, shape index: {}]
  %s3 = inlined_call_operand.vmem [shape: f32[1,32], index: 3, kind: input, shape index: {}]
  %s4 = inlined_call_operand.vmem [shape: f32[2,4,32,8], index: 4, kind: input, shape index: {}]
  %s5 = inlined_call_operand.vmem [shape: f32[2,4,1,8], index: 5, kind: input, shape index: {}]
  %s6 = inlined_call_operand.vmem [shape: f32[2,4,32,8], index: 6, kind: input, shape index: {}]
  %s7 = inlined_call_operand.vmem [shape: f32[2,4,1,8], index: 7, kind: input, shape index: {}]
  %s8 = inlined_call_operand.vmem [shape: f32[2,4,32,8], index: 8, kind: input, shape index: {}]
  %s9 = inlined_call_operand.vmem [shape: f32[2,4,1,8], index: 9, kind: input, shape index: {}]
  %s10 = inlined_call_operand.vmem [shape: f32[2,4,8,32], index: 10, kind: input, shape index: {}]
  %s11 = inlined_call_operand.vmem [shape: f32[2,1,32], index: 11, kind: input, shape index: {}]
  %s12 = inlined_call_operand.vmem [shape: f32[2,1,32], index: 12, kind: input, shape index: {}]
  %s13 = inlined_call_operand.vmem [shape: f32[2,1,32], index: 13, kind: input, shape index: {}]
  %s14 = inlined_call_operand.vmem [shape: f32[2,32,64], index: 14, kind: input, shape index: {}]
  %s15 = inlined_call_operand.vmem [shape: f32[2,1,64], index: 15, kind: input, shape index: {}]
  %s16 = inlined_call_operand.vmem [shape: f32[2,64,32], index: 16, kind: input, shape index: {}]
  %s17 = inlined_call_operand.vmem [shape: f32[2,1,32], index: 17, kind: input, shape index: {}]
  %s18 = inlined_call_operand.vmem [shape: f32[2,1,32], index: 18, kind: input, shape index: {}]
  %s19 = inlined_call_operand.vmem [shape: f32[2,1,32], index: 19, kind: input, shape index: {}]
  %s20 = inlined_call_operand.vmem [shape: f32[32,128], index: 20, kind: input, shape index: {}]
  %s21 = inlined_call_operand.vmem [shape: f32[1,128], index: 21, kind: input, shape index: {}]
  %s22 = inlined_call_operand.vmem [shape: f32[2,128], index: 22, kind: output, shape index: {}]
  %s23 = sld [smem:[#allocation0]]
  $region98: #{forward.1} parent=0
    _
  %s25 = ssub.s32 1, %s23
  %s26 = scalar_select 0, %s25, %s23
  // Predicated region
  $region2: #{forward.1} parent=0 // pred_check
    _
  $region3: #{forward.1} parent=0 // pred_check_branch
    %28 = sbr.rel (0) target = $region5
  $region4: #{forward.1} parent=0 // pred_region
    _
  $region5: #{forward.1} parent=0 // pred_fallthru
    _
  // Predicated region
  $region6: #{forward.1} parent=0 // pred_check
    _
  $region7: #{forward.1} parent=0 // pred_check_branch
    %30 = sbr.rel (0) target = $region9
  $region8: #{forward.1} parent=0 // pred_region
    _
  $region9: #{forward.1} parent=0 // pred_fallthru
    _
  // Predicated region
  $region10: #{forward.1} parent=0 // pred_check
    _
  $region11: #{forward.1} parent=0 // pred_check_branch
    %32 = sbr.rel (0) target = $region13
  $region12: #{forward.1} parent=0 // pred_region
    _
  $region13: #{forward.1} parent=0 // pred_fallthru
    _
  // Predicated region
  $region14: #{forward.1} parent=0 // pred_check
    _
  $region15: #{forward.1} parent=0 // pred_check_branch
    %34 = sbr.rel (0) target = $region17
  $region16: #{forward.1} parent=0 // pred_region
    _
  $region17: #{forward.1} parent=0 // pred_fallthru
    _
  // Predicated region
  $region18: #{forward.1} parent=0 // pred_check
    _
  $region19: #{forward.1} parent=0 // pred_check_branch
    %36 = sbr.rel (0) target = $region21
  $region20: #{forward.1} parent=0 // pred_region
    _
  $region21: #{forward.1} parent=0 // pred_fallthru
    _
  // Predicated region
  $region22: #{forward.1} parent=0 // pred_check
    _
  $region23: #{forward.1} parent=0 // pred_check_branch
    %38 = sbr.rel (0) target = $region25
  $region24: #{forward.1} parent=0 // pred_region
    _
  $region25: #{forward.1} parent=0 // pred_fallthru
    _
  // Predicated region
  $region26: #{forward.1} parent=0 // pred_check
    _
  $region27: #{forward.1} parent=0 // pred_check_branch
    %40 = sbr.rel (0) target = $region29
  $region28: #{forward.1} parent=0 // pred_region
    _
  $region29: #{forward.1} parent=0 // pred_fallthru
    _
  // Predicated region
  $region30: #{forward.1} parent=0 // pred_check
    _
  $region31: #{forward.1} parent=0 // pred_check_branch
    %42 = sbr.rel (0) target = $region33
  $region32: #{forward.1} parent=0 // pred_region
    _
  $region33: #{forward.1} parent=0 // pred_fallthru
    _
  // Predicated region
  $region34: #{forward.1} parent=0 // pred_check
    _
  $region35: #{forward.1} parent=0 // pred_check_branch
    %44 = sbr.rel (0) target = $region37
  $region36: #{forward.1} parent=0 // pred_region
    _
  $region37: #{forward.1} parent=0 // pred_fallthru
    _
  // Predicated region
  $region38: #{forward.1} parent=0 // pred_check
    _
  $region39: #{forward.1} parent=0 // pred_check_branch
    %46 = sbr.rel (0) target = $region41
  $region40: #{forward.1} parent=0 // pred_region
    _
  $region41: #{forward.1} parent=0 // pred_fallthru
    _
  // Predicated region
  $region42: #{forward.1} parent=0 // pred_check
    _
  $region43: #{forward.1} parent=0 // pred_check_branch
    %48 = sbr.rel (0) target = $region45
  $region44: #{forward.1} parent=0 // pred_region
    _
  $region45: #{forward.1} parent=0 // pred_fallthru
    _
  // Predicated region
  $region46: #{forward.1} parent=0 // pred_check
    _
  $region47: #{forward.1} parent=0 // pred_check_branch
    %50 = sbr.rel (0) target = $region49
  $region48: #{forward.1} parent=0 // pred_region
    _
  $region49: #{forward.1} parent=0 // pred_fallthru
    _
  // Predicated region
  $region50: #{forward.1} parent=0 // pred_check
    _
  $region51: #{forward.1} parent=0 // pred_check_branch
    %52 = sbr.rel (0) target = $region53
  $region52: #{forward.1} parent=0 // pred_region
    _
  $region53: #{forward.1} parent=0 // pred_fallthru
    _
  // Predicated region
  $region54: #{forward.1} parent=0 // pred_check
    _
  $region55: #{forward.1} parent=0 // pred_check_branch
    %54 = sbr.rel (0) target = $region57
  $region56: #{forward.1} parent=0 // pred_region
    _
  $region57: #{forward.1} parent=0 // pred_fallthru
    _
  // Predicated region
  $region58: #{forward.1} parent=0 // pred_check
    _
  $region59: #{forward.1} parent=0 // pred_check_branch
    %56 = sbr.rel (0) target = $region61
  $region60: #{forward.1} parent=0 // pred_region
    _
  $region61: #{forward.1} parent=0 // pred_fallthru
    _
  // Predicated region
  $region62: #{forward.1} parent=0 // pred_check
    _
  $region63: #{forward.1} parent=0 // pred_check_branch
    %58 = sbr.rel (0) target = $region65
  $region64: #{forward.1} parent=0 // pred_region
    _
  $region65: #{forward.1} parent=0 // pred_fallthru
    _
  // Predicated region
  $region66: #{forward.1} parent=0 // pred_check
    _
  $region67: #{forward.1} parent=0 // pred_check_branch
    %60 = sbr.rel (0) target = $region69
  $region68: #{forward.1} parent=0 // pred_region
    _
  $region69: #{forward.1} parent=0 // pred_fallthru
    _
  // Predicated region
  $region70: #{forward.1} parent=0 // pred_check
    _
  $region71: #{forward.1} parent=0 // pred_check_branch
    %62 = sbr.rel (0) target = $region73
  $region72: #{forward.1} parent=0 // pred_region
    _
  $region73: #{forward.1} parent=0 // pred_fallthru
    _
  // Predicated region
  $region74: #{forward.1} parent=0 // pred_check
    _
  $region75: #{forward.1} parent=0 // pred_check_branch
    %64 = sbr.rel (0) target = $region77
  $region76: #{forward.1} parent=0 // pred_region
    _
  $region77: #{forward.1} parent=0 // pred_fallthru
    _
  // Predicated region
  $region78: #{forward.1} parent=0 // pred_check
    _
  $region79: #{forward.1} parent=0 // pred_check_branch
    %66 = sbr.rel (0) target = $region81
  $region80: #{forward.1} parent=0 // pred_region
    _
  $region81: #{forward.1} parent=0 // pred_fallthru
    _
  // Predicated region
  $region82: #{forward.1} parent=0 // pred_check
    _
  $region83: #{forward.1} parent=0 // pred_check_branch
    %68 = sbr.rel (0) target = $region85
  $region84: #{forward.1} parent=0 // pred_region
    _
  $region85: #{forward.1} parent=0 // pred_fallthru
    _
  // Predicated region
  $region86: #{forward.1} parent=0 // pred_check
    _
  $region87: #{forward.1} parent=0 // pred_check_branch
    %70 = sbr.rel (0) target = $region89
  $region88: #{forward.1} parent=0 // pred_region
    _
  $region89: #{forward.1} parent=0 // pred_fallthru
    _
  %v71 = vld [vmem:[%s0] sm:$0xff]
  %v72 = vld [vmem:[%s0 + $0x8] sm:$0xff]
  %v73 = vld [vmem:[%s2] sm:$0x1]
  %v74 = vld [vmem:[%s3] sm:$0x1]
  %vm75 = vcmask 261120
  %v76 = vsel %vm75, %v71, 0.0
  %77 = vadd.xlane.f32.xlu0 %v76
  %v78 = vpop.xlane.xlu0 %77
  %v79 = vsel %vm75, %v72, 0.0
  %80 = vadd.xlane.f32.xlu0 %v79
  %v81 = vpop.xlane.xlu0 %80
  %v82 = vrcp.pop 32.0
  %v83 = vmul.f32 32.0, %v82
  %v84 = vsub.f32 1.0, %v83
  %v85 = vmul.f32 %v82, %v84
  %v86 = vadd.f32 %v82, %v85
  %vm87 = vweird.f32 %v82
  %v88 = vsel %vm87, %v82, %v86
  %v89 = vmul.f32 %v78, %v88
  %v90 = vmul.f32 %v81, %v88
  %v91 = vsub.f32 %v71, %v89
  %v92 = vsub.f32 %v72, %v90
  %v93 = vmul.f32 %v91, %v91
  %v94 = vmul.f32 %v92, %v92
  %v95 = vsel %vm75, %v93, 0.0
  %96 = vadd.xlane.f32.xlu0 %v95
  %v97 = vpop.xlane.xlu0 %96
  %v98 = vsel %vm75, %v94, 0.0
  %99 = vadd.xlane.f32.xlu0 %v98
  %v100 = vpop.xlane.xlu0 %99
  %v101 = vmul.f32 %v97, %v88
  %v102 = vmul.f32 %v100, %v88
  %v103 = vadd.f32 %v101, 1e-12
  %v104 = vadd.f32 %v102, 1e-12
  %v105 = vrsqrt.pop %v103
  %v106 = vmul.f32 %v105, %v103
  %v107 = vmul.f32 %v106, %v105
  %v108 = vmul.f32 0.5, %v107
  %v109 = vsub.f32 1.5, %v108
  %v110 = vmul.f32 %v105, %v109
  %vm111 = vweird.f32 %v103
  %vm112 = vweird.f32 %v105
  %vm113 = vmor %vm111, %vm112
  %v114 = vsel %vm113, %v105, %v110
  %v115 = vrsqrt.pop %v104
  %v116 = vmul.f32 %v115, %v104
  %v117 = vmul.f32 %v116, %v115
  %v118 = vmul.f32 0.5, %v117
  %v119 = vsub.f32 1.5, %v118
  %v120 = vmul.f32 %v115, %v119
  %vm121 = vweird.f32 %v104
  %vm122 = vweird.f32 %v115
  %vm123 = vmor %vm121, %vm122
  %v124 = vsel %vm123, %v115, %v120
  %v125 = vmul.f32 %v91, %v114
  %v126 = vmul.f32 %v92, %v124
  %v128 = vperm.slane %v73, 0
  %v130 = vmul.f32 %v125, %v128
  %v131 = vmul.f32 %v126, %v128
  %v133 = vperm.slane %v74, 0
  %v135 = vadd.f32 %v130, %v133
  %v136 = vadd.f32 %v131, %v133
  %v137 = vld [vmem:[%s1] sm:$0xff]
  %v138 = vld [vmem:[%s1 + $0x8] sm:$0xff]
  %v139 = vld [vmem:[%s4] sm:$0xff]
  %v140 = vld [vmem:[%s4 + $0x8] sm:$0xff]
  %v141 = vld [vmem:[%s4 + $0x10] sm:$0xff]
  %v142 = vld [vmem:[%s4 + $0x18] sm:$0xff]
  %v143 = vld [vmem:[%s5] sm:$0x1]
  %v145 = vperm.slane %v143, 0
  %v148 = vsel %vm75, %v135, 0
  %v151 = vsel %vm75, %v136, 0
  %153 = vmatpush.msra.mxu0 0.0
  %154 = vmatpush.msra.mxu0 0.0
  %155 = vmatpush.msra.mxu0 0.0
  %156 = vmatpush.msra.mxu0 0.0
  %157 = vmatpush.msra.mxu0 0.0
  %158 = vmatpush.msra.mxu0 0.0
  %159 = vmatpush.msra.mxu0 0.0
  %160 = vmatpush.msra.mxu0 0.0
  %161 = vmatpush.msra.mxu0 0.0
  %162 = vmatpush.msra.mxu0 0.0
  %163 = vmatpush.msra.mxu0 0.0
  %164 = vmatpush.msra.mxu0 0.0
  %165 = vmatpush.msra.mxu0 %v142
  %166 = vmatpush.msra.mxu0 %v141
  %167 = vmatpush.msra.mxu0 %v140
  %168 = vmatpush.msra.mxu0 %v139
  %169 = vmatmul.f32.gmra.mxu0 %v148
  %v170 = vpop.f32.mrf.mxu0
  %v171 = vadd.f32 %v145, %v170
  %172 = vmatmul.f32.gmra.mxu0 %v151
  %v173 = vpop.f32.mrf.mxu0
  %v174 = vadd.f32 %v145, %v173
  %175 = vdwg.mxu0
  %v176 = vld [vmem:[%s6] sm:$0xff]
  %v177 = vld [vmem:[%s6 + $0x8] sm:$0xff]
  %v178 = vld [vmem:[%s6 + $0x10] sm:$0xff]
  %v179 = vld [vmem:[%s6 + $0x18] sm:$0xff]
  %v180 = vld [vmem:[%s7] sm:$0x1]
  %v182 = vperm.slane %v180, 0
  %184 = vmatpush.msra.mxu0 0.0
  %185 = vmatpush.msra.mxu0 0.0
  %186 = vmatpush.msra.mxu0 0.0
  %187 = vmatpush.msra.mxu0 0.0
  %188 = vmatpush.msra.mxu0 0.0
  %189 = vmatpush.msra.mxu0 0.0
  %190 = vmatpush.msra.mxu0 0.0
  %191 = vmatpush.msra.mxu0 0.0
  %192 = vmatpush.msra.mxu0 0.0
  %193 = vmatpush.msra.mxu0 0.0
  %194 = vmatpush.msra.mxu0 0.0
  %195 = vmatpush.msra.mxu0 0.0
  %196 = vmatpush.msra.mxu0 %v179
  %197 = vmatpush.msra.mxu0 %v178
  %198 = vmatpush.msra.mxu0 %v177
  %199 = vmatpush.msra.mxu0 %v176
  %200 = vmatmul.f32.gmra.mxu0 %v148
  %v201 = vpop.f32.mrf.mxu0
  %v202 = vadd.f32 %v182, %v201
  %203 = vmatmul.f32.gmra.mxu0 %v151
  %v204 = vpop.f32.mrf.mxu0
  %v205 = vadd.f32 %v182, %v204
  %206 = vdwg.mxu0
  %v207 = vld [vmem:[%s8] sm:$0xff]
  %v208 = vld [vmem:[%s8 + $0x8] sm:$0xff]
  %v209 = vld [vmem:[%s8 + $0x10] sm:$0xff]
  %v210 = vld [vmem:[%s8 + $0x18] sm:$0xff]
  %v211 = vld [vmem:[%s9] sm:$0x1]
  %v213 = vperm.slane %v211, 0
  %215 = vmatpush.msra.mxu0 0.0
  %216 = vmatpush.msra.mxu0 0.0
  %217 = vmatpush.msra.mxu0 0.0
  %218 = vmatpush.msra.mxu0 0.0
  %219 = vmatpush.msra.mxu0 0.0
  %220 = vmatpush.msra.mxu0 0.0
  %221 = vmatpush.msra.mxu0 0.0
  %222 = vmatpush.msra.mxu0 0.0
  %223 = vmatpush.msra.mxu0 0.0
  %224 = vmatpush.msra.mxu0 0.0
  %225 = vmatpush.msra.mxu0 0.0
  %226 = vmatpush.msra.mxu0 0.0
  %227 = vmatpush.msra.mxu0 %v210
  %228 = vmatpush.msra.mxu0 %v209
  %229 = vmatpush.msra.mxu0 %v208
  %230 = vmatpush.msra.mxu0 %v207
  %231 = vmatmul.f32.gmra.mxu0 %v148
  %v232 = vpop.f32.mrf.mxu0
  %v233 = vadd.f32 %v213, %v232
  %234 = vmatmul.f32.gmra.mxu0 %v151
  %v235 = vpop.f32.mrf.mxu0
  %v236 = vadd.f32 %v213, %v235
  %237 = vdwg.mxu0
  %vm238 = vcmask 64512
  %v240 = vsel %vm238, %v171, 0
  %v243 = vsel %vm238, %v174, 0
  %v246 = vsel %vm238, %v202, 0
  %v249 = vsel %vm238, %v205, 0
  %251 = vmatpush.xpose.msra.mxu0 0.0
  %252 = vmatpush.xpose.msra.mxu0 0.0
  %253 = vmatpush.xpose.msra.mxu0 0.0
  %254 = vmatpush.xpose.msra.mxu0 0.0
  %255 = vmatpush.xpose.msra.mxu0 0.0
  %256 = vmatpush.xpose.msra.mxu0 0.0
  %257 = vmatpush.xpose.msra.mxu0 0.0
  %258 = vmatpush.xpose.msra.mxu0 0.0
  %259 = vmatpush.xpose.msra.mxu0 0.0
  %260 = vmatpush.xpose.msra.mxu0 0.0
  %261 = vmatpush.xpose.msra.mxu0 0.0
  %262 = vmatpush.xpose.msra.mxu0 0.0
  %263 = vmatpush.xpose.msra.mxu0 0.0
  %264 = vmatpush.xpose.msra.mxu0 0.0
  %265 = vmatpush.xpose.msra.mxu0 %v249
  %266 = vmatpush.xpose.msra.mxu0 %v246
  %267 = vmatmul.f32.gmra.mxu0 %v240
  %v268 = vpop.f32.mrf.mxu0
  %v269 = vadd.f32 0.0, %v268
  %270 = vmatmul.f32.gmra.mxu0 %v243
  %v271 = vpop.f32.mrf.mxu0
  %v272 = vadd.f32 0.0, %v271
  %273 = vdwg.mxu0
  %v274 = vmul.f32 %v269, 0.35355338
  %v275 = vmul.f32 %v272, 0.35355338
  %v276 = vadd.f32 %v274, %v137
  %v277 = vadd.f32 %v275, %v138
  %vm278 = vcmask 130048
  %v279 = vsel %vm278, %v276, -inf
  %280 = vmax.xlane.f32.xlu0 %v279
  %v281 = vpop.xlane.xlu0 %280
  %v282 = vsel %vm278, %v277, -inf
  %283 = vmax.xlane.f32.xlu0 %v282
  %v284 = vpop.xlane.xlu0 %283
  %v285 = vsub.f32 %v276, %v281
  %v286 = vsub.f32 %v277, %v284
  %v287 = vmul.f32 %v285, 1.442695
  %v288 = vpow.pop %v287
  %v289 = vmul.f32 %v286, 1.442695
  %v290 = vpow.pop %v289
  %v291 = vsel %vm278, %v288, 0.0
  %292 = vadd.xlane.f32.xlu0 %v291
  %v293 = vpop.xlane.xlu0 %292
  %v294 = vsel %vm278, %v290, 0.0
  %295 = vadd.xlane.f32.xlu0 %v294
  %v296 = vpop.xlane.xlu0 %295
  %v297 = vrcp.pop %v293
  %v298 = vrcp.pop %v296
  %v299 = vmul.f32 %v288, %v297
  %v300 = vmul.f32 %v290, %v298
  %v302 = vsel %vm278, %v299, 0
  %v305 = vsel %vm278, %v300, 0
  %307 = vmatpush.msra.mxu0 0.0
  %308 = vmatpush.msra.mxu0 0.0
  %309 = vmatpush.msra.mxu0 0.0
  %310 = vmatpush.msra.mxu0 0.0
  %311 = vmatpush.msra.mxu0 0.0
  %312 = vmatpush.msra.mxu0 0.0
  %313 = vmatpush.msra.mxu0 0.0
  %314 = vmatpush.msra.mxu0 0.0
  %315 = vmatpush.msra.mxu0 0.0
  %316 = vmatpush.msra.mxu0 0.0
  %317 = vmatpush.msra.mxu0 0.0
  %318 = vmatpush.msra.mxu0 0.0
  %319 = vmatpush.msra.mxu0 0.0
  %320 = vmatpush.msra.mxu0 0.0
  %321 = vmatpush.msra.mxu0 %v236
  %322 = vmatpush.msra.mxu0 %v233
  %323 = vmatmul.f32.gmra.mxu0 %v302
  %v324 = vpop.f32.mrf.mxu0
  %v325 = vadd.f32 0.0, %v324
  %326 = vmatmul.f32.gmra.mxu0 %v305
  %v327 = vpop.f32.mrf.mxu0
  %v328 = vadd.f32 0.0, %v327
  %329 = vdwg.mxu0
  %v330 = vld [vmem:[%s10] sm:$0xff]
  %s331 = scalar_lea.vmem %s4, 32
  %v332 = vld [vmem:[%s331] sm:$0xff]
  %v333 = vld [vmem:[%s331 + $0x8] sm:$0xff]
  %v334 = vld [vmem:[%s331 + $0x10] sm:$0xff]
  %v335 = vld [vmem:[%s331 + $0x18] sm:$0xff]
  %s336 = scalar_lea.vmem %s5, 1
  %v337 = vld [vmem:[%s336] sm:$0x1]
  %v339 = vperm.slane %v337, 0
  %341 = vmatpush.msra.mxu0 0.0
  %342 = vmatpush.msra.mxu0 0.0
  %343 = vmatpush.msra.mxu0 0.0
  %344 = vmatpush.msra.mxu0 0.0
  %345 = vmatpush.msra.mxu0 0.0
  %346 = vmatpush.msra.mxu0 0.0
  %347 = vmatpush.msra.mxu0 0.0
  %348 = vmatpush.msra.mxu0 0.0
  %349 = vmatpush.msra.mxu0 0.0
  %350 = vmatpush.msra.mxu0 0.0
  %351 = vmatpush.msra.mxu0 0.0
  %352 = vmatpush.msra.mxu0 0.0
  %353 = vmatpush.msra.mxu0 %v335
  %354 = vmatpush.msra.mxu0 %v334
  %355 = vmatpush.msra.mxu0 %v333
  %356 = vmatpush.msra.mxu0 %v332
  %357 = vmatmul.f32.gmra.mxu0 %v148
  %v358 = vpop.f32.mrf.mxu0
  %v359 = vadd.f32 %v339, %v358
  %360 = vmatmul.f32.gmra.mxu0 %v151
  %v361 = vpop.f32.mrf.mxu0
  %v362 = vadd.f32 %v339, %v361
  %363 = vdwg.mxu0
  %s364 = scalar_lea.vmem %s6, 32
  %v365 = vld [vmem:[%s364] sm:$0xff]
  %v366 = vld [vmem:[%s364 + $0x8] sm:$0xff]
  %v367 = vld [vmem:[%s364 + $0x10] sm:$0xff]
  %v368 = vld [vmem:[%s364 + $0x18] sm:$0xff]
  %s369 = scalar_lea.vmem %s7, 1
  %v370 = vld [vmem:[%s369] sm:$0x1]
  %v372 = vperm.slane %v370, 0
  %374 = vmatpush.msra.mxu0 0.0
  %375 = vmatpush.msra.mxu0 0.0
  %376 = vmatpush.msra.mxu0 0.0
  %377 = vmatpush.msra.mxu0 0.0
  %378 = vmatpush.msra.mxu0 0.0
  %379 = vmatpush.msra.mxu0 0.0
  %380 = vmatpush.msra.mxu0 0.0
  %381 = vmatpush.msra.mxu0 0.0
  %382 = vmatpush.msra.mxu0 0.0
  %383 = vmatpush.msra.mxu0 0.0
  %384 = vmatpush.msra.mxu0 0.0
  %385 = vmatpush.msra.mxu0 0.0
  %386 = vmatpush.msra.mxu0 %v368
  %387 = vmatpush.msra.mxu0 %v367
  %388 = vmatpush.msra.mxu0 %v366
  %389 = vmatpush.msra.mxu0 %v365
  %390 = vmatmul.f32.gmra.mxu0 %v148
  %v391 = vpop.f32.mrf.mxu0
  %v392 = vadd.f32 %v372, %v391
  %393 = vmatmul.f32.gmra.mxu0 %v151
  %v394 = vpop.f32.mrf.mxu0
  %v395 = vadd.f32 %v372, %v394
  %396 = vdwg.mxu0
  %s397 = scalar_lea.vmem %s8, 32
  %v398 = vld [vmem:[%s397] sm:$0xff]
  %v399 = vld [vmem:[%s397 + $0x8] sm:$0xff]
  %v400 = vld [vmem:[%s397 + $0x10] sm:$0xff]
  %v401 = vld [vmem:[%s397 + $0x18] sm:$0xff]
  %s402 = scalar_lea.vmem %s9, 1
  %v403 = vld [vmem:[%s402] sm:$0x1]
  %v405 = vperm.slane %v403, 0
  %407 = vmatpush.msra.mxu0 0.0
  %408 = vmatpush.msra.mxu0 0.0
  %409 = vmatpush.msra.mxu0 0.0
  %410 = vmatpush.msra.mxu0 0.0
  %411 = vmatpush.msra.mxu0 0.0
  %412 = vmatpush.msra.mxu0 0.0
  %413 = vmatpush.msra.mxu0 0.0
  %414 = vmatpush.msra.mxu0 0.0
  %415 = vmatpush.msra.mxu0 0.0
  %416 = vmatpush.msra.mxu0 0.0
  %417 = vmatpush.msra.mxu0 0.0
  %418 = vmatpush.msra.mxu0 0.0
  %419 = vmatpush.msra.mxu0 %v401
  %420 = vmatpush.msra.mxu0 %v400
  %421 = vmatpush.msra.mxu0 %v399
  %422 = vmatpush.msra.mxu0 %v398
  %423 = vmatmul.f32.gmra.mxu0 %v148
  %v424 = vpop.f32.mrf.mxu0
  %v425 = vadd.f32 %v405, %v424
  %426 = vmatmul.f32.gmra.mxu0 %v151
  %v427 = vpop.f32.mrf.mxu0
  %v428 = vadd.f32 %v405, %v427
  %429 = vdwg.mxu0
  %v431 = vsel %vm238, %v359, 0
  %v434 = vsel %vm238, %v362, 0
  %v437 = vsel %vm238, %v392, 0
  %v440 = vsel %vm238, %v395, 0
  %442 = vmatpush.xpose.msra.mxu0 0.0
  %443 = vmatpush.xpose.msra.mxu0 0.0
  %444 = vmatpush.xpose.msra.mxu0 0.0
  %445 = vmatpush.xpose.msra.mxu0 0.0
  %446 = vmatpush.xpose.msra.mxu0 0.0
  %447 = vmatpush.xpose.msra.mxu0 0.0
  %448 = vmatpush.xpose.msra.mxu0 0.0
  %449 = vmatpush.xpose.msra.mxu0 0.0
  %450 = vmatpush.xpose.msra.mxu0 0.0
  %451 = vmatpush.xpose.msra.mxu0 0.0
  %452 = vmatpush.xpose.msra.mxu0 0.0
  %453 = vmatpush.xpose.msra.mxu0 0.0
  %454 = vmatpush.xpose.msra.mxu0 0.0
  %455 = vmatpush.xpose.msra.mxu0 0.0
  %456 = vmatpush.xpose.msra.mxu0 %v440
  %457 = vmatpush.xpose.msra.mxu0 %v437
  %458 = vmatmul.f32.gmra.mxu0 %v431
  %v459 = vpop.f32.mrf.mxu0
  %v460 = vadd.f32 0.0, %v459
  %461 = vmatmul.f32.gmra.mxu0 %v434
  %v462 = vpop.f32.mrf.mxu0
  %v463 = vadd.f32 0.0, %v462
  %464 = vdwg.mxu0
  %v465 = vmul.f32 %v460, 0.35355338
  %v466 = vmul.f32 %v463, 0.35355338
  %v467 = vadd.f32 %v465, %v137
  %v468 = vadd.f32 %v466, %v138
  %v469 = vsel %vm278, %v467, -inf
  %470 = vmax.xlane.f32.xlu0 %v469
  %v471 = vpop.xlane.xlu0 %470
  %v472 = vsel %vm278, %v468, -inf
  %473 = vmax.xlane.f32.xlu0 %v472
  %v474 = vpop.xlane.xlu0 %473
  %v475 = vsub.f32 %v467, %v471
  %v476 = vsub.f32 %v468, %v474
  %v477 = vmul.f32 %v475, 1.442695
  %v478 = vpow.pop %v477
  %v479 = vmul.f32 %v476, 1.442695
  %v480 = vpow.pop %v479
  %v481 = vsel %vm278, %v478, 0.0
  %482 = vadd.xlane.f32.xlu0 %v481
  %v483 = vpop.xlane.xlu0 %482
  %v484 = vsel %vm278, %v480, 0.0
  %485 = vadd.xlane.f32.xlu0 %v484
  %v486 = vpop.xlane.xlu0 %485
  %v487 = vrcp.pop %v483
  %v488 = vrcp.pop %v486
  %v489 = vmul.f32 %v478, %v487
  %v490 = vmul.f32 %v480, %v488
  %v492 = vsel %vm278, %v489, 0
  %v495 = vsel %vm278, %v490, 0
  %497 = vmatpush.msra.mxu0 0.0
  %498 = vmatpush.msra.mxu0 0.0
  %499 = vmatpush.msra.mxu0 0.0
  %500 = vmatpush.msra.mxu0 0.0
  %501 = vmatpush.msra.mxu0 0.0
  %502 = vmatpush.msra.mxu0 0.0
  %503 = vmatpush.msra.mxu0 0.0
  %504 = vmatpush.msra.mxu0 0.0
  %505 = vmatpush.msra.mxu0 0.0
  %506 = vmatpush.msra.mxu0 0.0
  %507 = vmatpush.msra.mxu0 0.0
  %508 = vmatpush.msra.mxu0 0.0
  %509 = vmatpush.msra.mxu0 0.0
  %510 = vmatpush.msra.mxu0 0.0
  %511 = vmatpush.msra.mxu0 %v428
  %512 = vmatpush.msra.mxu0 %v425
  %513 = vmatmul.f32.gmra.mxu0 %v492
  %v514 = vpop.f32.mrf.mxu0
  %v515 = vadd.f32 0.0, %v514
  %516 = vmatmul.f32.gmra.mxu0 %v495
  %v517 = vpop.f32.mrf.mxu0
  %v518 = vadd.f32 0.0, %v517
  %519 = vdwg.mxu0
  %s520 = scalar_lea.vmem %s10, 8
  %v521 = vld [vmem:[%s520] sm:$0xff]
  %v523 = vsel %vm238, %v515, 0
  %v526 = vsel %vm238, %v518, 0
  %528 = vmatpush.msra.mxu0 0.0
  %529 = vmatpush.msra.mxu0 0.0
  %530 = vmatpush.msra.mxu0 0.0
  %531 = vmatpush.msra.mxu0 0.0
  %532 = vmatpush.msra.mxu0 0.0
  %533 = vmatpush.msra.mxu0 0.0
  %534 = vmatpush.msra.mxu0 0.0
  %535 = vmatpush.msra.mxu0 0.0
  %536 = vmatpush.msra.mxu0 0.0
  %537 = vmatpush.msra.mxu0 0.0
  %538 = vmatpush.msra.mxu0 0.0
  %539 = vmatpush.msra.mxu0 0.0
  %540 = vmatpush.msra.mxu0 0.0
  %541 = vmatpush.msra.mxu0 0.0
  %542 = vmatpush.msra.mxu0 0.0
  %543 = vmatpush.msra.mxu0 %v521
  %544 = vmatmul.f32.gmra.mxu0 %v523
  %v545 = vpop.f32.mrf.mxu0
  %v546 = vadd.f32 0.0, %v545
  %547 = vmatmul.f32.gmra.mxu0 %v526
  %v548 = vpop.f32.mrf.mxu0
  %v549 = vadd.f32 0.0, %v548
  %550 = vdwg.mxu0
  %v552 = vsel %vm238, %v325, 0
  %v555 = vsel %vm238, %v328, 0
  %557 = vmatpush.msra.mxu0 0.0
  %558 = vmatpush.msra.mxu0 0.0
  %559 = vmatpush.msra.mxu0 0.0
  %560 = vmatpush.msra.mxu0 0.0
  %561 = vmatpush.msra.mxu0 0.0
  %562 = vmatpush.msra.mxu0 0.0
  %563 = vmatpush.msra.mxu0 0.0
  %564 = vmatpush.msra.mxu0 0.0
  %565 = vmatpush.msra.mxu0 0.0
  %566 = vmatpush.msra.mxu0 0.0
  %567 = vmatpush.msra.mxu0 0.0
  %568 = vmatpush.msra.mxu0 0.0
  %569 = vmatpush.msra.mxu0 0.0
  %570 = vmatpush.msra.mxu0 0.0
  %571 = vmatpush.msra.mxu0 0.0
  %572 = vmatpush.msra.mxu0 %v330
  %573 = vmatmul.f32.gmra.mxu0 %v552
  %v574 = vpop.f32.mrf.mxu0
  %v575 = vadd.f32 %v546, %v574
  %576 = vmatmul.f32.gmra.mxu0 %v555
  %v577 = vpop.f32.mrf.mxu0
  %v578 = vadd.f32 %v549, %v577
  %579 = vdwg.mxu0
  %s580 = scalar_lea.vmem %s4, 64
  %v581 = vld [vmem:[%s580] sm:$0xff]
  %v582 = vld [vmem:[%s580 + $0x8] sm:$0xff]
  %v583 = vld [vmem:[%s580 + $0x10] sm:$0xff]
  %v584 = vld [vmem:[%s580 + $0x18] sm:$0xff]
  %s585 = scalar_lea.vmem %s5, 2
  %v586 = vld [vmem:[%s585] sm:$0x1]
  %v588 = vperm.slane %v586, 0
  %590 = vmatpush.msra.mxu0 0.0
  %591 = vmatpush.msra.mxu0 0.0
  %592 = vmatpush.msra.mxu0 0.0
  %593 = vmatpush.msra.mxu0 0.0
  %594 = vmatpush.msra.mxu0 0.0
  %595 = vmatpush.msra.mxu0 0.0
  %596 = vmatpush.msra.mxu0 0.0
  %597 = vmatpush.msra.mxu0 0.0
  %598 = vmatpush.msra.mxu0 0.0
  %599 = vmatpush.msra.mxu0 0.0
  %600 = vmatpush.msra.mxu0 0.0
  %601 = vmatpush.msra.mxu0 0.0
  %602 = vmatpush.msra.mxu0 %v584
  %603 = vmatpush.msra.mxu0 %v583
  %604 = vmatpush.msra.mxu0 %v582
  %605 = vmatpush.msra.mxu0 %v581
  %606 = vmatmul.f32.gmra.mxu0 %v148
  %v607 = vpop.f32.mrf.mxu0
  %v608 = vadd.f32 %v588, %v607
  %609 = vmatmul.f32.gmra.mxu0 %v151
  %v610 = vpop.f32.mrf.mxu0
  %v611 = vadd.f32 %v588, %v610
  %612 = vdwg.mxu0
  %s613 = scalar_lea.vmem %s6, 64
  %v614 = vld [vmem:[%s613] sm:$0xff]
  %v615 = vld [vmem:[%s613 + $0x8] sm:$0xff]
  %v616 = vld [vmem:[%s613 + $0x10] sm:$0xff]
  %v617 = vld [vmem:[%s613 + $0x18] sm:$0xff]
  %s618 = scalar_lea.vmem %s7, 2
  %v619 = vld [vmem:[%s618] sm:$0x1]
  %v621 = vperm.slane %v619, 0
  %623 = vmatpush.msra.mxu0 0.0
  %624 = vmatpush.msra.mxu0 0.0
  %625 = vmatpush.msra.mxu0 0.0
  %626 = vmatpush.msra.mxu0 0.0
  %627 = vmatpush.msra.mxu0 0.0
  %628 = vmatpush.msra.mxu0 0.0
  %629 = vmatpush.msra.mxu0 0.0
  %630 = vmatpush.msra.mxu0 0.0
  %631 = vmatpush.msra.mxu0 0.0
  %632 = vmatpush.msra.mxu0 0.0
  %633 = vmatpush.msra.mxu0 0.0
  %634 = vmatpush.msra.mxu0 0.0
  %635 = vmatpush.msra.mxu0 %v617
  %636 = vmatpush.msra.mxu0 %v616
  %637 = vmatpush.msra.mxu0 %v615
  %638 = vmatpush.msra.mxu0 %v614
  %639 = vmatmul.f32.gmra.mxu0 %v148
  %v640 = vpop.f32.mrf.mxu0
  %v641 = vadd.f32 %v621, %v640
  %642 = vmatmul.f32.gmra.mxu0 %v151
  %v643 = vpop.f32.mrf.mxu0
  %v644 = vadd.f32 %v621, %v643
  %645 = vdwg.mxu0
  %s646 = scalar_lea.vmem %s8, 64
  %v647 = vld [vmem:[%s646] sm:$0xff]
  %v648 = vld [vmem:[%s646 + $0x8] sm:$0xff]
  %v649 = vld [vmem:[%s646 + $0x10] sm:$0xff]
  %v650 = vld [vmem:[%s646 + $0x18] sm:$0xff]
  %s651 = scalar_lea.vmem %s9, 2
  %v652 = vld [vmem:[%s651] sm:$0x1]
  %v654 = vperm.slane %v652, 0
  %656 = vmatpush.msra.mxu0 0.0
  %657 = vmatpush.msra.mxu0 0.0
  %658 = vmatpush.msra.mxu0 0.0
  %659 = vmatpush.msra.mxu0 0.0
  %660 = vmatpush.msra.mxu0 0.0
  %661 = vmatpush.msra.mxu0 0.0
  %662 = vmatpush.msra.mxu0 0.0
  %663 = vmatpush.msra.mxu0 0.0
  %664 = vmatpush.msra.mxu0 0.0
  %665 = vmatpush.msra.mxu0 0.0
  %666 = vmatpush.msra.mxu0 0.0
  %667 = vmatpush.msra.mxu0 0.0
  %668 = vmatpush.msra.mxu0 %v650
  %669 = vmatpush.msra.mxu0 %v649
  %670 = vmatpush.msra.mxu0 %v648
  %671 = vmatpush.msra.mxu0 %v647
  %672 = vmatmul.f32.gmra.mxu0 %v148
  %v673 = vpop.f32.mrf.mxu0
  %v674 = vadd.f32 %v654, %v673
  %675 = vmatmul.f32.gmra.mxu0 %v151
  %v676 = vpop.f32.mrf.mxu0
  %v677 = vadd.f32 %v654, %v676
  %678 = vdwg.mxu0
  %v680 = vsel %vm238, %v608, 0
  %v683 = vsel %vm238, %v611, 0
  %v686 = vsel %vm238, %v641, 0
  %v689 = vsel %vm238, %v644, 0
  %691 = vmatpush.xpose.msra.mxu0 0.0
  %692 = vmatpush.xpose.msra.mxu0 0.0
  %693 = vmatpush.xpose.msra.mxu0 0.0
  %694 = vmatpush.xpose.msra.mxu0 0.0
  %695 = vmatpush.xpose.msra.mxu0 0.0
  %696 = vmatpush.xpose.msra.mxu0 0.0
  %697 = vmatpush.xpose.msra.mxu0 0.0
  %698 = vmatpush.xpose.msra.mxu0 0.0
  %699 = vmatpush.xpose.msra.mxu0 0.0
  %700 = vmatpush.xpose.msra.mxu0 0.0
  %701 = vmatpush.xpose.msra.mxu0 0.0
  %702 = vmatpush.xpose.msra.mxu0 0.0
  %703 = vmatpush.xpose.msra.mxu0 0.0
  %704 = vmatpush.xpose.msra.mxu0 0.0
  %705 = vmatpush.xpose.msra.mxu0 %v689
  %706 = vmatpush.xpose.msra.mxu0 %v686
  %707 = vmatmul.f32.gmra.mxu0 %v680
  %v708 = vpop.f32.mrf.mxu0
  %v709 = vadd.f32 0.0, %v708
  %710 = vmatmul.f32.gmra.mxu0 %v683
  %v711 = vpop.f32.mrf.mxu0
  %v712 = vadd.f32 0.0, %v711
  %713 = vdwg.mxu0
  %v714 = vmul.f32 %v709, 0.35355338
  %v715 = vmul.f32 %v712, 0.35355338
  %v716 = vadd.f32 %v714, %v137
  %v717 = vadd.f32 %v715, %v138
  %v718 = vsel %vm278, %v716, -inf
  %719 = vmax.xlane.f32.xlu0 %v718
  %v720 = vpop.xlane.xlu0 %719
  %v721 = vsel %vm278, %v717, -inf
  %722 = vmax.xlane.f32.xlu0 %v721
  %v723 = vpop.xlane.xlu0 %722
  %v724 = vsub.f32 %v716, %v720
  %v725 = vsub.f32 %v717, %v723
  %v726 = vmul.f32 %v724, 1.442695
  %v727 = vpow.pop %v726
  %v728 = vmul.f32 %v725, 1.442695
  %v729 = vpow.pop %v728
  %v730 = vsel %vm278, %v727, 0.0
  %731 = vadd.xlane.f32.xlu0 %v730
  %v732 = vpop.xlane.xlu0 %731
  %v733 = vsel %vm278, %v729, 0.0
  %734 = vadd.xlane.f32.xlu0 %v733
  %v735 = vpop.xlane.xlu0 %734
  %v736 = vrcp.pop %v732
  %v737 = vrcp.pop %v735
  %v738 = vmul.f32 %v727, %v736
  %v739 = vmul.f32 %v729, %v737
  %v741 = vsel %vm278, %v738, 0
  %v744 = vsel %vm278, %v739, 0
  %746 = vmatpush.msra.mxu0 0.0
  %747 = vmatpush.msra.mxu0 0.0
  %748 = vmatpush.msra.mxu0 0.0
  %749 = vmatpush.msra.mxu0 0.0
  %750 = vmatpush.msra.mxu0 0.0
  %751 = vmatpush.msra.mxu0 0.0
  %752 = vmatpush.msra.mxu0 0.0
  %753 = vmatpush.msra.mxu0 0.0
  %754 = vmatpush.msra.mxu0 0.0
  %755 = vmatpush.msra.mxu0 0.0
  %756 = vmatpush.msra.mxu0 0.0
  %757 = vmatpush.msra.mxu0 0.0
  %758 = vmatpush.msra.mxu0 0.0
  %759 = vmatpush.msra.mxu0 0.0
  %760 = vmatpush.msra.mxu0 %v677
  %761 = vmatpush.msra.mxu0 %v674
  %762 = vmatmul.f32.gmra.mxu0 %v741
  %v763 = vpop.f32.mrf.mxu0
  %v764 = vadd.f32 0.0, %v763
  %765 = vmatmul.f32.gmra.mxu0 %v744
  %v766 = vpop.f32.mrf.mxu0
  %v767 = vadd.f32 0.0, %v766
  %768 = vdwg.mxu0
  %s769 = scalar_lea.vmem %s10, 16
  %v770 = vld [vmem:[%s769] sm:$0xff]
  %v772 = vsel %vm238, %v764, 0
  %v775 = vsel %vm238, %v767, 0
  %777 = vmatpush.msra.mxu0 0.0
  %778 = vmatpush.msra.mxu0 0.0
  %779 = vmatpush.msra.mxu0 0.0
  %780 = vmatpush.msra.mxu0 0.0
  %781 = vmatpush.msra.mxu0 0.0
  %782 = vmatpush.msra.mxu0 0.0
  %783 = vmatpush.msra.mxu0 0.0
  %784 = vmatpush.msra.mxu0 0.0
  %785 = vmatpush.msra.mxu0 0.0
  %786 = vmatpush.msra.mxu0 0.0
  %787 = vmatpush.msra.mxu0 0.0
  %788 = vmatpush.msra.mxu0 0.0
  %789 = vmatpush.msra.mxu0 0.0
  %790 = vmatpush.msra.mxu0 0.0
  %791 = vmatpush.msra.mxu0 0.0
  %792 = vmatpush.msra.mxu0 %v770
  %793 = vmatmul.f32.gmra.mxu0 %v772
  %v794 = vpop.f32.mrf.mxu0
  %v795 = vadd.f32 0.0, %v794
  %796 = vmatmul.f32.gmra.mxu0 %v775
  %v797 = vpop.f32.mrf.mxu0
  %v798 = vadd.f32 0.0, %v797
  %799 = vdwg.mxu0
  %v800 = vadd.f32 %v575, %v795
  %v801 = vadd.f32 %v578, %v798
  %s802 = scalar_lea.vmem %s4, 96
  %v803 = vld [vmem:[%s802] sm:$0xff]
  %v804 = vld [vmem:[%s802 + $0x8] sm:$0xff]
  %v805 = vld [vmem:[%s802 + $0x10] sm:$0xff]
  %v806 = vld [vmem:[%s802 + $0x18] sm:$0xff]
  %s807 = scalar_lea.vmem %s5, 3
  %v808 = vld [vmem:[%s807] sm:$0x1]
  %v810 = vperm.slane %v808, 0
  %812 = vmatpush.msra.mxu0 0.0
  %813 = vmatpush.msra.mxu0 0.0
  %814 = vmatpush.msra.mxu0 0.0
  %815 = vmatpush.msra.mxu0 0.0
  %816 = vmatpush.msra.mxu0 0.0
  %817 = vmatpush.msra.mxu0 0.0
  %818 = vmatpush.msra.mxu0 0.0
  %819 = vmatpush.msra.mxu0 0.0
  %820 = vmatpush.msra.mxu0 0.0
  %821 = vmatpush.msra.mxu0 0.0
  %822 = vmatpush.msra.mxu0 0.0
  %823 = vmatpush.msra.mxu0 0.0
  %824 = vmatpush.msra.mxu0 %v806
  %825 = vmatpush.msra.mxu0 %v805
  %826 = vmatpush.msra.mxu0 %v804
  %827 = vmatpush.msra.mxu0 %v803
  %828 = vmatmul.f32.gmra.mxu0 %v148
  %v829 = vpop.f32.mrf.mxu0
  %v830 = vadd.f32 %v810, %v829
  %831 = vmatmul.f32.gmra.mxu0 %v151
  %v832 = vpop.f32.mrf.mxu0
  %v833 = vadd.f32 %v810, %v832
  %834 = vdwg.mxu0
  %s835 = scalar_lea.vmem %s6, 96
  %v836 = vld [vmem:[%s835] sm:$0xff]
  %v837 = vld [vmem:[%s835 + $0x8] sm:$0xff]
  %v838 = vld [vmem:[%s835 + $0x10] sm:$0xff]
  %v839 = vld [vmem:[%s835 + $0x18] sm:$0xff]
  %s840 = scalar_lea.vmem %s7, 3
  %v841 = vld [vmem:[%s840] sm:$0x1]
  %v843 = vperm.slane %v841, 0
  %845 = vmatpush.msra.mxu0 0.0
  %846 = vmatpush.msra.mxu0 0.0
  %847 = vmatpush.msra.mxu0 0.0
  %848 = vmatpush.msra.mxu0 0.0
  %849 = vmatpush.msra.mxu0 0.0
  %850 = vmatpush.msra.mxu0 0.0
  %851 = vmatpush.msra.mxu0 0.0
  %852 = vmatpush.msra.mxu0 0.0
  %853 = vmatpush.msra.mxu0 0.0
  %854 = vmatpush.msra.mxu0 0.0
  %855 = vmatpush.msra.mxu0 0.0
  %856 = vmatpush.msra.mxu0 0.0
  %857 = vmatpush.msra.mxu0 %v839
  %858 = vmatpush.msra.mxu0 %v838
  %859 = vmatpush.msra.mxu0 %v837
  %860 = vmatpush.msra.mxu0 %v836
  %861 = vmatmul.f32.gmra.mxu0 %v148
  %v862 = vpop.f32.mrf.mxu0
  %v863 = vadd.f32 %v843, %v862
  %864 = vmatmul.f32.gmra.mxu0 %v151
  %v865 = vpop.f32.mrf.mxu0
  %v866 = vadd.f32 %v843, %v865
  %867 = vdwg.mxu0
  %s868 = scalar_lea.vmem %s8, 96
  %v869 = vld [vmem:[%s868] sm:$0xff]
  %v870 = vld [vmem:[%s868 + $0x8] sm:$0xff]
  %v871 = vld [vmem:[%s868 + $0x10] sm:$0xff]
  %v872 = vld [vmem:[%s868 + $0x18] sm:$0xff]
  %s873 = scalar_lea.vmem %s9, 3
  %v874 = vld [vmem:[%s873] sm:$0x1]
  %v876 = vperm.slane %v874, 0
  %878 = vmatpush.msra.mxu0 0.0
  %879 = vmatpush.msra.mxu0 0.0
  %880 = vmatpush.msra.mxu0 0.0
  %881 = vmatpush.msra.mxu0 0.0
  %882 = vmatpush.msra.mxu0 0.0
  %883 = vmatpush.msra.mxu0 0.0
  %884 = vmatpush.msra.mxu0 0.0
  %885 = vmatpush.msra.mxu0 0.0
  %886 = vmatpush.msra.mxu0 0.0
  %887 = vmatpush.msra.mxu0 0.0
  %888 = vmatpush.msra.mxu0 0.0
  %889 = vmatpush.msra.mxu0 0.0
  %890 = vmatpush.msra.mxu0 %v872
  %891 = vmatpush.msra.mxu0 %v871
  %892 = vmatpush.msra.mxu0 %v870
  %893 = vmatpush.msra.mxu0 %v869
  %894 = vmatmul.f32.gmra.mxu0 %v148
  %v895 = vpop.f32.mrf.mxu0
  %v896 = vadd.f32 %v876, %v895
  %897 = vmatmul.f32.gmra.mxu0 %v151
  %v898 = vpop.f32.mrf.mxu0
  %v899 = vadd.f32 %v876, %v898
  %900 = vdwg.mxu0
  %v902 = vsel %vm238, %v830, 0
  %v905 = vsel %vm238, %v833, 0
  %v908 = vsel %vm238, %v863, 0
  %v911 = vsel %vm238, %v866, 0
  %913 = vmatpush.xpose.msra.mxu0 0.0
  %914 = vmatpush.xpose.msra.mxu0 0.0
  %915 = vmatpush.xpose.msra.mxu0 0.0
  %916 = vmatpush.xpose.msra.mxu0 0.0
  %917 = vmatpush.xpose.msra.mxu0 0.0
  %918 = vmatpush.xpose.msra.mxu0 0.0
  %919 = vmatpush.xpose.msra.mxu0 0.0
  %920 = vmatpush.xpose.msra.mxu0 0.0
  %921 = vmatpush.xpose.msra.mxu0 0.0
  %922 = vmatpush.xpose.msra.mxu0 0.0
  %923 = vmatpush.xpose.msra.mxu0 0.0
  %924 = vmatpush.xpose.msra.mxu0 0.0
  %925 = vmatpush.xpose.msra.mxu0 0.0
  %926 = vmatpush.xpose.msra.mxu0 0.0
  %927 = vmatpush.xpose.msra.mxu0 %v911
  %928 = vmatpush.xpose.msra.mxu0 %v908
  %929 = vmatmul.f32.gmra.mxu0 %v902
  %v930 = vpop.f32.mrf.mxu0
  %v931 = vadd.f32 0.0, %v930
  %932 = vmatmul.f32.gmra.mxu0 %v905
  %v933 = vpop.f32.mrf.mxu0
  %v934 = vadd.f32 0.0, %v933
  %935 = vdwg.mxu0
  %v936 = vmul.f32 %v931, 0.35355338
  %v937 = vmul.f32 %v934, 0.35355338
  %v938 = vadd.f32 %v936, %v137
  %v939 = vadd.f32 %v937, %v138
  %v940 = vsel %vm278, %v938, -inf
  %941 = vmax.xlane.f32.xlu0 %v940
  %v942 = vpop.xlane.xlu0 %941
  %v943 = vsel %vm278, %v939, -inf
  %944 = vmax.xlane.f32.xlu0 %v943
  %v945 = vpop.xlane.xlu0 %944
  %v946 = vsub.f32 %v938, %v942
  %v947 = vsub.f32 %v939, %v945
  %v948 = vmul.f32 %v946, 1.442695
  %v949 = vpow.pop %v948
  %v950 = vmul.f32 %v947, 1.442695
  %v951 = vpow.pop %v950
  %v952 = vsel %vm278, %v949, 0.0
  %953 = vadd.xlane.f32.xlu0 %v952
  %v954 = vpop.xlane.xlu0 %953
  %v955 = vsel %vm278, %v951, 0.0
  %956 = vadd.xlane.f32.xlu0 %v955
  %v957 = vpop.xlane.xlu0 %956
  %v958 = vrcp.pop %v954
  %v959 = vrcp.pop %v957
  %v960 = vmul.f32 %v949, %v958
  %v961 = vmul.f32 %v951, %v959
  %v963 = vsel %vm278, %v960, 0
  %v966 = vsel %vm278, %v961, 0
  %968 = vmatpush.msra.mxu0 0.0
  %969 = vmatpush.msra.mxu0 0.0
  %970 = vmatpush.msra.mxu0 0.0
  %971 = vmatpush.msra.mxu0 0.0
  %972 = vmatpush.msra.mxu0 0.0
  %973 = vmatpush.msra.mxu0 0.0
  %974 = vmatpush.msra.mxu0 0.0
  %975 = vmatpush.msra.mxu0 0.0
  %976 = vmatpush.msra.mxu0 0.0
  %977 = vmatpush.msra.mxu0 0.0
  %978 = vmatpush.msra.mxu0 0.0
  %979 = vmatpush.msra.mxu0 0.0
  %980 = vmatpush.msra.mxu0 0.0
  %981 = vmatpush.msra.mxu0 0.0
  %982 = vmatpush.msra.mxu0 %v899
  %983 = vmatpush.msra.mxu0 %v896
  %984 = vmatmul.f32.gmra.mxu0 %v963
  %v985 = vpop.f32.mrf.mxu0
  %v986 = vadd.f32 0.0, %v985
  %987 = vmatmul.f32.gmra.mxu0 %v966
  %v988 = vpop.f32.mrf.mxu0
  %v989 = vadd.f32 0.0, %v988
  %990 = vdwg.mxu0
  %s991 = scalar_lea.vmem %s10, 24
  %v992 = vld [vmem:[%s991] sm:$0xff]
  %v994 = vsel %vm238, %v986, 0
  %v997 = vsel %vm238, %v989, 0
  %999 = vmatpush.msra.mxu0 0.0
  %1000 = vmatpush.msra.mxu0 0.0
  %1001 = vmatpush.msra.mxu0 0.0
  %1002 = vmatpush.msra.mxu0 0.0
  %1003 = vmatpush.msra.mxu0 0.0
  %1004 = vmatpush.msra.mxu0 0.0
  %1005 = vmatpush.msra.mxu0 0.0
  %1006 = vmatpush.msra.mxu0 0.0
  %1007 = vmatpush.msra.mxu0 0.0
  %1008 = vmatpush.msra.mxu0 0.0
  %1009 = vmatpush.msra.mxu0 0.0
  %1010 = vmatpush.msra.mxu0 0.0
  %1011 = vmatpush.msra.mxu0 0.0
  %1012 = vmatpush.msra.mxu0 0.0
  %1013 = vmatpush.msra.mxu0 0.0
  %1014 = vmatpush.msra.mxu0 %v992
  %1015 = vmatmul.f32.gmra.mxu0 %v994
  %v1016 = vpop.f32.mrf.mxu0
  %v1017 = vadd.f32 0.0, %v1016
  %1018 = vmatmul.f32.gmra.mxu0 %v997
  %v1019 = vpop.f32.mrf.mxu0
  %v1020 = vadd.f32 0.0, %v1019
  %1021 = vdwg.mxu0
  %v1022 = vadd.f32 %v800, %v1017
  %v1023 = vadd.f32 %v801, %v1020
  %v1024 = vld [vmem:[%s11] sm:$0x1]
  %v1026 = vperm.slane %v1024, 0
  %v1028 = vadd.f32 %v1022, %v1026
  %v1029 = vadd.f32 %v1023, %v1026
  %v1030 = vadd.f32 %v135, %v1028
  %v1031 = vadd.f32 %v136, %v1029
  %v1032 = vld [vmem:[%s12] sm:$0x1]
  %v1033 = vld [vmem:[%s13] sm:$0x1]
  %v1034 = vsel %vm75, %v1030, 0.0
  %1035 = vadd.xlane.f32.xlu0 %v1034
  %v1036 = vpop.xlane.xlu0 %1035
  %v1037 = vsel %vm75, %v1031, 0.0
  %1038 = vadd.xlane.f32.xlu0 %v1037
  %v1039 = vpop.xlane.xlu0 %1038
  %v1040 = vmul.f32 %v1036, %v88
  %v1041 = vmul.f32 %v1039, %v88
  %v1042 = vsub.f32 %v1030, %v1040
  %v1043 = vsub.f32 %v1031, %v1041
  %v1044 = vmul.f32 %v1042, %v1042
  %v1045 = vmul.f32 %v1043, %v1043
  %v1046 = vsel %vm75, %v1044, 0.0
  %1047 = vadd.xlane.f32.xlu0 %v1046
  %v1048 = vpop.xlane.xlu0 %1047
  %v1049 = vsel %vm75, %v1045, 0.0
  %1050 = vadd.xlane.f32.xlu0 %v1049
  %v1051 = vpop.xlane.xlu0 %1050
  %v1052 = vmul.f32 %v1048, %v88
  %v1053 = vmul.f32 %v1051, %v88
  %v1054 = vadd.f32 %v1052, 1e-12
  %v1055 = vadd.f32 %v1053, 1e-12
  %v1056 = vrsqrt.pop %v1054
  %v1057 = vmul.f32 %v1056, %v1054
  %v1058 = vmul.f32 %v1057, %v1056
  %v1059 = vmul.f32 0.5, %v1058
  %v1060 = vsub.f32 1.5, %v1059
  %v1061 = vmul.f32 %v1056, %v1060
  %vm1062 = vweird.f32 %v1054
  %vm1063 = vweird.f32 %v1056
  %vm1064 = vmor %vm1062, %vm1063
  %v1065 = vsel %vm1064, %v1056, %v1061
  %v1066 = vrsqrt.pop %v1055
  %v1067 = vmul.f32 %v1066, %v1055
  %v1068 = vmul.f32 %v1067, %v1066
  %v1069 = vmul.f32 0.5, %v1068
  %v1070 = vsub.f32 1.5, %v1069
  %v1071 = vmul.f32 %v1066, %v1070
  %vm1072 = vweird.f32 %v1055
  %vm1073 = vweird.f32 %v1066
  %vm1074 = vmor %vm1072, %vm1073
  %v1075 = vsel %vm1074, %v1066, %v1071
  %v1076 = vmul.f32 %v1042, %v1065
  %v1077 = vmul.f32 %v1043, %v1075
  %v1079 = vperm.slane %v1032, 0
  %v1081 = vmul.f32 %v1076, %v1079
  %v1082 = vmul.f32 %v1077, %v1079
  %v1084 = vperm.slane %v1033, 0
  %v1086 = vadd.f32 %v1081, %v1084
  %v1087 = vadd.f32 %v1082, %v1084
  %v1088 = vld [vmem:[%s14] sm:$0xff]
  %v1089 = vld [vmem:[%s14 + $0x8] sm:$0xff]
  %v1090 = vld [vmem:[%s14 + $0x10] sm:$0xff]
  %v1091 = vld [vmem:[%s14 + $0x18] sm:$0xff]
  %v1092 = vld [vmem:[%s15] sm:$0x1]
  %v1094 = vperm.slane %v1092, 0
  %v1097 = vsel %vm75, %v1086, 0
  %v1100 = vsel %vm75, %v1087, 0
  %1102 = vmatpush.msra.mxu0 0.0
  %1103 = vmatpush.msra.mxu0 0.0
  %1104 = vmatpush.msra.mxu0 0.0
  %1105 = vmatpush.msra.mxu0 0.0
  %1106 = vmatpush.msra.mxu0 0.0
  %1107 = vmatpush.msra.mxu0 0.0
  %1108 = vmatpush.msra.mxu0 0.0
  %1109 = vmatpush.msra.mxu0 0.0
  %1110 = vmatpush.msra.mxu0 0.0
  %1111 = vmatpush.msra.mxu0 0.0
  %1112 = vmatpush.msra.mxu0 0.0
  %1113 = vmatpush.msra.mxu0 0.0
  %1114 = vmatpush.msra.mxu0 %v1091
  %1115 = vmatpush.msra.mxu0 %v1090
  %1116 = vmatpush.msra.mxu0 %v1089
  %1117 = vmatpush.msra.mxu0 %v1088
  %1118 = vmatmul.f32.gmra.mxu0 %v1097
  %v1119 = vpop.f32.mrf.mxu0
  %v1120 = vadd.f32 %v1094, %v1119
  %1121 = vmatmul.f32.gmra.mxu0 %v1100
  %v1122 = vpop.f32.mrf.mxu0
  %v1123 = vadd.f32 %v1094, %v1122
  %1124 = vdwg.mxu0
  %v1125 = vmul.f32 %v1120, 0.5
  %v1126 = vmul.f32 %v1123, 0.5
  %v1127 = vmul.f32 %v1120, %v1120
  %v1128 = vmul.f32 %v1123, %v1123
  %v1129 = vmul.f32 %v1120, %v1127
  %v1130 = vmul.f32 %v1123, %v1128
  %v1131 = vmul.f32 %v1129, 0.044715
  %v1132 = vmul.f32 %v1130, 0.044715
  %v1133 = vadd.f32 %v1120, %v1131
  %v1134 = vadd.f32 %v1123, %v1132
  %v1135 = vmul.f32 %v1133, 0.7978846
  %v1136 = vmul.f32 %v1134, 0.7978846
  %v1137 = vtanh.pop %v1135
  %v1138 = vtanh.pop %v1136
  %v1139 = vadd.f32 %v1137, 1.0
  %v1140 = vadd.f32 %v1138, 1.0
  %v1141 = vmul.f32 %v1125, %v1139
  %v1142 = vmul.f32 %v1126, %v1140
  %v1143 = vld [vmem:[%s16] sm:$0xff]
  %v1144 = vld [vmem:[%s16 + $0x8] sm:$0xff]
  %v1145 = vld [vmem:[%s16 + $0x10] sm:$0xff]
  %v1146 = vld [vmem:[%s16 + $0x18] sm:$0xff]
  %v1147 = vld [vmem:[%s16 + $0x20] sm:$0xff]
  %v1148 = vld [vmem:[%s16 + $0x28] sm:$0xff]
  %v1149 = vld [vmem:[%s16 + $0x30] sm:$0xff]
  %v1150 = vld [vmem:[%s16 + $0x38] sm:$0xff]
  %v1151 = vld [vmem:[%s17] sm:$0x1]
  %v1153 = vperm.slane %v1151, 0
  %vm1155 = vcmask 523264
  %v1157 = vsel %vm1155, %v1141, 0
  %v1160 = vsel %vm1155, %v1142, 0
  %1162 = vmatpush.msra.mxu0 0.0
  %1163 = vmatpush.msra.mxu0 0.0
  %1164 = vmatpush.msra.mxu0 0.0
  %1165 = vmatpush.msra.mxu0 0.0
  %1166 = vmatpush.msra.mxu0 0.0
  %1167 = vmatpush.msra.mxu0 0.0
  %1168 = vmatpush.msra.mxu0 0.0
  %1169 = vmatpush.msra.mxu0 0.0
  %1170 = vmatpush.msra.mxu0 %v1150
  %1171 = vmatpush.msra.mxu0 %v1149
  %1172 = vmatpush.msra.mxu0 %v1148
  %1173 = vmatpush.msra.mxu0 %v1147
  %1174 = vmatpush.msra.mxu0 %v1146
  %1175 = vmatpush.msra.mxu0 %v1145
  %1176 = vmatpush.msra.mxu0 %v1144
  %1177 = vmatpush.msra.mxu0 %v1143
  %1178 = vmatmul.f32.gmra.mxu0 %v1157
  %v1179 = vpop.f32.mrf.mxu0
  %v1180 = vadd.f32 %v1153, %v1179
  %1181 = vmatmul.f32.gmra.mxu0 %v1160
  %v1182 = vpop.f32.mrf.mxu0
  %v1183 = vadd.f32 %v1153, %v1182
  %1184 = vdwg.mxu0
  %v1185 = vadd.f32 %v1086, %v1180
  %v1186 = vadd.f32 %v1087, %v1183
  %v1187 = vld [vmem:[%s18] sm:$0x1]
  %v1188 = vld [vmem:[%s19] sm:$0x1]
  %v1189 = vsel %vm75, %v1185, 0.0
  %1190 = vadd.xlane.f32.xlu0 %v1189
  %v1191 = vpop.xlane.xlu0 %1190
  %v1192 = vsel %vm75, %v1186, 0.0
  %1193 = vadd.xlane.f32.xlu0 %v1192
  %v1194 = vpop.xlane.xlu0 %1193
  %v1195 = vmul.f32 %v1191, %v88
  %v1196 = vmul.f32 %v1194, %v88
  %v1197 = vsub.f32 %v1185, %v1195
  %v1198 = vsub.f32 %v1186, %v1196
  %v1199 = vmul.f32 %v1197, %v1197
  %v1200 = vmul.f32 %v1198, %v1198
  %v1201 = vsel %vm75, %v1199, 0.0
  %1202 = vadd.xlane.f32.xlu0 %v1201
  %v1203 = vpop.xlane.xlu0 %1202
  %v1204 = vsel %vm75, %v1200, 0.0
  %1205 = vadd.xlane.f32.xlu0 %v1204
  %v1206 = vpop.xlane.xlu0 %1205
  %v1207 = vmul.f32 %v1203, %v88
  %v1208 = vmul.f32 %v1206, %v88
  %v1209 = vadd.f32 %v1207, 1e-12
  %v1210 = vadd.f32 %v1208, 1e-12
  %v1211 = vrsqrt.pop %v1209
  %v1212 = vmul.f32 %v1211, %v1209
  %v1213 = vmul.f32 %v1212, %v1211
  %v1214 = vmul.f32 0.5, %v1213
  %v1215 = vsub.f32 1.5, %v1214
  %v1216 = vmul.f32 %v1211, %v1215
  %vm1217 = vweird.f32 %v1209
  %vm1218 = vweird.f32 %v1211
  %vm1219 = vmor %vm1217, %vm1218
  %v1220 = vsel %vm1219, %v1211, %v1216
  %v1221 = vrsqrt.pop %v1210
  %v1222 = vmul.f32 %v1221, %v1210
  %v1223 = vmul.f32 %v1222, %v1221
  %v1224 = vmul.f32 0.5, %v1223
  %v1225 = vsub.f32 1.5, %v1224
  %v1226 = vmul.f32 %v1221, %v1225
  %vm1227 = vweird.f32 %v1210
  %vm1228 = vweird.f32 %v1221
  %vm1229 = vmor %vm1227, %vm1228
  %v1230 = vsel %vm1229, %v1221, %v1226
  %v1231 = vmul.f32 %v1197, %v1220
  %v1232 = vmul.f32 %v1198, %v1230
  %v1234 = vperm.slane %v1187, 0
  %v1236 = vmul.f32 %v1231, %v1234
  %v1237 = vmul.f32 %v1232, %v1234
  %v1239 = vperm.slane %v1188, 0
  %v1241 = vadd.f32 %v1236, %v1239
  %v1242 = vadd.f32 %v1237, %v1239
  %s1243 = scalar_lea.vmem %s4, 128
  %v1244 = vld [vmem:[%s1243] sm:$0xff]
  %v1245 = vld [vmem:[%s1243 + $0x8] sm:$0xff]
  %v1246 = vld [vmem:[%s1243 + $0x10] sm:$0xff]
  %v1247 = vld [vmem:[%s1243 + $0x18] sm:$0xff]
  %s1248 = scalar_lea.vmem %s5, 4
  %v1249 = vld [vmem:[%s1248] sm:$0x1]
  %v1251 = vperm.slane %v1249, 0
  %v1254 = vsel %vm75, %v1241, 0
  %v1257 = vsel %vm75, %v1242, 0
  %1259 = vmatpush.msra.mxu0 0.0
  %1260 = vmatpush.msra.mxu0 0.0
  %1261 = vmatpush.msra.mxu0 0.0
  %1262 = vmatpush.msra.mxu0 0.0
  %1263 = vmatpush.msra.mxu0 0.0
  %1264 = vmatpush.msra.mxu0 0.0
  %1265 = vmatpush.msra.mxu0 0.0
  %1266 = vmatpush.msra.mxu0 0.0
  %1267 = vmatpush.msra.mxu0 0.0
  %1268 = vmatpush.msra.mxu0 0.0
  %1269 = vmatpush.msra.mxu0 0.0
  %1270 = vmatpush.msra.mxu0 0.0
  %1271 = vmatpush.msra.mxu0 %v1247
  %1272 = vmatpush.msra.mxu0 %v1246
  %1273 = vmatpush.msra.mxu0 %v1245
  %1274 = vmatpush.msra.mxu0 %v1244
  %1275 = vmatmul.f32.gmra.mxu0 %v1254
  %v1276 = vpop.f32.mrf.mxu0
  %v1277 = vadd.f32 %v1251, %v1276
  %1278 = vmatmul.f32.gmra.mxu0 %v1257
  %v1279 = vpop.f32.mrf.mxu0
  %v1280 = vadd.f32 %v1251, %v1279
  %1281 = vdwg.mxu0
  %s1282 = scalar_lea.vmem %s6, 128
  %v1283 = vld [vmem:[%s1282] sm:$0xff]
  %v1284 = vld [vmem:[%s1282 + $0x8] sm:$0xff]
  %v1285 = vld [vmem:[%s1282 + $0x10] sm:$0xff]
  %v1286 = vld [vmem:[%s1282 + $0x18] sm:$0xff]
  %s1287 = scalar_lea.vmem %s7, 4
  %v1288 = vld [vmem:[%s1287] sm:$0x1]
  %v1290 = vperm.slane %v1288, 0
  %1292 = vmatpush.msra.mxu0 0.0
  %1293 = vmatpush.msra.mxu0 0.0
  %1294 = vmatpush.msra.mxu0 0.0
  %1295 = vmatpush.msra.mxu0 0.0
  %1296 = vmatpush.msra.mxu0 0.0
  %1297 = vmatpush.msra.mxu0 0.0
  %1298 = vmatpush.msra.mxu0 0.0
  %1299 = vmatpush.msra.mxu0 0.0
  %1300 = vmatpush.msra.mxu0 0.0
  %1301 = vmatpush.msra.mxu0 0.0
  %1302 = vmatpush.msra.mxu0 0.0
  %1303 = vmatpush.msra.mxu0 0.0
  %1304 = vmatpush.msra.mxu0 %v1286
  %1305 = vmatpush.msra.mxu0 %v1285
  %1306 = vmatpush.msra.mxu0 %v1284
  %1307 = vmatpush.msra.mxu0 %v1283
  %1308 = vmatmul.f32.gmra.mxu0 %v1254
  %v1309 = vpop.f32.mrf.mxu0
  %v1310 = vadd.f32 %v1290, %v1309
  %1311 = vmatmul.f32.gmra.mxu0 %v1257
  %v1312 = vpop.f32.mrf.mxu0
  %v1313 = vadd.f32 %v1290, %v1312
  %1314 = vdwg.mxu0
  %s1315 = scalar_lea.vmem %s8, 128
  %v1316 = vld [vmem:[%s1315] sm:$0xff]
  %v1317 = vld [vmem:[%s1315 + $0x8] sm:$0xff]
  %v1318 = vld [vmem:[%s1315 + $0x10] sm:$0xff]
  %v1319 = vld [vmem:[%s1315 + $0x18] sm:$0xff]
  %s1320 = scalar_lea.vmem %s9, 4
  %v1321 = vld [vmem:[%s1320] sm:$0x1]
  %v1323 = vperm.slane %v1321, 0
  %1325 = vmatpush.msra.mxu0 0.0
  %1326 = vmatpush.msra.mxu0 0.0
  %1327 = vmatpush.msra.mxu0 0.0
  %1328 = vmatpush.msra.mxu0 0.0
  %1329 = vmatpush.msra.mxu0 0.0
  %1330 = vmatpush.msra.mxu0 0.0
  %1331 = vmatpush.msra.mxu0 0.0
  %1332 = vmatpush.msra.mxu0 0.0
  %1333 = vmatpush.msra.mxu0 0.0
  %1334 = vmatpush.msra.mxu0 0.0
  %1335 = vmatpush.msra.mxu0 0.0
  %1336 = vmatpush.msra.mxu0 0.0
  %1337 = vmatpush.msra.mxu0 %v1319
  %1338 = vmatpush.msra.mxu0 %v1318
  %1339 = vmatpush.msra.mxu0 %v1317
  %1340 = vmatpush.msra.mxu0 %v1316
  %1341 = vmatmul.f32.gmra.mxu0 %v1254
  %v1342 = vpop.f32.mrf.mxu0
  %v1343 = vadd.f32 %v1323, %v1342
  %1344 = vmatmul.f32.gmra.mxu0 %v1257
  %v1345 = vpop.f32.mrf.mxu0
  %v1346 = vadd.f32 %v1323, %v1345
  %1347 = vdwg.mxu0
  %v1349 = vsel %vm238, %v1277, 0
  %v1352 = vsel %vm238, %v1280, 0
  %v1355 = vsel %vm238, %v1310, 0
  %v1358 = vsel %vm238, %v1313, 0
  %1360 = vmatpush.xpose.msra.mxu0 0.0
  %1361 = vmatpush.xpose.msra.mxu0 0.0
  %1362 = vmatpush.xpose.msra.mxu0 0.0
  %1363 = vmatpush.xpose.msra.mxu0 0.0
  %1364 = vmatpush.xpose.msra.mxu0 0.0
  %1365 = vmatpush.xpose.msra.mxu0 0.0
  %1366 = vmatpush.xpose.msra.mxu0 0.0
  %1367 = vmatpush.xpose.msra.mxu0 0.0
  %1368 = vmatpush.xpose.msra.mxu0 0.0
  %1369 = vmatpush.xpose.msra.mxu0 0.0
  %1370 = vmatpush.xpose.msra.mxu0 0.0
  %1371 = vmatpush.xpose.msra.mxu0 0.0
  %1372 = vmatpush.xpose.msra.mxu0 0.0
  %1373 = vmatpush.xpose.msra.mxu0 0.0
  %1374 = vmatpush.xpose.msra.mxu0 %v1358
  %1375 = vmatpush.xpose.msra.mxu0 %v1355
  %1376 = vmatmul.f32.gmra.mxu0 %v1349
  %v1377 = vpop.f32.mrf.mxu0
  %v1378 = vadd.f32 0.0, %v1377
  %1379 = vmatmul.f32.gmra.mxu0 %v1352
  %v1380 = vpop.f32.mrf.mxu0
  %v1381 = vadd.f32 0.0, %v1380
  %1382 = vdwg.mxu0
  %v1383 = vmul.f32 %v1378, 0.35355338
  %v1384 = vmul.f32 %v1381, 0.35355338
  %v1385 = vadd.f32 %v1383, %v137
  %v1386 = vadd.f32 %v1384, %v138
  %v1387 = vsel %vm278, %v1385, -inf
  %1388 = vmax.xlane.f32.xlu0 %v1387
  %v1389 = vpop.xlane.xlu0 %1388
  %v1390 = vsel %vm278, %v1386, -inf
  %1391 = vmax.xlane.f32.xlu0 %v1390
  %v1392 = vpop.xlane.xlu0 %1391
  %v1393 = vsub.f32 %v1385, %v1389
  %v1394 = vsub.f32 %v1386, %v1392
  %v1395 = vmul.f32 %v1393, 1.442695
  %v1396 = vpow.pop %v1395
  %v1397 = vmul.f32 %v1394, 1.442695
  %v1398 = vpow.pop %v1397
  %v1399 = vsel %vm278, %v1396, 0.0
  %1400 = vadd.xlane.f32.xlu0 %v1399
  %v1401 = vpop.xlane.xlu0 %1400
  %v1402 = vsel %vm278, %v1398, 0.0
  %1403 = vadd.xlane.f32.xlu0 %v1402
  %v1404 = vpop.xlane.xlu0 %1403
  %v1405 = vrcp.pop %v1401
  %v1406 = vrcp.pop %v1404
  %v1407 = vmul.f32 %v1396, %v1405
  %v1408 = vmul.f32 %v1398, %v1406
  %v1410 = vsel %vm278, %v1407, 0
  %v1413 = vsel %vm278, %v1408, 0
  %1415 = vmatpush.msra.mxu0 0.0
  %1416 = vmatpush.msra.mxu0 0.0
  %1417 = vmatpush.msra.mxu0 0.0
  %1418 = vmatpush.msra.mxu0 0.0
  %1419 = vmatpush.msra.mxu0 0.0
  %1420 = vmatpush.msra.mxu0 0.0
  %1421 = vmatpush.msra.mxu0 0.0
  %1422 = vmatpush.msra.mxu0 0.0
  %1423 = vmatpush.msra.mxu0 0.0
  %1424 = vmatpush.msra.mxu0 0.0
  %1425 = vmatpush.msra.mxu0 0.0
  %1426 = vmatpush.msra.mxu0 0.0
  %1427 = vmatpush.msra.mxu0 0.0
  %1428 = vmatpush.msra.mxu0 0.0
  %1429 = vmatpush.msra.mxu0 %v1346
  %1430 = vmatpush.msra.mxu0 %v1343
  %1431 = vmatmul.f32.gmra.mxu0 %v1410
  %v1432 = vpop.f32.mrf.mxu0
  %v1433 = vadd.f32 0.0, %v1432
  %1434 = vmatmul.f32.gmra.mxu0 %v1413
  %v1435 = vpop.f32.mrf.mxu0
  %v1436 = vadd.f32 0.0, %v1435
  %1437 = vdwg.mxu0
  %s1438 = scalar_lea.vmem %s10, 32
  %v1439 = vld [vmem:[%s1438] sm:$0xff]
  %s1440 = scalar_lea.vmem %s4, 160
  %v1441 = vld [vmem:[%s1440] sm:$0xff]
  %v1442 = vld [vmem:[%s1440 + $0x8] sm:$0xff]
  %v1443 = vld [vmem:[%s1440 + $0x10] sm:$0xff]
  %v1444 = vld [vmem:[%s1440 + $0x18] sm:$0xff]
  %s1445 = scalar_lea.vmem %s5, 5
  %v1446 = vld [vmem:[%s1445] sm:$0x1]
  %v1448 = vperm.slane %v1446, 0
  %1450 = vmatpush.msra.mxu0 0.0
  %1451 = vmatpush.msra.mxu0 0.0
  %1452 = vmatpush.msra.mxu0 0.0
  %1453 = vmatpush.msra.mxu0 0.0
  %1454 = vmatpush.msra.mxu0 0.0
  %1455 = vmatpush.msra.mxu0 0.0
  %1456 = vmatpush.msra.mxu0 0.0
  %1457 = vmatpush.msra.mxu0 0.0
  %1458 = vmatpush.msra.mxu0 0.0
  %1459 = vmatpush.msra.mxu0 0.0
  %1460 = vmatpush.msra.mxu0 0.0
  %1461 = vmatpush.msra.mxu0 0.0
  %1462 = vmatpush.msra.mxu0 %v1444
  %1463 = vmatpush.msra.mxu0 %v1443
  %1464 = vmatpush.msra.mxu0 %v1442
  %1465 = vmatpush.msra.mxu0 %v1441
  %1466 = vmatmul.f32.gmra.mxu0 %v1254
  %v1467 = vpop.f32.mrf.mxu0
  %v1468 = vadd.f32 %v1448, %v1467
  %1469 = vmatmul.f32.gmra.mxu0 %v1257
  %v1470 = vpop.f32.mrf.mxu0
  %v1471 = vadd.f32 %v1448, %v1470
  %1472 = vdwg.mxu0
  %s1473 = scalar_lea.vmem %s6, 160
  %v1474 = vld [vmem:[%s1473] sm:$0xff]
  %v1475 = vld [vmem:[%s1473 + $0x8] sm:$0xff]
  %v1476 = vld [vmem:[%s1473 + $0x10] sm:$0xff]
  %v1477 = vld [vmem:[%s1473 + $0x18] sm:$0xff]
  %s1478 = scalar_lea.vmem %s7, 5
  %v1479 = vld [vmem:[%s1478] sm:$0x1]
  %v1481 = vperm.slane %v1479, 0
  %1483 = vmatpush.msra.mxu0 0.0
  %1484 = vmatpush.msra.mxu0 0.0
  %1485 = vmatpush.msra.mxu0 0.0
  %1486 = vmatpush.msra.mxu0 0.0
  %1487 = vmatpush.msra.mxu0 0.0
  %1488 = vmatpush.msra.mxu0 0.0
  %1489 = vmatpush.msra.mxu0 0.0
  %1490 = vmatpush.msra.mxu0 0.0
  %1491 = vmatpush.msra.mxu0 0.0
  %1492 = vmatpush.msra.mxu0 0.0
  %1493 = vmatpush.msra.mxu0 0.0
  %1494 = vmatpush.msra.mxu0 0.0
  %1495 = vmatpush.msra.mxu0 %v1477
  %1496 = vmatpush.msra.mxu0 %v1476
  %1497 = vmatpush.msra.mxu0 %v1475
  %1498 = vmatpush.msra.mxu0 %v1474
  %1499 = vmatmul.f32.gmra.mxu0 %v1254
  %v1500 = vpop.f32.mrf.mxu0
  %v1501 = vadd.f32 %v1481, %v1500
  %1502 = vmatmul.f32.gmra.mxu0 %v1257
  %v1503 = vpop.f32.mrf.mxu0
  %v1504 = vadd.f32 %v1481, %v1503
  %1505 = vdwg.mxu0
  %s1506 = scalar_lea.vmem %s8, 160
  %v1507 = vld [vmem:[%s1506] sm:$0xff]
  %v1508 = vld [vmem:[%s1506 + $0x8] sm:$0xff]
  %v1509 = vld [vmem:[%s1506 + $0x10] sm:$0xff]
  %v1510 = vld [vmem:[%s1506 + $0x18] sm:$0xff]
  %s1511 = scalar_lea.vmem %s9, 5
  %v1512 = vld [vmem:[%s1511] sm:$0x1]
  %v1514 = vperm.slane %v1512, 0
  %1516 = vmatpush.msra.mxu0 0.0
  %1517 = vmatpush.msra.mxu0 0.0
  %1518 = vmatpush.msra.mxu0 0.0
  %1519 = vmatpush.msra.mxu0 0.0
  %1520 = vmatpush.msra.mxu0 0.0
  %1521 = vmatpush.msra.mxu0 0.0
  %1522 = vmatpush.msra.mxu0 0.0
  %1523 = vmatpush.msra.mxu0 0.0
  %1524 = vmatpush.msra.mxu0 0.0
  %1525 = vmatpush.msra.mxu0 0.0
  %1526 = vmatpush.msra.mxu0 0.0
  %1527 = vmatpush.msra.mxu0 0.0
  %1528 = vmatpush.msra.mxu0 %v1510
  %1529 = vmatpush.msra.mxu0 %v1509
  %1530 = vmatpush.msra.mxu0 %v1508
  %1531 = vmatpush.msra.mxu0 %v1507
  %1532 = vmatmul.f32.gmra.mxu0 %v1254
  %v1533 = vpop.f32.mrf.mxu0
  %v1534 = vadd.f32 %v1514, %v1533
  %1535 = vmatmul.f32.gmra.mxu0 %v1257
  %v1536 = vpop.f32.mrf.mxu0
  %v1537 = vadd.f32 %v1514, %v1536
  %1538 = vdwg.mxu0
  %v1540 = vsel %vm238, %v1468, 0
  %v1543 = vsel %vm238, %v1471, 0
  %v1546 = vsel %vm238, %v1501, 0
  %v1549 = vsel %vm238, %v1504, 0
  %1551 = vmatpush.xpose.msra.mxu0 0.0
  %1552 = vmatpush.xpose.msra.mxu0 0.0
  %1553 = vmatpush.xpose.msra.mxu0 0.0
  %1554 = vmatpush.xpose.msra.mxu0 0.0
  %1555 = vmatpush.xpose.msra.mxu0 0.0
  %1556 = vmatpush.xpose.msra.mxu0 0.0
  %1557 = vmatpush.xpose.msra.mxu0 0.0
  %1558 = vmatpush.xpose.msra.mxu0 0.0
  %1559 = vmatpush.xpose.msra.mxu0 0.0
  %1560 = vmatpush.xpose.msra.mxu0 0.0
  %1561 = vmatpush.xpose.msra.mxu0 0.0
  %1562 = vmatpush.xpose.msra.mxu0 0.0
  %1563 = vmatpush.xpose.msra.mxu0 0.0
  %1564 = vmatpush.xpose.msra.mxu0 0.0
  %1565 = vmatpush.xpose.msra.mxu0 %v1549
  %1566 = vmatpush.xpose.msra.mxu0 %v1546
  %1567 = vmatmul.f32.gmra.mxu0 %v1540
  %v1568 = vpop.f32.mrf.mxu0
  %v1569 = vadd.f32 0.0, %v1568
  %1570 = vmatmul.f32.gmra.mxu0 %v1543
  %v1571 = vpop.f32.mrf.mxu0
  %v1572 = vadd.f32 0.0, %v1571
  %1573 = vdwg.mxu0
  %v1574 = vmul.f32 %v1569, 0.35355338
  %v1575 = vmul.f32 %v1572, 0.35355338
  %v1576 = vadd.f32 %v1574, %v137
  %v1577 = vadd.f32 %v1575, %v138
  %v1578 = vsel %vm278, %v1576, -inf
  %1579 = vmax.xlane.f32.xlu0 %v1578
  %v1580 = vpop.xlane.xlu0 %1579
  %v1581 = vsel %vm278, %v1577, -inf
  %1582 = vmax.xlane.f32.xlu0 %v1581
  %v1583 = vpop.xlane.xlu0 %1582
  %v1584 = vsub.f32 %v1576, %v1580
  %v1585 = vsub.f32 %v1577, %v1583
  %v1586 = vmul.f32 %v1584, 1.442695
  %v1587 = vpow.pop %v1586
  %v1588 = vmul.f32 %v1585, 1.442695
  %v1589 = vpow.pop %v1588
  %v1590 = vsel %vm278, %v1587, 0.0
  %1591 = vadd.xlane.f32.xlu0 %v1590
  %v1592 = vpop.xlane.xlu0 %1591
  %v1593 = vsel %vm278, %v1589, 0.0
  %1594 = vadd.xlane.f32.xlu0 %v1593
  %v1595 = vpop.xlane.xlu0 %1594
  %v1596 = vrcp.pop %v1592
  %v1597 = vrcp.pop %v1595
  %v1598 = vmul.f32 %v1587, %v1596
  %v1599 = vmul.f32 %v1589, %v1597
  %v1601 = vsel %vm278, %v1598, 0
  %v1604 = vsel %vm278, %v1599, 0
  %1606 = vmatpush.msra.mxu0 0.0
  %1607 = vmatpush.msra.mxu0 0.0
  %1608 = vmatpush.msra.mxu0 0.0
  %1609 = vmatpush.msra.mxu0 0.0
  %1610 = vmatpush.msra.mxu0 0.0
  %1611 = vmatpush.msra.mxu0 0.0
  %1612 = vmatpush.msra.mxu0 0.0
  %1613 = vmatpush.msra.mxu0 0.0
  %1614 = vmatpush.msra.mxu0 0.0
  %1615 = vmatpush.msra.mxu0 0.0
  %1616 = vmatpush.msra.mxu0 0.0
  %1617 = vmatpush.msra.mxu0 0.0
  %1618 = vmatpush.msra.mxu0 0.0
  %1619 = vmatpush.msra.mxu0 0.0
  %1620 = vmatpush.msra.mxu0 %v1537
  %1621 = vmatpush.msra.mxu0 %v1534
  %1622 = vmatmul.f32.gmra.mxu0 %v1601
  %v1623 = vpop.f32.mrf.mxu0
  %v1624 = vadd.f32 0.0, %v1623
  %1625 = vmatmul.f32.gmra.mxu0 %v1604
  %v1626 = vpop.f32.mrf.mxu0
  %v1627 = vadd.f32 0.0, %v1626
  %1628 = vdwg.mxu0
  %s1629 = scalar_lea.vmem %s10, 40
  %v1630 = vld [vmem:[%s1629] sm:$0xff]
  %v1632 = vsel %vm238, %v1624, 0
  %v1635 = vsel %vm238, %v1627, 0
  %1637 = vmatpush.msra.mxu0 0.0
  %1638 = vmatpush.msra.mxu0 0.0
  %1639 = vmatpush.msra.mxu0 0.0
  %1640 = vmatpush.msra.mxu0 0.0
  %1641 = vmatpush.msra.mxu0 0.0
  %1642 = vmatpush.msra.mxu0 0.0
  %1643 = vmatpush.msra.mxu0 0.0
  %1644 = vmatpush.msra.mxu0 0.0
  %1645 = vmatpush.msra.mxu0 0.0
  %1646 = vmatpush.msra.mxu0 0.0
  %1647 = vmatpush.msra.mxu0 0.0
  %1648 = vmatpush.msra.mxu0 0.0
  %1649 = vmatpush.msra.mxu0 0.0
  %1650 = vmatpush.msra.mxu0 0.0
  %1651 = vmatpush.msra.mxu0 0.0
  %1652 = vmatpush.msra.mxu0 %v1630
  %1653 = vmatmul.f32.gmra.mxu0 %v1632
  %v1654 = vpop.f32.mrf.mxu0
  %v1655 = vadd.f32 0.0, %v1654
  %1656 = vmatmul.f32.gmra.mxu0 %v1635
  %v1657 = vpop.f32.mrf.mxu0
  %v1658 = vadd.f32 0.0, %v1657
  %1659 = vdwg.mxu0
  %v1661 = vsel %vm238, %v1433, 0
  %v1664 = vsel %vm238, %v1436, 0
  %1666 = vmatpush.msra.mxu0 0.0
  %1667 = vmatpush.msra.mxu0 0.0
  %1668 = vmatpush.msra.mxu0 0.0
  %1669 = vmatpush.msra.mxu0 0.0
  %1670 = vmatpush.msra.mxu0 0.0
  %1671 = vmatpush.msra.mxu0 0.0
  %1672 = vmatpush.msra.mxu0 0.0
  %1673 = vmatpush.msra.mxu0 0.0
  %1674 = vmatpush.msra.mxu0 0.0
  %1675 = vmatpush.msra.mxu0 0.0
  %1676 = vmatpush.msra.mxu0 0.0
  %1677 = vmatpush.msra.mxu0 0.0
  %1678 = vmatpush.msra.mxu0 0.0
  %1679 = vmatpush.msra.mxu0 0.0
  %1680 = vmatpush.msra.mxu0 0.0
  %1681 = vmatpush.msra.mxu0 %v1439
  %1682 = vmatmul.f32.gmra.mxu0 %v1661
  %v1683 = vpop.f32.mrf.mxu0
  %v1684 = vadd.f32 %v1655, %v1683
  %1685 = vmatmul.f32.gmra.mxu0 %v1664
  %v1686 = vpop.f32.mrf.mxu0
  %v1687 = vadd.f32 %v1658, %v1686
  %1688 = vdwg.mxu0
  %s1689 = scalar_lea.vmem %s4, 192
  %v1690 = vld [vmem:[%s1689] sm:$0xff]
  %v1691 = vld [vmem:[%s1689 + $0x8] sm:$0xff]
  %v1692 = vld [vmem:[%s1689 + $0x10] sm:$0xff]
  %v1693 = vld [vmem:[%s1689 + $0x18] sm:$0xff]
  %s1694 = scalar_lea.vmem %s5, 6
  %v1695 = vld [vmem:[%s1694] sm:$0x1]
  %v1697 = vperm.slane %v1695, 0
  %1699 = vmatpush.msra.mxu0 0.0
  %1700 = vmatpush.msra.mxu0 0.0
  %1701 = vmatpush.msra.mxu0 0.0
  %1702 = vmatpush.msra.mxu0 0.0
  %1703 = vmatpush.msra.mxu0 0.0
  %1704 = vmatpush.msra.mxu0 0.0
  %1705 = vmatpush.msra.mxu0 0.0
  %1706 = vmatpush.msra.mxu0 0.0
  %1707 = vmatpush.msra.mxu0 0.0
  %1708 = vmatpush.msra.mxu0 0.0
  %1709 = vmatpush.msra.mxu0 0.0
  %1710 = vmatpush.msra.mxu0 0.0
  %1711 = vmatpush.msra.mxu0 %v1693
  %1712 = vmatpush.msra.mxu0 %v1692
  %1713 = vmatpush.msra.mxu0 %v1691
  %1714 = vmatpush.msra.mxu0 %v1690
  %1715 = vmatmul.f32.gmra.mxu0 %v1254
  %v1716 = vpop.f32.mrf.mxu0
  %v1717 = vadd.f32 %v1697, %v1716
  %1718 = vmatmul.f32.gmra.mxu0 %v1257
  %v1719 = vpop.f32.mrf.mxu0
  %v1720 = vadd.f32 %v1697, %v1719
  %1721 = vdwg.mxu0
  %s1722 = scalar_lea.vmem %s6, 192
  %v1723 = vld [vmem:[%s1722] sm:$0xff]
  %v1724 = vld [vmem:[%s1722 + $0x8] sm:$0xff]
  %v1725 = vld [vmem:[%s1722 + $0x10] sm:$0xff]
  %v1726 = vld [vmem:[%s1722 + $0x18] sm:$0xff]
  %s1727 = scalar_lea.vmem %s7, 6
  %v1728 = vld [vmem:[%s1727] sm:$0x1]
  %v1730 = vperm.slane %v1728, 0
  %1732 = vmatpush.msra.mxu0 0.0
  %1733 = vmatpush.msra.mxu0 0.0
  %1734 = vmatpush.msra.mxu0 0.0
  %1735 = vmatpush.msra.mxu0 0.0
  %1736 = vmatpush.msra.mxu0 0.0
  %1737 = vmatpush.msra.mxu0 0.0
  %1738 = vmatpush.msra.mxu0 0.0
  %1739 = vmatpush.msra.mxu0 0.0
  %1740 = vmatpush.msra.mxu0 0.0
  %1741 = vmatpush.msra.mxu0 0.0
  %1742 = vmatpush.msra.mxu0 0.0
  %1743 = vmatpush.msra.mxu0 0.0
  %1744 = vmatpush.msra.mxu0 %v1726
  %1745 = vmatpush.msra.mxu0 %v1725
  %1746 = vmatpush.msra.mxu0 %v1724
  %1747 = vmatpush.msra.mxu0 %v1723
  %1748 = vmatmul.f32.gmra.mxu0 %v1254
  %v1749 = vpop.f32.mrf.mxu0
  %v1750 = vadd.f32 %v1730, %v1749
  %1751 = vmatmul.f32.gmra.mxu0 %v1257
  %v1752 = vpop.f32.mrf.mxu0
  %v1753 = vadd.f32 %v1730, %v1752
  %1754 = vdwg.mxu0
  %s1755 = scalar_lea.vmem %s8, 192
  %v1756 = vld [vmem:[%s1755] sm:$0xff]
  %v1757 = vld [vmem:[%s1755 + $0x8] sm:$0xff]
  %v1758 = vld [vmem:[%s1755 + $0x10] sm:$0xff]
  %v1759 = vld [vmem:[%s1755 + $0x18] sm:$0xff]
  %s1760 = scalar_lea.vmem %s9, 6
  %v1761 = vld [vmem:[%s1760] sm:$0x1]
  %v1763 = vperm.slane %v1761, 0
  %1765 = vmatpush.msra.mxu0 0.0
  %1766 = vmatpush.msra.mxu0 0.0
  %1767 = vmatpush.msra.mxu0 0.0
  %1768 = vmatpush.msra.mxu0 0.0
  %1769 = vmatpush.msra.mxu0 0.0
  %1770 = vmatpush.msra.mxu0 0.0
  %1771 = vmatpush.msra.mxu0 0.0
  %1772 = vmatpush.msra.mxu0 0.0
  %1773 = vmatpush.msra.mxu0 0.0
  %1774 = vmatpush.msra.mxu0 0.0
  %1775 = vmatpush.msra.mxu0 0.0
  %1776 = vmatpush.msra.mxu0 0.0
  %1777 = vmatpush.msra.mxu0 %v1759
  %1778 = vmatpush.msra.mxu0 %v1758
  %1779 = vmatpush.msra.mxu0 %v1757
  %1780 = vmatpush.msra.mxu0 %v1756
  %1781 = vmatmul.f32.gmra.mxu0 %v1254
  %v1782 = vpop.f32.mrf.mxu0
  %v1783 = vadd.f32 %v1763, %v1782
  %1784 = vmatmul.f32.gmra.mxu0 %v1257
  %v1785 = vpop.f32.mrf.mxu0
  %v1786 = vadd.f32 %v1763, %v1785
  %1787 = vdwg.mxu0
  %v1789 = vsel %vm238, %v1717, 0
  %v1792 = vsel %vm238, %v1720, 0
  %v1795 = vsel %vm238, %v1750, 0
  %v1798 = vsel %vm238, %v1753, 0
  %1800 = vmatpush.xpose.msra.mxu0 0.0
  %1801 = vmatpush.xpose.msra.mxu0 0.0
  %1802 = vmatpush.xpose.msra.mxu0 0.0
  %1803 = vmatpush.xpose.msra.mxu0 0.0
  %1804 = vmatpush.xpose.msra.mxu0 0.0
  %1805 = vmatpush.xpose.msra.mxu0 0.0
  %1806 = vmatpush.xpose.msra.mxu0 0.0
  %1807 = vmatpush.xpose.msra.mxu0 0.0
  %1808 = vmatpush.xpose.msra.mxu0 0.0
  %1809 = vmatpush.xpose.msra.mxu0 0.0
  %1810 = vmatpush.xpose.msra.mxu0 0.0
  %1811 = vmatpush.xpose.msra.mxu0 0.0
  %1812 = vmatpush.xpose.msra.mxu0 0.0
  %1813 = vmatpush.xpose.msra.mxu0 0.0
  %1814 = vmatpush.xpose.msra.mxu0 %v1798
  %1815 = vmatpush.xpose.msra.mxu0 %v1795
  %1816 = vmatmul.f32.gmra.mxu0 %v1789
  %v1817 = vpop.f32.mrf.mxu0
  %v1818 = vadd.f32 0.0, %v1817
  %1819 = vmatmul.f32.gmra.mxu0 %v1792
  %v1820 = vpop.f32.mrf.mxu0
  %v1821 = vadd.f32 0.0, %v1820
  %1822 = vdwg.mxu0
  %v1823 = vmul.f32 %v1818, 0.35355338
  %v1824 = vmul.f32 %v1821, 0.35355338
  %v1825 = vadd.f32 %v1823, %v137
  %v1826 = vadd.f32 %v1824, %v138
  %v1827 = vsel %vm278, %v1825, -inf
  %1828 = vmax.xlane.f32.xlu0 %v1827
  %v1829 = vpop.xlane.xlu0 %1828
  %v1830 = vsel %vm278, %v1826, -inf
  %1831 = vmax.xlane.f32.xlu0 %v1830
  %v1832 = vpop.xlane.xlu0 %1831
  %v1833 = vsub.f32 %v1825, %v1829
  %v1834 = vsub.f32 %v1826, %v1832
  %v1835 = vmul.f32 %v1833, 1.442695
  %v1836 = vpow.pop %v1835
  %v1837 = vmul.f32 %v1834, 1.442695
  %v1838 = vpow.pop %v1837
  %v1839 = vsel %vm278, %v1836, 0.0
  %1840 = vadd.xlane.f32.xlu0 %v1839
  %v1841 = vpop.xlane.xlu0 %1840
  %v1842 = vsel %vm278, %v1838, 0.0
  %1843 = vadd.xlane.f32.xlu0 %v1842
  %v1844 = vpop.xlane.xlu0 %1843
  %v1845 = vrcp.pop %v1841
  %v1846 = vrcp.pop %v1844
  %v1847 = vmul.f32 %v1836, %v1845
  %v1848 = vmul.f32 %v1838, %v1846
  %v1850 = vsel %vm278, %v1847, 0
  %v1853 = vsel %vm278, %v1848, 0
  %1855 = vmatpush.msra.mxu0 0.0
  %1856 = vmatpush.msra.mxu0 0.0
  %1857 = vmatpush.msra.mxu0 0.0
  %1858 = vmatpush.msra.mxu0 0.0
  %1859 = vmatpush.msra.mxu0 0.0
  %1860 = vmatpush.msra.mxu0 0.0
  %1861 = vmatpush.msra.mxu0 0.0
  %1862 = vmatpush.msra.mxu0 0.0
  %1863 = vmatpush.msra.mxu0 0.0
  %1864 = vmatpush.msra.mxu0 0.0
  %1865 = vmatpush.msra.mxu0 0.0
  %1866 = vmatpush.msra.mxu0 0.0
  %1867 = vmatpush.msra.mxu0 0.0
  %1868 = vmatpush.msra.mxu0 0.0
  %1869 = vmatpush.msra.mxu0 %v1786
  %1870 = vmatpush.msra.mxu0 %v1783
  %1871 = vmatmul.f32.gmra.mxu0 %v1850
  %v1872 = vpop.f32.mrf.mxu0
  %v1873 = vadd.f32 0.0, %v1872
  %1874 = vmatmul.f32.gmra.mxu0 %v1853
  %v1875 = vpop.f32.mrf.mxu0
  %v1876 = vadd.f32 0.0, %v1875
  %1877 = vdwg.mxu0
  %s1878 = scalar_lea.vmem %s10, 48
  %v1879 = vld [vmem:[%s1878] sm:$0xff]
  %v1881 = vsel %vm238, %v1873, 0
  %v1884 = vsel %vm238, %v1876, 0
  %1886 = vmatpush.msra.mxu0 0.0
  %1887 = vmatpush.msra.mxu0 0.0
  %1888 = vmatpush.msra.mxu0 0.0
  %1889 = vmatpush.msra.mxu0 0.0
  %1890 = vmatpush.msra.mxu0 0.0
  %1891 = vmatpush.msra.mxu0 0.0
  %1892 = vmatpush.msra.mxu0 0.0
  %1893 = vmatpush.msra.mxu0 0.0
  %1894 = vmatpush.msra.mxu0 0.0
  %1895 = vmatpush.msra.mxu0 0.0
  %1896 = vmatpush.msra.mxu0 0.0
  %1897 = vmatpush.msra.mxu0 0.0
  %1898 = vmatpush.msra.mxu0 0.0
  %1899 = vmatpush.msra.mxu0 0.0
  %1900 = vmatpush.msra.mxu0 0.0
  %1901 = vmatpush.msra.mxu0 %v1879
  %1902 = vmatmul.f32.gmra.mxu0 %v1881
  %v1903 = vpop.f32.mrf.mxu0
  %v1904 = vadd.f32 0.0, %v1903
  %1905 = vmatmul.f32.gmra.mxu0 %v1884
  %v1906 = vpop.f32.mrf.mxu0
  %v1907 = vadd.f32 0.0, %v1906
  %1908 = vdwg.mxu0
  %v1909 = vadd.f32 %v1684, %v1904
  %v1910 = vadd.f32 %v1687, %v1907
  %s1911 = scalar_lea.vmem %s4, 224
  %v1912 = vld [vmem:[%s1911] sm:$0xff]
  %v1913 = vld [vmem:[%s1911 + $0x8] sm:$0xff]
  %v1914 = vld [vmem:[%s1911 + $0x10] sm:$0xff]
  %v1915 = vld [vmem:[%s1911 + $0x18] sm:$0xff]
  %s1916 = scalar_lea.vmem %s5, 7
  %v1917 = vld [vmem:[%s1916] sm:$0x1]
  %v1919 = vperm.slane %v1917, 0
  %1921 = vmatpush.msra.mxu0 0.0
  %1922 = vmatpush.msra.mxu0 0.0
  %1923 = vmatpush.msra.mxu0 0.0
  %1924 = vmatpush.msra.mxu0 0.0
  %1925 = vmatpush.msra.mxu0 0.0
  %1926 = vmatpush.msra.mxu0 0.0
  %1927 = vmatpush.msra.mxu0 0.0
  %1928 = vmatpush.msra.mxu0 0.0
  %1929 = vmatpush.msra.mxu0 0.0
  %1930 = vmatpush.msra.mxu0 0.0
  %1931 = vmatpush.msra.mxu0 0.0
  %1932 = vmatpush.msra.mxu0 0.0
  %1933 = vmatpush.msra.mxu0 %v1915
  %1934 = vmatpush.msra.mxu0 %v1914
  %1935 = vmatpush.msra.mxu0 %v1913
  %1936 = vmatpush.msra.mxu0 %v1912
  %1937 = vmatmul.f32.gmra.mxu0 %v1254
  %v1938 = vpop.f32.mrf.mxu0
  %v1939 = vadd.f32 %v1919, %v1938
  %1940 = vmatmul.f32.gmra.mxu0 %v1257
  %v1941 = vpop.f32.mrf.mxu0
  %v1942 = vadd.f32 %v1919, %v1941
  %1943 = vdwg.mxu0
  %s1944 = scalar_lea.vmem %s6, 224
  %v1945 = vld [vmem:[%s1944] sm:$0xff]
  %v1946 = vld [vmem:[%s1944 + $0x8] sm:$0xff]
  %v1947 = vld [vmem:[%s1944 + $0x10] sm:$0xff]
  %v1948 = vld [vmem:[%s1944 + $0x18] sm:$0xff]
  %s1949 = scalar_lea.vmem %s7, 7
  %v1950 = vld [vmem:[%s1949] sm:$0x1]
  %v1952 = vperm.slane %v1950, 0
  %1954 = vmatpush.msra.mxu0 0.0
  %1955 = vmatpush.msra.mxu0 0.0
  %1956 = vmatpush.msra.mxu0 0.0
  %1957 = vmatpush.msra.mxu0 0.0
  %1958 = vmatpush.msra.mxu0 0.0
  %1959 = vmatpush.msra.mxu0 0.0
  %1960 = vmatpush.msra.mxu0 0.0
  %1961 = vmatpush.msra.mxu0 0.0
  %1962 = vmatpush.msra.mxu0 0.0
  %1963 = vmatpush.msra.mxu0 0.0
  %1964 = vmatpush.msra.mxu0 0.0
  %1965 = vmatpush.msra.mxu0 0.0
  %1966 = vmatpush.msra.mxu0 %v1948
  %1967 = vmatpush.msra.mxu0 %v1947
  %1968 = vmatpush.msra.mxu0 %v1946
  %1969 = vmatpush.msra.mxu0 %v1945
  %1970 = vmatmul.f32.gmra.mxu0 %v1254
  %v1971 = vpop.f32.mrf.mxu0
  %v1972 = vadd.f32 %v1952, %v1971
  %1973 = vmatmul.f32.gmra.mxu0 %v1257
  %v1974 = vpop.f32.mrf.mxu0
  %v1975 = vadd.f32 %v1952, %v1974
  %1976 = vdwg.mxu0
  %s1977 = scalar_lea.vmem %s8, 224
  %v1978 = vld [vmem:[%s1977] sm:$0xff]
  %v1979 = vld [vmem:[%s1977 + $0x8] sm:$0xff]
  %v1980 = vld [vmem:[%s1977 + $0x10] sm:$0xff]
  %v1981 = vld [vmem:[%s1977 + $0x18] sm:$0xff]
  %s1982 = scalar_lea.vmem %s9, 7
  %v1983 = vld [vmem:[%s1982] sm:$0x1]
  %v1985 = vperm.slane %v1983, 0
  %1987 = vmatpush.msra.mxu0 0.0
  %1988 = vmatpush.msra.mxu0 0.0
  %1989 = vmatpush.msra.mxu0 0.0
  %1990 = vmatpush.msra.mxu0 0.0
  %1991 = vmatpush.msra.mxu0 0.0
  %1992 = vmatpush.msra.mxu0 0.0
  %1993 = vmatpush.msra.mxu0 0.0
  %1994 = vmatpush.msra.mxu0 0.0
  %1995 = vmatpush.msra.mxu0 0.0
  %1996 = vmatpush.msra.mxu0 0.0
  %1997 = vmatpush.msra.mxu0 0.0
  %1998 = vmatpush.msra.mxu0 0.0
  %1999 = vmatpush.msra.mxu0 %v1981
  %2000 = vmatpush.msra.mxu0 %v1980
  %2001 = vmatpush.msra.mxu0 %v1979
  %2002 = vmatpush.msra.mxu0 %v1978
  %2003 = vmatmul.f32.gmra.mxu0 %v1254
  %v2004 = vpop.f32.mrf.mxu0
  %v2005 = vadd.f32 %v1985, %v2004
  %2006 = vmatmul.f32.gmra.mxu0 %v1257
  %v2007 = vpop.f32.mrf.mxu0
  %v2008 = vadd.f32 %v1985, %v2007
  %2009 = vdwg.mxu0
  %v2011 = vsel %vm238, %v1939, 0
  %v2014 = vsel %vm238, %v1942, 0
  %v2017 = vsel %vm238, %v1972, 0
  %v2020 = vsel %vm238, %v1975, 0
  %2022 = vmatpush.xpose.msra.mxu0 0.0
  %2023 = vmatpush.xpose.msra.mxu0 0.0
  %2024 = vmatpush.xpose.msra.mxu0 0.0
  %2025 = vmatpush.xpose.msra.mxu0 0.0
  %2026 = vmatpush.xpose.msra.mxu0 0.0
  %2027 = vmatpush.xpose.msra.mxu0 0.0
  %2028 = vmatpush.xpose.msra.mxu0 0.0
  %2029 = vmatpush.xpose.msra.mxu0 0.0
  %2030 = vmatpush.xpose.msra.mxu0 0.0
  %2031 = vmatpush.xpose.msra.mxu0 0.0
  %2032 = vmatpush.xpose.msra.mxu0 0.0
  %2033 = vmatpush.xpose.msra.mxu0 0.0
  %2034 = vmatpush.xpose.msra.mxu0 0.0
  %2035 = vmatpush.xpose.msra.mxu0 0.0
  %2036 = vmatpush.xpose.msra.mxu0 %v2020
  %2037 = vmatpush.xpose.msra.mxu0 %v2017
  %2038 = vmatmul.f32.gmra.mxu0 %v2011
  %v2039 = vpop.f32.mrf.mxu0
  %v2040 = vadd.f32 0.0, %v2039
  %2041 = vmatmul.f32.gmra.mxu0 %v2014
  %v2042 = vpop.f32.mrf.mxu0
  %v2043 = vadd.f32 0.0, %v2042
  %2044 = vdwg.mxu0
  %v2045 = vmul.f32 %v2040, 0.35355338
  %v2046 = vmul.f32 %v2043, 0.35355338
  %v2047 = vadd.f32 %v2045, %v137
  %v2048 = vadd.f32 %v2046, %v138
  %v2049 = vsel %vm278, %v2047, -inf
  %2050 = vmax.xlane.f32.xlu0 %v2049
  %v2051 = vpop.xlane.xlu0 %2050
  %v2052 = vsel %vm278, %v2048, -inf
  %2053 = vmax.xlane.f32.xlu0 %v2052
  %v2054 = vpop.xlane.xlu0 %2053
  %v2055 = vsub.f32 %v2047, %v2051
  %v2056 = vsub.f32 %v2048, %v2054
  %v2057 = vmul.f32 %v2055, 1.442695
  %v2058 = vpow.pop %v2057
  %v2059 = vmul.f32 %v2056, 1.442695
  %v2060 = vpow.pop %v2059
  %v2061 = vsel %vm278, %v2058, 0.0
  %2062 = vadd.xlane.f32.xlu0 %v2061
  %v2063 = vpop.xlane.xlu0 %2062
  %v2064 = vsel %vm278, %v2060, 0.0
  %2065 = vadd.xlane.f32.xlu0 %v2064
  %v2066 = vpop.xlane.xlu0 %2065
  %v2067 = vrcp.pop %v2063
  %v2068 = vrcp.pop %v2066
  %v2069 = vmul.f32 %v2058, %v2067
  %v2070 = vmul.f32 %v2060, %v2068
  %v2072 = vsel %vm278, %v2069, 0
  %v2075 = vsel %vm278, %v2070, 0
  %2077 = vmatpush.msra.mxu0 0.0
  %2078 = vmatpush.msra.mxu0 0.0
  %2079 = vmatpush.msra.mxu0 0.0
  %2080 = vmatpush.msra.mxu0 0.0
  %2081 = vmatpush.msra.mxu0 0.0
  %2082 = vmatpush.msra.mxu0 0.0
  %2083 = vmatpush.msra.mxu0 0.0
  %2084 = vmatpush.msra.mxu0 0.0
  %2085 = vmatpush.msra.mxu0 0.0
  %2086 = vmatpush.msra.mxu0 0.0
  %2087 = vmatpush.msra.mxu0 0.0
  %2088 = vmatpush.msra.mxu0 0.0
  %2089 = vmatpush.msra.mxu0 0.0
  %2090 = vmatpush.msra.mxu0 0.0
  %2091 = vmatpush.msra.mxu0 %v2008
  %2092 = vmatpush.msra.mxu0 %v2005
  %2093 = vmatmul.f32.gmra.mxu0 %v2072
  %v2094 = vpop.f32.mrf.mxu0
  %v2095 = vadd.f32 0.0, %v2094
  %2096 = vmatmul.f32.gmra.mxu0 %v2075
  %v2097 = vpop.f32.mrf.mxu0
  %v2098 = vadd.f32 0.0, %v2097
  %2099 = vdwg.mxu0
  %s2100 = scalar_lea.vmem %s10, 56
  %v2101 = vld [vmem:[%s2100] sm:$0xff]
  %v2103 = vsel %vm238, %v2095, 0
  %v2106 = vsel %vm238, %v2098, 0
  %2108 = vmatpush.msra.mxu0 0.0
  %2109 = vmatpush.msra.mxu0 0.0
  %2110 = vmatpush.msra.mxu0 0.0
  %2111 = vmatpush.msra.mxu0 0.0
  %2112 = vmatpush.msra.mxu0 0.0
  %2113 = vmatpush.msra.mxu0 0.0
  %2114 = vmatpush.msra.mxu0 0.0
  %2115 = vmatpush.msra.mxu0 0.0
  %2116 = vmatpush.msra.mxu0 0.0
  %2117 = vmatpush.msra.mxu0 0.0
  %2118 = vmatpush.msra.mxu0 0.0
  %2119 = vmatpush.msra.mxu0 0.0
  %2120 = vmatpush.msra.mxu0 0.0
  %2121 = vmatpush.msra.mxu0 0.0
  %2122 = vmatpush.msra.mxu0 0.0
  %2123 = vmatpush.msra.mxu0 %v2101
  %2124 = vmatmul.f32.gmra.mxu0 %v2103
  %v2125 = vpop.f32.mrf.mxu0
  %v2126 = vadd.f32 0.0, %v2125
  %2127 = vmatmul.f32.gmra.mxu0 %v2106
  %v2128 = vpop.f32.mrf.mxu0
  %v2129 = vadd.f32 0.0, %v2128
  %2130 = vdwg.mxu0
  %v2131 = vadd.f32 %v1909, %v2126
  %v2132 = vadd.f32 %v1910, %v2129
  %s2133 = scalar_lea.vmem %s11, 1
  %v2134 = vld [vmem:[%s2133] sm:$0x1]
  %v2136 = vperm.slane %v2134, 0
  %v2138 = vadd.f32 %v2131, %v2136
  %v2139 = vadd.f32 %v2132, %v2136
  %v2140 = vadd.f32 %v1241, %v2138
  %v2141 = vadd.f32 %v1242, %v2139
  %s2142 = scalar_lea.vmem %s12, 1
  %v2143 = vld [vmem:[%s2142] sm:$0x1]
  %s2144 = scalar_lea.vmem %s13, 1
  %v2145 = vld [vmem:[%s2144] sm:$0x1]
  %v2146 = vsel %vm75, %v2140, 0.0
  %2147 = vadd.xlane.f32.xlu0 %v2146
  %v2148 = vpop.xlane.xlu0 %2147
  %v2149 = vsel %vm75, %v2141, 0.0
  %2150 = vadd.xlane.f32.xlu0 %v2149
  %v2151 = vpop.xlane.xlu0 %2150
  %v2152 = vmul.f32 %v2148, %v88
  %v2153 = vmul.f32 %v2151, %v88
  %v2154 = vsub.f32 %v2140, %v2152
  %v2155 = vsub.f32 %v2141, %v2153
  %v2156 = vmul.f32 %v2154, %v2154
  %v2157 = vmul.f32 %v2155, %v2155
  %v2158 = vsel %vm75, %v2156, 0.0
  %2159 = vadd.xlane.f32.xlu0 %v2158
  %v2160 = vpop.xlane.xlu0 %2159
  %v2161 = vsel %vm75, %v2157, 0.0
  %2162 = vadd.xlane.f32.xlu0 %v2161
  %v2163 = vpop.xlane.xlu0 %2162
  %v2164 = vmul.f32 %v2160, %v88
  %v2165 = vmul.f32 %v2163, %v88
  %v2166 = vadd.f32 %v2164, 1e-12
  %v2167 = vadd.f32 %v2165, 1e-12
  %v2168 = vrsqrt.pop %v2166
  %v2169 = vmul.f32 %v2168, %v2166
  %v2170 = vmul.f32 %v2169, %v2168
  %v2171 = vmul.f32 0.5, %v2170
  %v2172 = vsub.f32 1.5, %v2171
  %v2173 = vmul.f32 %v2168, %v2172
  %vm2174 = vweird.f32 %v2166
  %vm2175 = vweird.f32 %v2168
  %vm2176 = vmor %vm2174, %vm2175
  %v2177 = vsel %vm2176, %v2168, %v2173
  %v2178 = vrsqrt.pop %v2167
  %v2179 = vmul.f32 %v2178, %v2167
  %v2180 = vmul.f32 %v2179, %v2178
  %v2181 = vmul.f32 0.5, %v2180
  %v2182 = vsub.f32 1.5, %v2181
  %v2183 = vmul.f32 %v2178, %v2182
  %vm2184 = vweird.f32 %v2167
  %vm2185 = vweird.f32 %v2178
  %vm2186 = vmor %vm2184, %vm2185
  %v2187 = vsel %vm2186, %v2178, %v2183
  %v2188 = vmul.f32 %v2154, %v2177
  %v2189 = vmul.f32 %v2155, %v2187
  %v2191 = vperm.slane %v2143, 0
  %v2193 = vmul.f32 %v2188, %v2191
  %v2194 = vmul.f32 %v2189, %v2191
  %v2196 = vperm.slane %v2145, 0
  %v2198 = vadd.f32 %v2193, %v2196
  %v2199 = vadd.f32 %v2194, %v2196
  %s2200 = scalar_lea.vmem %s14, 32
  %v2201 = vld [vmem:[%s2200] sm:$0xff]
  %v2202 = vld [vmem:[%s2200 + $0x8] sm:$0xff]
  %v2203 = vld [vmem:[%s2200 + $0x10] sm:$0xff]
  %v2204 = vld [vmem:[%s2200 + $0x18] sm:$0xff]
  %s2205 = scalar_lea.vmem %s15, 1
  %v2206 = vld [vmem:[%s2205] sm:$0x1]
  %v2208 = vperm.slane %v2206, 0
  %v2211 = vsel %vm75, %v2198, 0
  %v2214 = vsel %vm75, %v2199, 0
  %2216 = vmatpush.msra.mxu0 0.0
  %2217 = vmatpush.msra.mxu0 0.0
  %2218 = vmatpush.msra.mxu0 0.0
  %2219 = vmatpush.msra.mxu0 0.0
  %2220 = vmatpush.msra.mxu0 0.0
  %2221 = vmatpush.msra.mxu0 0.0
  %2222 = vmatpush.msra.mxu0 0.0
  %2223 = vmatpush.msra.mxu0 0.0
  %2224 = vmatpush.msra.mxu0 0.0
  %2225 = vmatpush.msra.mxu0 0.0
  %2226 = vmatpush.msra.mxu0 0.0
  %2227 = vmatpush.msra.mxu0 0.0
  %2228 = vmatpush.msra.mxu0 %v2204
  %2229 = vmatpush.msra.mxu0 %v2203
  %2230 = vmatpush.msra.mxu0 %v2202
  %2231 = vmatpush.msra.mxu0 %v2201
  %2232 = vmatmul.f32.gmra.mxu0 %v2211
  %v2233 = vpop.f32.mrf.mxu0
  %v2234 = vadd.f32 %v2208, %v2233
  %2235 = vmatmul.f32.gmra.mxu0 %v2214
  %v2236 = vpop.f32.mrf.mxu0
  %v2237 = vadd.f32 %v2208, %v2236
  %2238 = vdwg.mxu0
  %v2239 = vmul.f32 %v2234, 0.5
  %v2240 = vmul.f32 %v2237, 0.5
  %v2241 = vmul.f32 %v2234, %v2234
  %v2242 = vmul.f32 %v2237, %v2237
  %v2243 = vmul.f32 %v2234, %v2241
  %v2244 = vmul.f32 %v2237, %v2242
  %v2245 = vmul.f32 %v2243, 0.044715
  %v2246 = vmul.f32 %v2244, 0.044715
  %v2247 = vadd.f32 %v2234, %v2245
  %v2248 = vadd.f32 %v2237, %v2246
  %v2249 = vmul.f32 %v2247, 0.7978846
  %v2250 = vmul.f32 %v2248, 0.7978846
  %v2251 = vtanh.pop %v2249
  %v2252 = vtanh.pop %v2250
  %v2253 = vadd.f32 %v2251, 1.0
  %v2254 = vadd.f32 %v2252, 1.0
  %v2255 = vmul.f32 %v2239, %v2253
  %v2256 = vmul.f32 %v2240, %v2254
  %s2257 = scalar_lea.vmem %s16, 64
  %v2258 = vld [vmem:[%s2257] sm:$0xff]
  %v2259 = vld [vmem:[%s2257 + $0x8] sm:$0xff]
  %v2260 = vld [vmem:[%s2257 + $0x10] sm:$0xff]
  %v2261 = vld [vmem:[%s2257 + $0x18] sm:$0xff]
  %v2262 = vld [vmem:[%s2257 + $0x20] sm:$0xff]
  %v2263 = vld [vmem:[%s2257 + $0x28] sm:$0xff]
  %v2264 = vld [vmem:[%s2257 + $0x30] sm:$0xff]
  %v2265 = vld [vmem:[%s2257 + $0x38] sm:$0xff]
  %s2266 = scalar_lea.vmem %s17, 1
  %v2267 = vld [vmem:[%s2266] sm:$0x1]
  %v2269 = vperm.slane %v2267, 0
  %v2272 = vsel %vm1155, %v2255, 0
  %v2275 = vsel %vm1155, %v2256, 0
  %2277 = vmatpush.msra.mxu0 0.0
  %2278 = vmatpush.msra.mxu0 0.0
  %2279 = vmatpush.msra.mxu0 0.0
  %2280 = vmatpush.msra.mxu0 0.0
  %2281 = vmatpush.msra.mxu0 0.0
  %2282 = vmatpush.msra.mxu0 0.0
  %2283 = vmatpush.msra.mxu0 0.0
  %2284 = vmatpush.msra.mxu0 0.0
  %2285 = vmatpush.msra.mxu0 %v2265
  %2286 = vmatpush.msra.mxu0 %v2264
  %2287 = vmatpush.msra.mxu0 %v2263
  %2288 = vmatpush.msra.mxu0 %v2262
  %2289 = vmatpush.msra.mxu0 %v2261
  %2290 = vmatpush.msra.mxu0 %v2260
  %2291 = vmatpush.msra.mxu0 %v2259
  %2292 = vmatpush.msra.mxu0 %v2258
  %2293 = vmatmul.f32.gmra.mxu0 %v2272
  %v2294 = vpop.f32.mrf.mxu0
  %v2295 = vadd.f32 %v2269, %v2294
  %2296 = vmatmul.f32.gmra.mxu0 %v2275
  %v2297 = vpop.f32.mrf.mxu0
  %v2298 = vadd.f32 %v2269, %v2297
  %2299 = vdwg.mxu0
  %v2300 = vadd.f32 %v2198, %v2295
  %v2301 = vadd.f32 %v2199, %v2298
  %s2302 = scalar_lea.vmem %s18, 1
  %v2303 = vld [vmem:[%s2302] sm:$0x1]
  %s2304 = scalar_lea.vmem %s19, 1
  %v2305 = vld [vmem:[%s2304] sm:$0x1]
  %v2306 = vsel %vm75, %v2300, 0.0
  %2307 = vadd.xlane.f32.xlu0 %v2306
  %v2308 = vpop.xlane.xlu0 %2307
  %v2309 = vsel %vm75, %v2301, 0.0
  %2310 = vadd.xlane.f32.xlu0 %v2309
  %v2311 = vpop.xlane.xlu0 %2310
  %v2312 = vmul.f32 %v2308, %v88
  %v2313 = vmul.f32 %v2311, %v88
  %v2314 = vsub.f32 %v2300, %v2312
  %v2315 = vsub.f32 %v2301, %v2313
  %v2316 = vmul.f32 %v2314, %v2314
  %v2317 = vmul.f32 %v2315, %v2315
  %v2318 = vsel %vm75, %v2316, 0.0
  %2319 = vadd.xlane.f32.xlu0 %v2318
  %v2320 = vpop.xlane.xlu0 %2319
  %v2321 = vsel %vm75, %v2317, 0.0
  %2322 = vadd.xlane.f32.xlu0 %v2321
  %v2323 = vpop.xlane.xlu0 %2322
  %v2324 = vmul.f32 %v2320, %v88
  %v2325 = vmul.f32 %v2323, %v88
  %v2326 = vadd.f32 %v2324, 1e-12
  %v2327 = vadd.f32 %v2325, 1e-12
  %v2328 = vrsqrt.pop %v2326
  %v2329 = vmul.f32 %v2328, %v2326
  %v2330 = vmul.f32 %v2329, %v2328
  %v2331 = vmul.f32 0.5, %v2330
  %v2332 = vsub.f32 1.5, %v2331
  %v2333 = vmul.f32 %v2328, %v2332
  %vm2334 = vweird.f32 %v2326
  %vm2335 = vweird.f32 %v2328
  %vm2336 = vmor %vm2334, %vm2335
  %v2337 = vsel %vm2336, %v2328, %v2333
  %v2338 = vrsqrt.pop %v2327
  %v2339 = vmul.f32 %v2338, %v2327
  %v2340 = vmul.f32 %v2339, %v2338
  %v2341 = vmul.f32 0.5, %v2340
  %v2342 = vsub.f32 1.5, %v2341
  %v2343 = vmul.f32 %v2338, %v2342
  %vm2344 = vweird.f32 %v2327
  %vm2345 = vweird.f32 %v2338
  %vm2346 = vmor %vm2344, %vm2345
  %v2347 = vsel %vm2346, %v2338, %v2343
  %v2348 = vmul.f32 %v2314, %v2337
  %v2349 = vmul.f32 %v2315, %v2347
  %v2351 = vperm.slane %v2303, 0
  %v2353 = vmul.f32 %v2348, %v2351
  %v2354 = vmul.f32 %v2349, %v2351
  %v2356 = vperm.slane %v2305, 0
  %v2358 = vadd.f32 %v2353, %v2356
  %v2359 = vadd.f32 %v2354, %v2356
  %v2361 = vrot.slane %v2359, 6
  %vm2363 = vcmask 1041408
  %v2364 = vsel %vm2363, %v2358, %v2361
  %v2365 = vld [vmem:[%s20] sm:$0xff]
  %v2366 = vld [vmem:[%s20 + $0x8] sm:$0xff]
  %v2367 = vld [vmem:[%s20 + $0x10] sm:$0xff]
  %v2368 = vld [vmem:[%s20 + $0x18] sm:$0xff]
  %v2369 = vld [vmem:[%s21] sm:$0x1]
  %v2371 = vperm.slane %v2369, 0
  %v2374 = vsel %vm75, %v2364, 0
  %2376 = vmatpush.msra.mxu0 0.0
  %2377 = vmatpush.msra.mxu0 0.0
  %2378 = vmatpush.msra.mxu0 0.0
  %2379 = vmatpush.msra.mxu0 0.0
  %2380 = vmatpush.msra.mxu0 0.0
  %2381 = vmatpush.msra.mxu0 0.0
  %2382 = vmatpush.msra.mxu0 0.0
  %2383 = vmatpush.msra.mxu0 0.0
  %2384 = vmatpush.msra.mxu0 0.0
  %2385 = vmatpush.msra.mxu0 0.0
  %2386 = vmatpush.msra.mxu0 0.0
  %2387 = vmatpush.msra.mxu0 0.0
  %2388 = vmatpush.msra.mxu0 %v2368
  %2389 = vmatpush.msra.mxu0 %v2367
  %2390 = vmatpush.msra.mxu0 %v2366
  %2391 = vmatpush.msra.mxu0 %v2365
  %2392 = vmatmul.f32.gmra.mxu0 %v2374
  %v2393 = vpop.f32.mrf.mxu0
  %v2394 = vadd.f32 %v2371, %v2393
  %2395 = vdwg.mxu0
  %v2396 = vlaneseq
  %v2397 = vand.u32 %v2396, 127
  %v2398 = vsub.f32 0.0, %v2394
  %v2399 = vmul.f32 %v2398, 1.442695
  %v2400 = vpow.pop %v2399
  %v2401 = vadd.f32 %v2400, 1.0
  %v2402 = vrcp.pop %v2401
  %vm2403 = vcmp.eq.s32.totalorder %v2397, 0
  %v2405 = vrot.slane %v2394, 1
  %v2407 = vsel %vm2403, %v2402, %v2405
  %v2409 = vrot.slane %v2407, 1
  %vm2411 = vcmask 1040384
  %v2412 = vsel %vm2411, %v2407, %v2409
  %2413 = vst [vmem:[%s22] sm:$0x3] %v2412
  // Predicated region
  $region90: #{forward.1} parent=0 // pred_check
    _
  $region91: #{forward.1} parent=0 // pred_check_branch
    %2415 = sbr.rel (0) target = $region93
  $region92: #{forward.1} parent=0 // pred_region
    _
  $region93: #{forward.1} parent=0 // pred_fallthru
    _
  // Predicated region
  $region94: #{forward.1} parent=0 // pred_check
    _
  $region95: #{forward.1} parent=0 // pred_check_branch
    %2417 = sbr.rel (0) target = $region97
  $region96: #{forward.1} parent=0 // pred_region
    _
  $region97: #{forward.1} parent=0 // pred_fallthru
    _

</llo_original>
